<compile_context>
chip_gen: v5e
topology: v5e:2x2
jax: 0.10.0
libtpu: 0.0.40
codegen_flags: <defaults>
</compile_context>

<pallas_src>
import functools

import jax
import jax.numpy as jnp
from jax.experimental import pallas as pl
from jax.experimental.pallas import tpu as pltpu


def _spatial_attn_kernel(w_ref, x_ref, o_ref,
                         ssum_ref, smax_ref, spad_ref, mpad_ref,
                         *, K, H, W):
    # w_ref    : SMEM, flat (2*K*K,) f32; avg-branch taps pre-scaled by 1/C.
    # x_ref    : VMEM, (tc, H*W) lane-dense channel tile of one batch.
    # o_ref    : VMEM, (H, W) output (resident across the channel grid axis).
    # ssum_ref : VMEM scratch, (1, H*W) running channel-sum (lane-dense).
    # smax_ref : VMEM scratch, (1, H*W) running channel-max (lane-dense).
    # spad_ref : VMEM scratch, (H+K-1, W+K-1) zero-padded sum map (finalize).
    # mpad_ref : VMEM scratch, (H+K-1, W+K-1) zero-padded max map (finalize).
    p = K // 2
    c = pl.program_id(1)
    last = pl.num_programs(1) - 1

    # ---- vectorized channel reduction over the whole tile (f32) ------------
    tile = x_ref[...].astype(jnp.float32)                # (tc, H*W)
    tsum = jnp.sum(tile, axis=0, keepdims=True)          # (1, H*W)
    tmax = jnp.max(tile, axis=0, keepdims=True)          # (1, H*W)

    @pl.when(c == 0)
    def _():
        ssum_ref[...] = tsum
        smax_ref[...] = tmax

    @pl.when(c > 0)
    def _():
        ssum_ref[...] += tsum
        smax_ref[...] = jnp.maximum(smax_ref[...], tmax)

    # ---- finalize: build padded maps once, 7x7 conv + sigmoid --------------
    @pl.when(c == last)
    def _():
        spad_ref[...] = jnp.zeros_like(spad_ref)
        mpad_ref[...] = jnp.zeros_like(mpad_ref)
        s_flat = ssum_ref[...]                            # (1, H*W)
        m_flat = smax_ref[...]
        for r in range(H):                                # once per batch
            spad_ref[p + r:p + r + 1, p:p + W] = s_flat[:, r * W:(r + 1) * W]
            mpad_ref[p + r:p + r + 1, p:p + W] = m_flat[:, r * W:(r + 1) * W]

        s = spad_ref[...]                                 # (Hp, Wp)
        m = mpad_ref[...]
        acc = jnp.zeros((H, W), jnp.float32)
        for kh in range(K):
            strip_s = s[kh:kh + H, :]                     # (H, Wp) row strip
            strip_m = m[kh:kh + H, :]
            for kw in range(K):
                w_a = w_ref[kh * K + kw]                  # avg tap (already / C)
                w_m = w_ref[K * K + kh * K + kw]          # max tap
                acc = (acc
                       + w_a * strip_s[:, kw:kw + W]
                       + w_m * strip_m[:, kw:kw + W])
        o_ref[...] = jax.nn.sigmoid(acc).astype(o_ref.dtype)


def _round_up(a, b):
    return -(-a // b) * b


def spatial_attention(x, weight, kernel_size=7, channel_tile=None):
    """x: (B, C, H, W); weight: (1, 2, K, K) f32 -> (B, 1, H, W) in x.dtype."""
    B, C, H, W = x.shape
    K = kernel_size
    p = K // 2
    HW = H * W
    Hp, Wp = H + 2 * p, W + 2 * p

    itemsize = jnp.dtype(x.dtype).itemsize
    sublane = {4: 8, 2: 16, 1: 32}.get(itemsize, 8)
    hw_pad = _round_up(HW, 128)

    # Per-generation VMEM budget (v5e/v6e: 128 MiB, v7x: 64 MiB).
    try:
        vmem_cap = int(pltpu.get_tpu_info().vmem_capacity_bytes)
    except Exception:
        vmem_cap = 64 * 1024 * 1024
    budget = min(vmem_cap // 4, 16 * 1024 * 1024)   # per single input buffer

    def _blk_bytes(tcs, isz):
        # True VMEM footprint: sublane- and 128-lane-padded.
        return _round_up(tcs, sublane) * hw_pad * isz

    def _fits(tcs):
        return (_blk_bytes(tcs, itemsize) <= budget
                and _blk_bytes(tcs, 4) <= budget)   # f32 working set too

    if channel_tile is not None:
        assert C % channel_tile == 0
        tc = channel_tile
    elif _fits(C):
        tc = C                                       # whole channel slab, nc == 1
    else:
        divs = [d for d in range(1, C + 1) if C % d == 0 and _fits(d)]
        aligned = [d for d in divs if d % sublane == 0]
        tc = max(aligned) if aligned else (max(divs) if divs else 1)
    nc = C // tc

    blk = _blk_bytes(tc, itemsize)
    work = _blk_bytes(tc, 4)
    vmem_limit = min(vmem_cap,
                     max(32 * 1024 * 1024, 2 * blk + work + (8 << 20)))

    # Flatten conv weight for SMEM; fold the 1/C of the channel mean into the
    # avg-branch taps so the kernel only keeps a running channel sum.
    w = weight.astype(jnp.float32)
    w_flat = jnp.concatenate(
        [w[0, 0].reshape(-1) / jnp.float32(C), w[0, 1].reshape(-1)])

    x_flat = x.reshape(B, C, HW)       # metadata-only for contiguous NCHW

    kernel = functools.partial(_spatial_attn_kernel, K=K, H=H, W=W)

    cost = pl.CostEstimate(
        flops=int(2 * B * C * HW + 4 * B * HW * K * K),
        transcendentals=int(B * HW),
        bytes_accessed=int(x.size * itemsize + B * HW * itemsize
                           + w_flat.size * 4))

    # TODO(synk): for B == 1 on v7x, split the channel range across the two
    # TensorCores (cross-core combine of partial sum/max); not implemented.
    return pl.pallas_call(
        kernel,
        out_shape=jax.ShapeDtypeStruct((B, 1, H, W), x.dtype),
        grid=(B, nc),
        in_specs=[
            pl.BlockSpec(memory_space=pltpu.SMEM),                      # weights
            pl.BlockSpec((None, tc, HW), lambda b, c: (b, c, 0)),       # x tile
        ],
        out_specs=pl.BlockSpec((None, None, H, W), lambda b, c: (b, 0, 0, 0)),
        scratch_shapes=[
            pltpu.VMEM((1, HW), jnp.float32),     # running channel-sum
            pltpu.VMEM((1, HW), jnp.float32),     # running channel-max
            pltpu.VMEM((Hp, Wp), jnp.float32),    # padded sum map (finalize only)
            pltpu.VMEM((Hp, Wp), jnp.float32),    # padded max map (finalize only)
        ],
        compiler_params=pltpu.CompilerParams(
            dimension_semantics=("parallel", "arbitrary"),
            vmem_limit_bytes=int(vmem_limit)),
        cost_estimate=cost,
    )(w_flat, x_flat)


def _reference(x, weight, kernel_size=7):
    # Plain-JAX reference for verification.
    avg = jnp.mean(x, axis=1, keepdims=True)
    mx = jnp.max(x, axis=1, keepdims=True)
    cat = jnp.concatenate([avg, mx], axis=1)            # (B, 2, H, W)
    p = kernel_size // 2
    y = jax.lax.conv_general_dilated(
        cat, weight, window_strides=(1, 1), padding=[(p, p), (p, p)],
        dimension_numbers=("NCHW", "OIHW", "NCHW"))
    return jax.nn.sigmoid(y)


if __name__ == "__main__":
    key = jax.random.PRNGKey(0)
    kx, kw, kx2 = jax.random.split(key, 3)

    K = 7
    # Deterministic synthetic Conv2d(2, 1, 7, bias=False) weight, OIHW.
    fan_in = 2 * K * K
    bound = 1.0 / (fan_in ** 0.5)
    weight = jax.random.uniform(kw, (1, 2, K, K), dtype=jnp.float32,
                                minval=-bound, maxval=bound)

    # Case 1: whole channel slab in a single grid step (nc == 1).
    B, C, H, W = 2, 4, 16, 16
    x = jax.random.normal(kx, (B, C, H, W), dtype=jnp.float32)
    out = jax.block_until_ready(spatial_attention(x, weight, kernel_size=K))
    ref = jax.block_until_ready(_reference(x, weight, kernel_size=K))
    assert out.shape == (B, 1, H, W)
    assert jnp.allclose(out, ref, atol=1e-5, rtol=1e-5), "mismatch (case 1)"

    # Case 2: multi-step channel accumulation (exercises init / running
    # sum+max / finalize phases); all-negative inputs stress the running-max.
    B2, C2 = 1, 32
    x2 = jax.random.normal(kx2, (B2, C2, H, W), dtype=jnp.float32) - 1.5
    out2 = jax.block_until_ready(
        spatial_attention(x2, weight, kernel_size=K, channel_tile=8))  # 4 steps
    ref2 = jax.block_until_ready(_reference(x2, weight, kernel_size=K))
    assert out2.shape == (B2, 1, H, W)
    assert jnp.allclose(out2, ref2, atol=1e-5, rtol=1e-5), "mismatch (case 2)"

    print("KERNEL_OK")
</pallas_src>

<mosaic_0001>
module attributes {stable_mosaic.version = 11 : i64} {
  func.func @_spatial_attn_kernel(%arg0: i32, %arg1: i32, %arg2: memref<98xf32, #tpu.memory_space<smem>>, %arg3: memref<1x4x256xf32, #tpu.memory_space<vmem>>, %arg4: memref<1x1x16x16xf32, #tpu.memory_space<vmem>>, %arg5: memref<1x256xf32, #tpu.memory_space<vmem>>, %arg6: memref<1x256xf32, #tpu.memory_space<vmem>>, %arg7: memref<22x22xf32, #tpu.memory_space<vmem>>, %arg8: memref<22x22xf32, #tpu.memory_space<vmem>>) attributes {dimension_semantics = [#tpu.dimension_semantics<parallel>, #tpu.dimension_semantics<arbitrary>], iteration_bounds = array<i64: 2, 1>, scalar_prefetch = 0 : i64, scratch_operands = 4 : i64, tpu.core_type = #tpu.core_type<tc>, window_params = [{transform_indices = @transform_0, window_bounds = array<i64: 98>}, {transform_indices = @transform_1, window_bounds = array<i64: 1, 4, 256>}, {transform_indices = @transform_2, window_bounds = array<i64: 1, 1, 16, 16>}]} {
    %c0 = arith.constant 0 : index
    %c0_0 = arith.constant 0 : index
    %c0_1 = arith.constant 0 : index
    %0 = vector.load %arg3[%c0, %c0_0, %c0_1] : memref<1x4x256xf32, #tpu.memory_space<vmem>>, vector<1x4x256xf32>
    %1 = vector.shape_cast %0 : vector<1x4x256xf32> to vector<4x256xf32>
    %cst = arith.constant dense<0.000000e+00> : vector<256xf32>
    %2 = vector.multi_reduction <add>, %1, %cst [0] : vector<4x256xf32> to vector<256xf32>
    %3 = vector.shape_cast %2 : vector<256xf32> to vector<1x256xf32>
    %cst_2 = arith.constant dense<0xFF800000> : vector<256xf32>
    %4 = vector.multi_reduction <maximumf>, %1, %cst_2 [0] : vector<4x256xf32> to vector<256xf32>
    %5 = vector.shape_cast %4 : vector<256xf32> to vector<1x256xf32>
    %c0_i32 = arith.constant 0 : i32
    %6 = arith.cmpi eq, %arg1, %c0_i32 : i32
    %7 = arith.extui %6 : i1 to i32
    %c0_i32_3 = arith.constant 0 : i32
    %8 = arith.cmpi ne, %7, %c0_i32_3 : i32
    scf.if %8 {
      %c0_8 = arith.constant 0 : index
      %c0_9 = arith.constant 0 : index
      %15 = vector.load %arg5[%c0_8, %c0_9] : memref<1x256xf32, #tpu.memory_space<vmem>>, vector<1x256xf32>
      tpu.vector_store %arg5[%c0_8, %c0_9], %3 {strides = array<i32>} : memref<1x256xf32, #tpu.memory_space<vmem>>, vector<1x256xf32>,
      %c0_10 = arith.constant 0 : index
      %c0_11 = arith.constant 0 : index
      %16 = vector.load %arg6[%c0_10, %c0_11] : memref<1x256xf32, #tpu.memory_space<vmem>>, vector<1x256xf32>
      tpu.vector_store %arg6[%c0_10, %c0_11], %5 {strides = array<i32>} : memref<1x256xf32, #tpu.memory_space<vmem>>, vector<1x256xf32>,
    } else {
    }
    %c0_i32_4 = arith.constant 0 : i32
    %9 = arith.cmpi sgt, %arg1, %c0_i32_4 : i32
    %10 = arith.extui %9 : i1 to i32
    %c0_i32_5 = arith.constant 0 : i32
    %11 = arith.cmpi ne, %10, %c0_i32_5 : i32
    scf.if %11 {
      %c0_8 = arith.constant 0 : index
      %c0_9 = arith.constant 0 : index
      %15 = vector.load %arg5[%c0_8, %c0_9] : memref<1x256xf32, #tpu.memory_space<vmem>>, vector<1x256xf32>
      %16 = arith.addf %15, %3 : vector<1x256xf32>
      %c0_10 = arith.constant 0 : index
      %c0_11 = arith.constant 0 : index
      %17 = vector.load %arg5[%c0_10, %c0_11] : memref<1x256xf32, #tpu.memory_space<vmem>>, vector<1x256xf32>
      tpu.vector_store %arg5[%c0_10, %c0_11], %16 {strides = array<i32>} : memref<1x256xf32, #tpu.memory_space<vmem>>, vector<1x256xf32>,
      %c0_12 = arith.constant 0 : index
      %c0_13 = arith.constant 0 : index
      %18 = vector.load %arg6[%c0_12, %c0_13] : memref<1x256xf32, #tpu.memory_space<vmem>>, vector<1x256xf32>
      %19 = arith.maximumf %18, %5 : vector<1x256xf32>
      %c0_14 = arith.constant 0 : index
      %c0_15 = arith.constant 0 : index
      %20 = vector.load %arg6[%c0_14, %c0_15] : memref<1x256xf32, #tpu.memory_space<vmem>>, vector<1x256xf32>
      tpu.vector_store %arg6[%c0_14, %c0_15], %19 {strides = array<i32>} : memref<1x256xf32, #tpu.memory_space<vmem>>, vector<1x256xf32>,
    } else {
    }
    %c0_i32_6 = arith.constant 0 : i32
    %12 = arith.cmpi eq, %arg1, %c0_i32_6 : i32
    %13 = arith.extui %12 : i1 to i32
    %c0_i32_7 = arith.constant 0 : i32
    %14 = arith.cmpi ne, %13, %c0_i32_7 : i32
    scf.if %14 {
      %cst_8 = arith.constant 0.000000e+00 : f32
      %15 = vector.broadcast %cst_8 : f32 to vector<22x22xf32>
      %c0_9 = arith.constant 0 : index
      %c0_10 = arith.constant 0 : index
      %16 = vector.load %arg7[%c0_9, %c0_10] : memref<22x22xf32, #tpu.memory_space<vmem>>, vector<22x22xf32>
      tpu.vector_store %arg7[%c0_9, %c0_10], %15 {strides = array<i32>} : memref<22x22xf32, #tpu.memory_space<vmem>>, vector<22x22xf32>,
      %cst_11 = arith.constant 0.000000e+00 : f32
      %17 = vector.broadcast %cst_11 : f32 to vector<22x22xf32>
      %c0_12 = arith.constant 0 : index
      %c0_13 = arith.constant 0 : index
      %18 = vector.load %arg8[%c0_12, %c0_13] : memref<22x22xf32, #tpu.memory_space<vmem>>, vector<22x22xf32>
      tpu.vector_store %arg8[%c0_12, %c0_13], %17 {strides = array<i32>} : memref<22x22xf32, #tpu.memory_space<vmem>>, vector<22x22xf32>,
      %c0_14 = arith.constant 0 : index
      %c0_15 = arith.constant 0 : index
      %19 = vector.load %arg5[%c0_14, %c0_15] : memref<1x256xf32, #tpu.memory_space<vmem>>, vector<1x256xf32>
      %c0_16 = arith.constant 0 : index
      %c0_17 = arith.constant 0 : index
      %20 = vector.load %arg6[%c0_16, %c0_17] : memref<1x256xf32, #tpu.memory_space<vmem>>, vector<1x256xf32>
      %21 = vector.extract_strided_slice %19 {offsets = [0, 0], sizes = [1, 16], strides = [1, 1]} : vector<1x256xf32> to vector<1x16xf32>
      %c3 = arith.constant 3 : index
      %c3_18 = arith.constant 3 : index
      %22 = vector.load %arg7[%c3, %c3_18] : memref<22x22xf32, #tpu.memory_space<vmem>>, vector<1x16xf32>
      tpu.vector_store %arg7[%c3, %c3_18], %21 {strides = array<i32>} : memref<22x22xf32, #tpu.memory_space<vmem>>, vector<1x16xf32>,
      %23 = vector.extract_strided_slice %20 {offsets = [0, 0], sizes = [1, 16], strides = [1, 1]} : vector<1x256xf32> to vector<1x16xf32>
      %c3_19 = arith.constant 3 : index
      %c3_20 = arith.constant 3 : index
      %24 = vector.load %arg8[%c3_19, %c3_20] : memref<22x22xf32, #tpu.memory_space<vmem>>, vector<1x16xf32>
      tpu.vector_store %arg8[%c3_19, %c3_20], %23 {strides = array<i32>} : memref<22x22xf32, #tpu.memory_space<vmem>>, vector<1x16xf32>,
      %25 = vector.extract_strided_slice %19 {offsets = [0, 16], sizes = [1, 16], strides = [1, 1]} : vector<1x256xf32> to vector<1x16xf32>
      %c4 = arith.constant 4 : index
      %c3_21 = arith.constant 3 : index
      %26 = vector.load %arg7[%c4, %c3_21] : memref<22x22xf32, #tpu.memory_space<vmem>>, vector<1x16xf32>
      tpu.vector_store %arg7[%c4, %c3_21], %25 {strides = array<i32>} : memref<22x22xf32, #tpu.memory_space<vmem>>, vector<1x16xf32>,
      %27 = vector.extract_strided_slice %20 {offsets = [0, 16], sizes = [1, 16], strides = [1, 1]} : vector<1x256xf32> to vector<1x16xf32>
      %c4_22 = arith.constant 4 : index
      %c3_23 = arith.constant 3 : index
      %28 = vector.load %arg8[%c4_22, %c3_23] : memref<22x22xf32, #tpu.memory_space<vmem>>, vector<1x16xf32>
      tpu.vector_store %arg8[%c4_22, %c3_23], %27 {strides = array<i32>} : memref<22x22xf32, #tpu.memory_space<vmem>>, vector<1x16xf32>,
      %29 = vector.extract_strided_slice %19 {offsets = [0, 32], sizes = [1, 16], strides = [1, 1]} : vector<1x256xf32> to vector<1x16xf32>
      %c5 = arith.constant 5 : index
      %c3_24 = arith.constant 3 : index
      %30 = vector.load %arg7[%c5, %c3_24] : memref<22x22xf32, #tpu.memory_space<vmem>>, vector<1x16xf32>
      tpu.vector_store %arg7[%c5, %c3_24], %29 {strides = array<i32>} : memref<22x22xf32, #tpu.memory_space<vmem>>, vector<1x16xf32>,
      %31 = vector.extract_strided_slice %20 {offsets = [0, 32], sizes = [1, 16], strides = [1, 1]} : vector<1x256xf32> to vector<1x16xf32>
      %c5_25 = arith.constant 5 : index
      %c3_26 = arith.constant 3 : index
      %32 = vector.load %arg8[%c5_25, %c3_26] : memref<22x22xf32, #tpu.memory_space<vmem>>, vector<1x16xf32>
      tpu.vector_store %arg8[%c5_25, %c3_26], %31 {strides = array<i32>} : memref<22x22xf32, #tpu.memory_space<vmem>>, vector<1x16xf32>,
      %33 = vector.extract_strided_slice %19 {offsets = [0, 48], sizes = [1, 16], strides = [1, 1]} : vector<1x256xf32> to vector<1x16xf32>
      %c6 = arith.constant 6 : index
      %c3_27 = arith.constant 3 : index
      %34 = vector.load %arg7[%c6, %c3_27] : memref<22x22xf32, #tpu.memory_space<vmem>>, vector<1x16xf32>
      tpu.vector_store %arg7[%c6, %c3_27], %33 {strides = array<i32>} : memref<22x22xf32, #tpu.memory_space<vmem>>, vector<1x16xf32>,
      %35 = vector.extract_strided_slice %20 {offsets = [0, 48], sizes = [1, 16], strides = [1, 1]} : vector<1x256xf32> to vector<1x16xf32>
      %c6_28 = arith.constant 6 : index
      %c3_29 = arith.constant 3 : index
      %36 = vector.load %arg8[%c6_28, %c3_29] : memref<22x22xf32, #tpu.memory_space<vmem>>, vector<1x16xf32>
      tpu.vector_store %arg8[%c6_28, %c3_29], %35 {strides = array<i32>} : memref<22x22xf32, #tpu.memory_space<vmem>>, vector<1x16xf32>,
      %37 = vector.extract_strided_slice %19 {offsets = [0, 64], sizes = [1, 16], strides = [1, 1]} : vector<1x256xf32> to vector<1x16xf32>
      %c7 = arith.constant 7 : index
      %c3_30 = arith.constant 3 : index
      %38 = vector.load %arg7[%c7, %c3_30] : memref<22x22xf32, #tpu.memory_space<vmem>>, vector<1x16xf32>
      tpu.vector_store %arg7[%c7, %c3_30], %37 {strides = array<i32>} : memref<22x22xf32, #tpu.memory_space<vmem>>, vector<1x16xf32>,
      %39 = vector.extract_strided_slice %20 {offsets = [0, 64], sizes = [1, 16], strides = [1, 1]} : vector<1x256xf32> to vector<1x16xf32>
      %c7_31 = arith.constant 7 : index
      %c3_32 = arith.constant 3 : index
      %40 = vector.load %arg8[%c7_31, %c3_32] : memref<22x22xf32, #tpu.memory_space<vmem>>, vector<1x16xf32>
      tpu.vector_store %arg8[%c7_31, %c3_32], %39 {strides = array<i32>} : memref<22x22xf32, #tpu.memory_space<vmem>>, vector<1x16xf32>,
      %41 = vector.extract_strided_slice %19 {offsets = [0, 80], sizes = [1, 16], strides = [1, 1]} : vector<1x256xf32> to vector<1x16xf32>
      %c8 = arith.constant 8 : index
      %c3_33 = arith.constant 3 : index
      %42 = vector.load %arg7[%c8, %c3_33] : memref<22x22xf32, #tpu.memory_space<vmem>>, vector<1x16xf32>
      tpu.vector_store %arg7[%c8, %c3_33], %41 {strides = array<i32>} : memref<22x22xf32, #tpu.memory_space<vmem>>, vector<1x16xf32>,
      %43 = vector.extract_strided_slice %20 {offsets = [0, 80], sizes = [1, 16], strides = [1, 1]} : vector<1x256xf32> to vector<1x16xf32>
      %c8_34 = arith.constant 8 : index
      %c3_35 = arith.constant 3 : index
      %44 = vector.load %arg8[%c8_34, %c3_35] : memref<22x22xf32, #tpu.memory_space<vmem>>, vector<1x16xf32>
      tpu.vector_store %arg8[%c8_34, %c3_35], %43 {strides = array<i32>} : memref<22x22xf32, #tpu.memory_space<vmem>>, vector<1x16xf32>,
      %45 = vector.extract_strided_slice %19 {offsets = [0, 96], sizes = [1, 16], strides = [1, 1]} : vector<1x256xf32> to vector<1x16xf32>
      %c9 = arith.constant 9 : index
      %c3_36 = arith.constant 3 : index
      %46 = vector.load %arg7[%c9, %c3_36] : memref<22x22xf32, #tpu.memory_space<vmem>>, vector<1x16xf32>
      tpu.vector_store %arg7[%c9, %c3_36], %45 {strides = array<i32>} : memref<22x22xf32, #tpu.memory_space<vmem>>, vector<1x16xf32>,
      %47 = vector.extract_strided_slice %20 {offsets = [0, 96], sizes = [1, 16], strides = [1, 1]} : vector<1x256xf32> to vector<1x16xf32>
      %c9_37 = arith.constant 9 : index
      %c3_38 = arith.constant 3 : index
      %48 = vector.load %arg8[%c9_37, %c3_38] : memref<22x22xf32, #tpu.memory_space<vmem>>, vector<1x16xf32>
      tpu.vector_store %arg8[%c9_37, %c3_38], %47 {strides = array<i32>} : memref<22x22xf32, #tpu.memory_space<vmem>>, vector<1x16xf32>,
      %49 = vector.extract_strided_slice %19 {offsets = [0, 112], sizes = [1, 16], strides = [1, 1]} : vector<1x256xf32> to vector<1x16xf32>
      %c10 = arith.constant 10 : index
      %c3_39 = arith.constant 3 : index
      %50 = vector.load %arg7[%c10, %c3_39] : memref<22x22xf32, #tpu.memory_space<vmem>>, vector<1x16xf32>
      tpu.vector_store %arg7[%c10, %c3_39], %49 {strides = array<i32>} : memref<22x22xf32, #tpu.memory_space<vmem>>, vector<1x16xf32>,
      %51 = vector.extract_strided_slice %20 {offsets = [0, 112], sizes = [1, 16], strides = [1, 1]} : vector<1x256xf32> to vector<1x16xf32>
      %c10_40 = arith.constant 10 : index
      %c3_41 = arith.constant 3 : index
      %52 = vector.load %arg8[%c10_40, %c3_41] : memref<22x22xf32, #tpu.memory_space<vmem>>, vector<1x16xf32>
      tpu.vector_store %arg8[%c10_40, %c3_41], %51 {strides = array<i32>} : memref<22x22xf32, #tpu.memory_space<vmem>>, vector<1x16xf32>,
      %53 = vector.extract_strided_slice %19 {offsets = [0, 128], sizes = [1, 16], strides = [1, 1]} : vector<1x256xf32> to vector<1x16xf32>
      %c11 = arith.constant 11 : index
      %c3_42 = arith.constant 3 : index
      %54 = vector.load %arg7[%c11, %c3_42] : memref<22x22xf32, #tpu.memory_space<vmem>>, vector<1x16xf32>
      tpu.vector_store %arg7[%c11, %c3_42], %53 {strides = array<i32>} : memref<22x22xf32, #tpu.memory_space<vmem>>, vector<1x16xf32>,
      %55 = vector.extract_strided_slice %20 {offsets = [0, 128], sizes = [1, 16], strides = [1, 1]} : vector<1x256xf32> to vector<1x16xf32>
      %c11_43 = arith.constant 11 : index
      %c3_44 = arith.constant 3 : index
      %56 = vector.load %arg8[%c11_43, %c3_44] : memref<22x22xf32, #tpu.memory_space<vmem>>, vector<1x16xf32>
      tpu.vector_store %arg8[%c11_43, %c3_44], %55 {strides = array<i32>} : memref<22x22xf32, #tpu.memory_space<vmem>>, vector<1x16xf32>,
      %57 = vector.extract_strided_slice %19 {offsets = [0, 144], sizes = [1, 16], strides = [1, 1]} : vector<1x256xf32> to vector<1x16xf32>
      %c12 = arith.constant 12 : index
      %c3_45 = arith.constant 3 : index
      %58 = vector.load %arg7[%c12, %c3_45] : memref<22x22xf32, #tpu.memory_space<vmem>>, vector<1x16xf32>
      tpu.vector_store %arg7[%c12, %c3_45], %57 {strides = array<i32>} : memref<22x22xf32, #tpu.memory_space<vmem>>, vector<1x16xf32>,
      %59 = vector.extract_strided_slice %20 {offsets = [0, 144], sizes = [1, 16], strides = [1, 1]} : vector<1x256xf32> to vector<1x16xf32>
      %c12_46 = arith.constant 12 : index
      %c3_47 = arith.constant 3 : index
      %60 = vector.load %arg8[%c12_46, %c3_47] : memref<22x22xf32, #tpu.memory_space<vmem>>, vector<1x16xf32>
      tpu.vector_store %arg8[%c12_46, %c3_47], %59 {strides = array<i32>} : memref<22x22xf32, #tpu.memory_space<vmem>>, vector<1x16xf32>,
      %61 = vector.extract_strided_slice %19 {offsets = [0, 160], sizes = [1, 16], strides = [1, 1]} : vector<1x256xf32> to vector<1x16xf32>
      %c13 = arith.constant 13 : index
      %c3_48 = arith.constant 3 : index
      %62 = vector.load %arg7[%c13, %c3_48] : memref<22x22xf32, #tpu.memory_space<vmem>>, vector<1x16xf32>
      tpu.vector_store %arg7[%c13, %c3_48], %61 {strides = array<i32>} : memref<22x22xf32, #tpu.memory_space<vmem>>, vector<1x16xf32>,
      %63 = vector.extract_strided_slice %20 {offsets = [0, 160], sizes = [1, 16], strides = [1, 1]} : vector<1x256xf32> to vector<1x16xf32>
      %c13_49 = arith.constant 13 : index
      %c3_50 = arith.constant 3 : index
      %64 = vector.load %arg8[%c13_49, %c3_50] : memref<22x22xf32, #tpu.memory_space<vmem>>, vector<1x16xf32>
      tpu.vector_store %arg8[%c13_49, %c3_50], %63 {strides = array<i32>} : memref<22x22xf32, #tpu.memory_space<vmem>>, vector<1x16xf32>,
      %65 = vector.extract_strided_slice %19 {offsets = [0, 176], sizes = [1, 16], strides = [1, 1]} : vector<1x256xf32> to vector<1x16xf32>
      %c14 = arith.constant 14 : index
      %c3_51 = arith.constant 3 : index
      %66 = vector.load %arg7[%c14, %c3_51] : memref<22x22xf32, #tpu.memory_space<vmem>>, vector<1x16xf32>
      tpu.vector_store %arg7[%c14, %c3_51], %65 {strides = array<i32>} : memref<22x22xf32, #tpu.memory_space<vmem>>, vector<1x16xf32>,
      %67 = vector.extract_strided_slice %20 {offsets = [0, 176], sizes = [1, 16], strides = [1, 1]} : vector<1x256xf32> to vector<1x16xf32>
      %c14_52 = arith.constant 14 : index
      %c3_53 = arith.constant 3 : index
      %68 = vector.load %arg8[%c14_52, %c3_53] : memref<22x22xf32, #tpu.memory_space<vmem>>, vector<1x16xf32>
      tpu.vector_store %arg8[%c14_52, %c3_53], %67 {strides = array<i32>} : memref<22x22xf32, #tpu.memory_space<vmem>>, vector<1x16xf32>,
      %69 = vector.extract_strided_slice %19 {offsets = [0, 192], sizes = [1, 16], strides = [1, 1]} : vector<1x256xf32> to vector<1x16xf32>
      %c15 = arith.constant 15 : index
      %c3_54 = arith.constant 3 : index
      %70 = vector.load %arg7[%c15, %c3_54] : memref<22x22xf32, #tpu.memory_space<vmem>>, vector<1x16xf32>
      tpu.vector_store %arg7[%c15, %c3_54], %69 {strides = array<i32>} : memref<22x22xf32, #tpu.memory_space<vmem>>, vector<1x16xf32>,
      %71 = vector.extract_strided_slice %20 {offsets = [0, 192], sizes = [1, 16], strides = [1, 1]} : vector<1x256xf32> to vector<1x16xf32>
      %c15_55 = arith.constant 15 : index
      %c3_56 = arith.constant 3 : index
      %72 = vector.load %arg8[%c15_55, %c3_56] : memref<22x22xf32, #tpu.memory_space<vmem>>, vector<1x16xf32>
      tpu.vector_store %arg8[%c15_55, %c3_56], %71 {strides = array<i32>} : memref<22x22xf32, #tpu.memory_space<vmem>>, vector<1x16xf32>,
      %73 = vector.extract_strided_slice %19 {offsets = [0, 208], sizes = [1, 16], strides = [1, 1]} : vector<1x256xf32> to vector<1x16xf32>
      %c16 = arith.constant 16 : index
      %c3_57 = arith.constant 3 : index
      %74 = vector.load %arg7[%c16, %c3_57] : memref<22x22xf32, #tpu.memory_space<vmem>>, vector<1x16xf32>
      tpu.vector_store %arg7[%c16, %c3_57], %73 {strides = array<i32>} : memref<22x22xf32, #tpu.memory_space<vmem>>, vector<1x16xf32>,
      %75 = vector.extract_strided_slice %20 {offsets = [0, 208], sizes = [1, 16], strides = [1, 1]} : vector<1x256xf32> to vector<1x16xf32>
      %c16_58 = arith.constant 16 : index
      %c3_59 = arith.constant 3 : index
      %76 = vector.load %arg8[%c16_58, %c3_59] : memref<22x22xf32, #tpu.memory_space<vmem>>, vector<1x16xf32>
      tpu.vector_store %arg8[%c16_58, %c3_59], %75 {strides = array<i32>} : memref<22x22xf32, #tpu.memory_space<vmem>>, vector<1x16xf32>,
      %77 = vector.extract_strided_slice %19 {offsets = [0, 224], sizes = [1, 16], strides = [1, 1]} : vector<1x256xf32> to vector<1x16xf32>
      %c17 = arith.constant 17 : index
      %c3_60 = arith.constant 3 : index
      %78 = vector.load %arg7[%c17, %c3_60] : memref<22x22xf32, #tpu.memory_space<vmem>>, vector<1x16xf32>
      tpu.vector_store %arg7[%c17, %c3_60], %77 {strides = array<i32>} : memref<22x22xf32, #tpu.memory_space<vmem>>, vector<1x16xf32>,
      %79 = vector.extract_strided_slice %20 {offsets = [0, 224], sizes = [1, 16], strides = [1, 1]} : vector<1x256xf32> to vector<1x16xf32>
      %c17_61 = arith.constant 17 : index
      %c3_62 = arith.constant 3 : index
      %80 = vector.load %arg8[%c17_61, %c3_62] : memref<22x22xf32, #tpu.memory_space<vmem>>, vector<1x16xf32>
      tpu.vector_store %arg8[%c17_61, %c3_62], %79 {strides = array<i32>} : memref<22x22xf32, #tpu.memory_space<vmem>>, vector<1x16xf32>,
      %81 = vector.extract_strided_slice %19 {offsets = [0, 240], sizes = [1, 16], strides = [1, 1]} : vector<1x256xf32> to vector<1x16xf32>
      %c18 = arith.constant 18 : index
      %c3_63 = arith.constant 3 : index
      %82 = vector.load %arg7[%c18, %c3_63] : memref<22x22xf32, #tpu.memory_space<vmem>>, vector<1x16xf32>
      tpu.vector_store %arg7[%c18, %c3_63], %81 {strides = array<i32>} : memref<22x22xf32, #tpu.memory_space<vmem>>, vector<1x16xf32>,
      %83 = vector.extract_strided_slice %20 {offsets = [0, 240], sizes = [1, 16], strides = [1, 1]} : vector<1x256xf32> to vector<1x16xf32>
      %c18_64 = arith.constant 18 : index
      %c3_65 = arith.constant 3 : index
      %84 = vector.load %arg8[%c18_64, %c3_65] : memref<22x22xf32, #tpu.memory_space<vmem>>, vector<1x16xf32>
      tpu.vector_store %arg8[%c18_64, %c3_65], %83 {strides = array<i32>} : memref<22x22xf32, #tpu.memory_space<vmem>>, vector<1x16xf32>,
      %c0_66 = arith.constant 0 : index
      %c0_67 = arith.constant 0 : index
      %85 = vector.load %arg7[%c0_66, %c0_67] : memref<22x22xf32, #tpu.memory_space<vmem>>, vector<22x22xf32>
      %c0_68 = arith.constant 0 : index
      %c0_69 = arith.constant 0 : index
      %86 = vector.load %arg8[%c0_68, %c0_69] : memref<22x22xf32, #tpu.memory_space<vmem>>, vector<22x22xf32>
      %cst_70 = arith.constant 0.000000e+00 : f32
      %87 = vector.broadcast %cst_70 : f32 to vector<16x16xf32>
      %88 = vector.extract_strided_slice %85 {offsets = [0, 0], sizes = [16, 22], strides = [1, 1]} : vector<22x22xf32> to vector<16x22xf32>
      %89 = vector.extract_strided_slice %86 {offsets = [0, 0], sizes = [16, 22], strides = [1, 1]} : vector<22x22xf32> to vector<16x22xf32>
      %c0_71 = arith.constant 0 : index
      %90 = memref.load %arg2[%c0_71] : memref<98xf32, #tpu.memory_space<smem>>
      %c49 = arith.constant 49 : index
      %91 = memref.load %arg2[%c49] : memref<98xf32, #tpu.memory_space<smem>>
      %92 = vector.extract_strided_slice %88 {offsets = [0, 0], sizes = [16, 16], strides = [1, 1]} : vector<16x22xf32> to vector<16x16xf32>
      %93 = vector.broadcast %90 : f32 to vector<16x16xf32>
      %94 = arith.mulf %93, %92 : vector<16x16xf32>
      %95 = arith.addf %87, %94 : vector<16x16xf32>
      %96 = vector.extract_strided_slice %89 {offsets = [0, 0], sizes = [16, 16], strides = [1, 1]} : vector<16x22xf32> to vector<16x16xf32>
      %97 = vector.broadcast %91 : f32 to vector<16x16xf32>
      %98 = arith.mulf %97, %96 : vector<16x16xf32>
      %99 = arith.addf %95, %98 : vector<16x16xf32>
      %c1 = arith.constant 1 : index
      %100 = memref.load %arg2[%c1] : memref<98xf32, #tpu.memory_space<smem>>
      %c50 = arith.constant 50 : index
      %101 = memref.load %arg2[%c50] : memref<98xf32, #tpu.memory_space<smem>>
      %102 = vector.extract_strided_slice %88 {offsets = [0, 1], sizes = [16, 16], strides = [1, 1]} : vector<16x22xf32> to vector<16x16xf32>
      %103 = vector.broadcast %100 : f32 to vector<16x16xf32>
      %104 = arith.mulf %103, %102 : vector<16x16xf32>
      %105 = arith.addf %99, %104 : vector<16x16xf32>
      %106 = vector.extract_strided_slice %89 {offsets = [0, 1], sizes = [16, 16], strides = [1, 1]} : vector<16x22xf32> to vector<16x16xf32>
      %107 = vector.broadcast %101 : f32 to vector<16x16xf32>
      %108 = arith.mulf %107, %106 : vector<16x16xf32>
      %109 = arith.addf %105, %108 : vector<16x16xf32>
      %c2 = arith.constant 2 : index
      %110 = memref.load %arg2[%c2] : memref<98xf32, #tpu.memory_space<smem>>
      %c51 = arith.constant 51 : index
      %111 = memref.load %arg2[%c51] : memref<98xf32, #tpu.memory_space<smem>>
      %112 = vector.extract_strided_slice %88 {offsets = [0, 2], sizes = [16, 16], strides = [1, 1]} : vector<16x22xf32> to vector<16x16xf32>
      %113 = vector.broadcast %110 : f32 to vector<16x16xf32>
      %114 = arith.mulf %113, %112 : vector<16x16xf32>
      %115 = arith.addf %109, %114 : vector<16x16xf32>
      %116 = vector.extract_strided_slice %89 {offsets = [0, 2], sizes = [16, 16], strides = [1, 1]} : vector<16x22xf32> to vector<16x16xf32>
      %117 = vector.broadcast %111 : f32 to vector<16x16xf32>
      %118 = arith.mulf %117, %116 : vector<16x16xf32>
      %119 = arith.addf %115, %118 : vector<16x16xf32>
      %c3_72 = arith.constant 3 : index
      %120 = memref.load %arg2[%c3_72] : memref<98xf32, #tpu.memory_space<smem>>
      %c52 = arith.constant 52 : index
      %121 = memref.load %arg2[%c52] : memref<98xf32, #tpu.memory_space<smem>>
      %122 = vector.extract_strided_slice %88 {offsets = [0, 3], sizes = [16, 16], strides = [1, 1]} : vector<16x22xf32> to vector<16x16xf32>
      %123 = vector.broadcast %120 : f32 to vector<16x16xf32>
      %124 = arith.mulf %123, %122 : vector<16x16xf32>
      %125 = arith.addf %119, %124 : vector<16x16xf32>
      %126 = vector.extract_strided_slice %89 {offsets = [0, 3], sizes = [16, 16], strides = [1, 1]} : vector<16x22xf32> to vector<16x16xf32>
      %127 = vector.broadcast %121 : f32 to vector<16x16xf32>
      %128 = arith.mulf %127, %126 : vector<16x16xf32>
      %129 = arith.addf %125, %128 : vector<16x16xf32>
      %c4_73 = arith.constant 4 : index
      %130 = memref.load %arg2[%c4_73] : memref<98xf32, #tpu.memory_space<smem>>
      %c53 = arith.constant 53 : index
      %131 = memref.load %arg2[%c53] : memref<98xf32, #tpu.memory_space<smem>>
      %132 = vector.extract_strided_slice %88 {offsets = [0, 4], sizes = [16, 16], strides = [1, 1]} : vector<16x22xf32> to vector<16x16xf32>
      %133 = vector.broadcast %130 : f32 to vector<16x16xf32>
      %134 = arith.mulf %133, %132 : vector<16x16xf32>
      %135 = arith.addf %129, %134 : vector<16x16xf32>
      %136 = vector.extract_strided_slice %89 {offsets = [0, 4], sizes = [16, 16], strides = [1, 1]} : vector<16x22xf32> to vector<16x16xf32>
      %137 = vector.broadcast %131 : f32 to vector<16x16xf32>
      %138 = arith.mulf %137, %136 : vector<16x16xf32>
      %139 = arith.addf %135, %138 : vector<16x16xf32>
      %c5_74 = arith.constant 5 : index
      %140 = memref.load %arg2[%c5_74] : memref<98xf32, #tpu.memory_space<smem>>
      %c54 = arith.constant 54 : index
      %141 = memref.load %arg2[%c54] : memref<98xf32, #tpu.memory_space<smem>>
      %142 = vector.extract_strided_slice %88 {offsets = [0, 5], sizes = [16, 16], strides = [1, 1]} : vector<16x22xf32> to vector<16x16xf32>
      %143 = vector.broadcast %140 : f32 to vector<16x16xf32>
      %144 = arith.mulf %143, %142 : vector<16x16xf32>
      %145 = arith.addf %139, %144 : vector<16x16xf32>
      %146 = vector.extract_strided_slice %89 {offsets = [0, 5], sizes = [16, 16], strides = [1, 1]} : vector<16x22xf32> to vector<16x16xf32>
      %147 = vector.broadcast %141 : f32 to vector<16x16xf32>
      %148 = arith.mulf %147, %146 : vector<16x16xf32>
      %149 = arith.addf %145, %148 : vector<16x16xf32>
      %c6_75 = arith.constant 6 : index
      %150 = memref.load %arg2[%c6_75] : memref<98xf32, #tpu.memory_space<smem>>
      %c55 = arith.constant 55 : index
      %151 = memref.load %arg2[%c55] : memref<98xf32, #tpu.memory_space<smem>>
      %152 = vector.extract_strided_slice %88 {offsets = [0, 6], sizes = [16, 16], strides = [1, 1]} : vector<16x22xf32> to vector<16x16xf32>
      %153 = vector.broadcast %150 : f32 to vector<16x16xf32>
      %154 = arith.mulf %153, %152 : vector<16x16xf32>
      %155 = arith.addf %149, %154 : vector<16x16xf32>
      %156 = vector.extract_strided_slice %89 {offsets = [0, 6], sizes = [16, 16], strides = [1, 1]} : vector<16x22xf32> to vector<16x16xf32>
      %157 = vector.broadcast %151 : f32 to vector<16x16xf32>
      %158 = arith.mulf %157, %156 : vector<16x16xf32>
      %159 = arith.addf %155, %158 : vector<16x16xf32>
      %160 = vector.extract_strided_slice %85 {offsets = [1, 0], sizes = [16, 22], strides = [1, 1]} : vector<22x22xf32> to vector<16x22xf32>
      %161 = vector.extract_strided_slice %86 {offsets = [1, 0], sizes = [16, 22], strides = [1, 1]} : vector<22x22xf32> to vector<16x22xf32>
      %c7_76 = arith.constant 7 : index
      %162 = memref.load %arg2[%c7_76] : memref<98xf32, #tpu.memory_space<smem>>
      %c56 = arith.constant 56 : index
      %163 = memref.load %arg2[%c56] : memref<98xf32, #tpu.memory_space<smem>>
      %164 = vector.extract_strided_slice %160 {offsets = [0, 0], sizes = [16, 16], strides = [1, 1]} : vector<16x22xf32> to vector<16x16xf32>
      %165 = vector.broadcast %162 : f32 to vector<16x16xf32>
      %166 = arith.mulf %165, %164 : vector<16x16xf32>
      %167 = arith.addf %159, %166 : vector<16x16xf32>
      %168 = vector.extract_strided_slice %161 {offsets = [0, 0], sizes = [16, 16], strides = [1, 1]} : vector<16x22xf32> to vector<16x16xf32>
      %169 = vector.broadcast %163 : f32 to vector<16x16xf32>
      %170 = arith.mulf %169, %168 : vector<16x16xf32>
      %171 = arith.addf %167, %170 : vector<16x16xf32>
      %c8_77 = arith.constant 8 : index
      %172 = memref.load %arg2[%c8_77] : memref<98xf32, #tpu.memory_space<smem>>
      %c57 = arith.constant 57 : index
      %173 = memref.load %arg2[%c57] : memref<98xf32, #tpu.memory_space<smem>>
      %174 = vector.extract_strided_slice %160 {offsets = [0, 1], sizes = [16, 16], strides = [1, 1]} : vector<16x22xf32> to vector<16x16xf32>
      %175 = vector.broadcast %172 : f32 to vector<16x16xf32>
      %176 = arith.mulf %175, %174 : vector<16x16xf32>
      %177 = arith.addf %171, %176 : vector<16x16xf32>
      %178 = vector.extract_strided_slice %161 {offsets = [0, 1], sizes = [16, 16], strides = [1, 1]} : vector<16x22xf32> to vector<16x16xf32>
      %179 = vector.broadcast %173 : f32 to vector<16x16xf32>
      %180 = arith.mulf %179, %178 : vector<16x16xf32>
      %181 = arith.addf %177, %180 : vector<16x16xf32>
      %c9_78 = arith.constant 9 : index
      %182 = memref.load %arg2[%c9_78] : memref<98xf32, #tpu.memory_space<smem>>
      %c58 = arith.constant 58 : index
      %183 = memref.load %arg2[%c58] : memref<98xf32, #tpu.memory_space<smem>>
      %184 = vector.extract_strided_slice %160 {offsets = [0, 2], sizes = [16, 16], strides = [1, 1]} : vector<16x22xf32> to vector<16x16xf32>
      %185 = vector.broadcast %182 : f32 to vector<16x16xf32>
      %186 = arith.mulf %185, %184 : vector<16x16xf32>
      %187 = arith.addf %181, %186 : vector<16x16xf32>
      %188 = vector.extract_strided_slice %161 {offsets = [0, 2], sizes = [16, 16], strides = [1, 1]} : vector<16x22xf32> to vector<16x16xf32>
      %189 = vector.broadcast %183 : f32 to vector<16x16xf32>
      %190 = arith.mulf %189, %188 : vector<16x16xf32>
      %191 = arith.addf %187, %190 : vector<16x16xf32>
      %c10_79 = arith.constant 10 : index
      %192 = memref.load %arg2[%c10_79] : memref<98xf32, #tpu.memory_space<smem>>
      %c59 = arith.constant 59 : index
      %193 = memref.load %arg2[%c59] : memref<98xf32, #tpu.memory_space<smem>>
      %194 = vector.extract_strided_slice %160 {offsets = [0, 3], sizes = [16, 16], strides = [1, 1]} : vector<16x22xf32> to vector<16x16xf32>
      %195 = vector.broadcast %192 : f32 to vector<16x16xf32>
      %196 = arith.mulf %195, %194 : vector<16x16xf32>
      %197 = arith.addf %191, %196 : vector<16x16xf32>
      %198 = vector.extract_strided_slice %161 {offsets = [0, 3], sizes = [16, 16], strides = [1, 1]} : vector<16x22xf32> to vector<16x16xf32>
      %199 = vector.broadcast %193 : f32 to vector<16x16xf32>
      %200 = arith.mulf %199, %198 : vector<16x16xf32>
      %201 = arith.addf %197, %200 : vector<16x16xf32>
      %c11_80 = arith.constant 11 : index
      %202 = memref.load %arg2[%c11_80] : memref<98xf32, #tpu.memory_space<smem>>
      %c60 = arith.constant 60 : index
      %203 = memref.load %arg2[%c60] : memref<98xf32, #tpu.memory_space<smem>>
      %204 = vector.extract_strided_slice %160 {offsets = [0, 4], sizes = [16, 16], strides = [1, 1]} : vector<16x22xf32> to vector<16x16xf32>
      %205 = vector.broadcast %202 : f32 to vector<16x16xf32>
      %206 = arith.mulf %205, %204 : vector<16x16xf32>
      %207 = arith.addf %201, %206 : vector<16x16xf32>
      %208 = vector.extract_strided_slice %161 {offsets = [0, 4], sizes = [16, 16], strides = [1, 1]} : vector<16x22xf32> to vector<16x16xf32>
      %209 = vector.broadcast %203 : f32 to vector<16x16xf32>
      %210 = arith.mulf %209, %208 : vector<16x16xf32>
      %211 = arith.addf %207, %210 : vector<16x16xf32>
      %c12_81 = arith.constant 12 : index
      %212 = memref.load %arg2[%c12_81] : memref<98xf32, #tpu.memory_space<smem>>
      %c61 = arith.constant 61 : index
      %213 = memref.load %arg2[%c61] : memref<98xf32, #tpu.memory_space<smem>>
      %214 = vector.extract_strided_slice %160 {offsets = [0, 5], sizes = [16, 16], strides = [1, 1]} : vector<16x22xf32> to vector<16x16xf32>
      %215 = vector.broadcast %212 : f32 to vector<16x16xf32>
      %216 = arith.mulf %215, %214 : vector<16x16xf32>
      %217 = arith.addf %211, %216 : vector<16x16xf32>
      %218 = vector.extract_strided_slice %161 {offsets = [0, 5], sizes = [16, 16], strides = [1, 1]} : vector<16x22xf32> to vector<16x16xf32>
      %219 = vector.broadcast %213 : f32 to vector<16x16xf32>
      %220 = arith.mulf %219, %218 : vector<16x16xf32>
      %221 = arith.addf %217, %220 : vector<16x16xf32>
      %c13_82 = arith.constant 13 : index
      %222 = memref.load %arg2[%c13_82] : memref<98xf32, #tpu.memory_space<smem>>
      %c62 = arith.constant 62 : index
      %223 = memref.load %arg2[%c62] : memref<98xf32, #tpu.memory_space<smem>>
      %224 = vector.extract_strided_slice %160 {offsets = [0, 6], sizes = [16, 16], strides = [1, 1]} : vector<16x22xf32> to vector<16x16xf32>
      %225 = vector.broadcast %222 : f32 to vector<16x16xf32>
      %226 = arith.mulf %225, %224 : vector<16x16xf32>
      %227 = arith.addf %221, %226 : vector<16x16xf32>
      %228 = vector.extract_strided_slice %161 {offsets = [0, 6], sizes = [16, 16], strides = [1, 1]} : vector<16x22xf32> to vector<16x16xf32>
      %229 = vector.broadcast %223 : f32 to vector<16x16xf32>
      %230 = arith.mulf %229, %228 : vector<16x16xf32>
      %231 = arith.addf %227, %230 : vector<16x16xf32>
      %232 = vector.extract_strided_slice %85 {offsets = [2, 0], sizes = [16, 22], strides = [1, 1]} : vector<22x22xf32> to vector<16x22xf32>
      %233 = vector.extract_strided_slice %86 {offsets = [2, 0], sizes = [16, 22], strides = [1, 1]} : vector<22x22xf32> to vector<16x22xf32>
      %c14_83 = arith.constant 14 : index
      %234 = memref.load %arg2[%c14_83] : memref<98xf32, #tpu.memory_space<smem>>
      %c63 = arith.constant 63 : index
      %235 = memref.load %arg2[%c63] : memref<98xf32, #tpu.memory_space<smem>>
      %236 = vector.extract_strided_slice %232 {offsets = [0, 0], sizes = [16, 16], strides = [1, 1]} : vector<16x22xf32> to vector<16x16xf32>
      %237 = vector.broadcast %234 : f32 to vector<16x16xf32>
      %238 = arith.mulf %237, %236 : vector<16x16xf32>
      %239 = arith.addf %231, %238 : vector<16x16xf32>
      %240 = vector.extract_strided_slice %233 {offsets = [0, 0], sizes = [16, 16], strides = [1, 1]} : vector<16x22xf32> to vector<16x16xf32>
      %241 = vector.broadcast %235 : f32 to vector<16x16xf32>
      %242 = arith.mulf %241, %240 : vector<16x16xf32>
      %243 = arith.addf %239, %242 : vector<16x16xf32>
      %c15_84 = arith.constant 15 : index
      %244 = memref.load %arg2[%c15_84] : memref<98xf32, #tpu.memory_space<smem>>
      %c64 = arith.constant 64 : index
      %245 = memref.load %arg2[%c64] : memref<98xf32, #tpu.memory_space<smem>>
      %246 = vector.extract_strided_slice %232 {offsets = [0, 1], sizes = [16, 16], strides = [1, 1]} : vector<16x22xf32> to vector<16x16xf32>
      %247 = vector.broadcast %244 : f32 to vector<16x16xf32>
      %248 = arith.mulf %247, %246 : vector<16x16xf32>
      %249 = arith.addf %243, %248 : vector<16x16xf32>
      %250 = vector.extract_strided_slice %233 {offsets = [0, 1], sizes = [16, 16], strides = [1, 1]} : vector<16x22xf32> to vector<16x16xf32>
      %251 = vector.broadcast %245 : f32 to vector<16x16xf32>
      %252 = arith.mulf %251, %250 : vector<16x16xf32>
      %253 = arith.addf %249, %252 : vector<16x16xf32>
      %c16_85 = arith.constant 16 : index
      %254 = memref.load %arg2[%c16_85] : memref<98xf32, #tpu.memory_space<smem>>
      %c65 = arith.constant 65 : index
      %255 = memref.load %arg2[%c65] : memref<98xf32, #tpu.memory_space<smem>>
      %256 = vector.extract_strided_slice %232 {offsets = [0, 2], sizes = [16, 16], strides = [1, 1]} : vector<16x22xf32> to vector<16x16xf32>
      %257 = vector.broadcast %254 : f32 to vector<16x16xf32>
      %258 = arith.mulf %257, %256 : vector<16x16xf32>
      %259 = arith.addf %253, %258 : vector<16x16xf32>
      %260 = vector.extract_strided_slice %233 {offsets = [0, 2], sizes = [16, 16], strides = [1, 1]} : vector<16x22xf32> to vector<16x16xf32>
      %261 = vector.broadcast %255 : f32 to vector<16x16xf32>
      %262 = arith.mulf %261, %260 : vector<16x16xf32>
      %263 = arith.addf %259, %262 : vector<16x16xf32>
      %c17_86 = arith.constant 17 : index
      %264 = memref.load %arg2[%c17_86] : memref<98xf32, #tpu.memory_space<smem>>
      %c66 = arith.constant 66 : index
      %265 = memref.load %arg2[%c66] : memref<98xf32, #tpu.memory_space<smem>>
      %266 = vector.extract_strided_slice %232 {offsets = [0, 3], sizes = [16, 16], strides = [1, 1]} : vector<16x22xf32> to vector<16x16xf32>
      %267 = vector.broadcast %264 : f32 to vector<16x16xf32>
      %268 = arith.mulf %267, %266 : vector<16x16xf32>
      %269 = arith.addf %263, %268 : vector<16x16xf32>
      %270 = vector.extract_strided_slice %233 {offsets = [0, 3], sizes = [16, 16], strides = [1, 1]} : vector<16x22xf32> to vector<16x16xf32>
      %271 = vector.broadcast %265 : f32 to vector<16x16xf32>
      %272 = arith.mulf %271, %270 : vector<16x16xf32>
      %273 = arith.addf %269, %272 : vector<16x16xf32>
      %c18_87 = arith.constant 18 : index
      %274 = memref.load %arg2[%c18_87] : memref<98xf32, #tpu.memory_space<smem>>
      %c67 = arith.constant 67 : index
      %275 = memref.load %arg2[%c67] : memref<98xf32, #tpu.memory_space<smem>>
      %276 = vector.extract_strided_slice %232 {offsets = [0, 4], sizes = [16, 16], strides = [1, 1]} : vector<16x22xf32> to vector<16x16xf32>
      %277 = vector.broadcast %274 : f32 to vector<16x16xf32>
      %278 = arith.mulf %277, %276 : vector<16x16xf32>
      %279 = arith.addf %273, %278 : vector<16x16xf32>
      %280 = vector.extract_strided_slice %233 {offsets = [0, 4], sizes = [16, 16], strides = [1, 1]} : vector<16x22xf32> to vector<16x16xf32>
      %281 = vector.broadcast %275 : f32 to vector<16x16xf32>
      %282 = arith.mulf %281, %280 : vector<16x16xf32>
      %283 = arith.addf %279, %282 : vector<16x16xf32>
      %c19 = arith.constant 19 : index
      %284 = memref.load %arg2[%c19] : memref<98xf32, #tpu.memory_space<smem>>
      %c68 = arith.constant 68 : index
      %285 = memref.load %arg2[%c68] : memref<98xf32, #tpu.memory_space<smem>>
      %286 = vector.extract_strided_slice %232 {offsets = [0, 5], sizes = [16, 16], strides = [1, 1]} : vector<16x22xf32> to vector<16x16xf32>
      %287 = vector.broadcast %284 : f32 to vector<16x16xf32>
      %288 = arith.mulf %287, %286 : vector<16x16xf32>
      %289 = arith.addf %283, %288 : vector<16x16xf32>
      %290 = vector.extract_strided_slice %233 {offsets = [0, 5], sizes = [16, 16], strides = [1, 1]} : vector<16x22xf32> to vector<16x16xf32>
      %291 = vector.broadcast %285 : f32 to vector<16x16xf32>
      %292 = arith.mulf %291, %290 : vector<16x16xf32>
      %293 = arith.addf %289, %292 : vector<16x16xf32>
      %c20 = arith.constant 20 : index
      %294 = memref.load %arg2[%c20] : memref<98xf32, #tpu.memory_space<smem>>
      %c69 = arith.constant 69 : index
      %295 = memref.load %arg2[%c69] : memref<98xf32, #tpu.memory_space<smem>>
      %296 = vector.extract_strided_slice %232 {offsets = [0, 6], sizes = [16, 16], strides = [1, 1]} : vector<16x22xf32> to vector<16x16xf32>
      %297 = vector.broadcast %294 : f32 to vector<16x16xf32>
      %298 = arith.mulf %297, %296 : vector<16x16xf32>
      %299 = arith.addf %293, %298 : vector<16x16xf32>
      %300 = vector.extract_strided_slice %233 {offsets = [0, 6], sizes = [16, 16], strides = [1, 1]} : vector<16x22xf32> to vector<16x16xf32>
      %301 = vector.broadcast %295 : f32 to vector<16x16xf32>
      %302 = arith.mulf %301, %300 : vector<16x16xf32>
      %303 = arith.addf %299, %302 : vector<16x16xf32>
      %304 = vector.extract_strided_slice %85 {offsets = [3, 0], sizes = [16, 22], strides = [1, 1]} : vector<22x22xf32> to vector<16x22xf32>
      %305 = vector.extract_strided_slice %86 {offsets = [3, 0], sizes = [16, 22], strides = [1, 1]} : vector<22x22xf32> to vector<16x22xf32>
      %c21 = arith.constant 21 : index
      %306 = memref.load %arg2[%c21] : memref<98xf32, #tpu.memory_space<smem>>
      %c70 = arith.constant 70 : index
      %307 = memref.load %arg2[%c70] : memref<98xf32, #tpu.memory_space<smem>>
      %308 = vector.extract_strided_slice %304 {offsets = [0, 0], sizes = [16, 16], strides = [1, 1]} : vector<16x22xf32> to vector<16x16xf32>
      %309 = vector.broadcast %306 : f32 to vector<16x16xf32>
      %310 = arith.mulf %309, %308 : vector<16x16xf32>
      %311 = arith.addf %303, %310 : vector<16x16xf32>
      %312 = vector.extract_strided_slice %305 {offsets = [0, 0], sizes = [16, 16], strides = [1, 1]} : vector<16x22xf32> to vector<16x16xf32>
      %313 = vector.broadcast %307 : f32 to vector<16x16xf32>
      %314 = arith.mulf %313, %312 : vector<16x16xf32>
      %315 = arith.addf %311, %314 : vector<16x16xf32>
      %c22 = arith.constant 22 : index
      %316 = memref.load %arg2[%c22] : memref<98xf32, #tpu.memory_space<smem>>
      %c71 = arith.constant 71 : index
      %317 = memref.load %arg2[%c71] : memref<98xf32, #tpu.memory_space<smem>>
      %318 = vector.extract_strided_slice %304 {offsets = [0, 1], sizes = [16, 16], strides = [1, 1]} : vector<16x22xf32> to vector<16x16xf32>
      %319 = vector.broadcast %316 : f32 to vector<16x16xf32>
      %320 = arith.mulf %319, %318 : vector<16x16xf32>
      %321 = arith.addf %315, %320 : vector<16x16xf32>
      %322 = vector.extract_strided_slice %305 {offsets = [0, 1], sizes = [16, 16], strides = [1, 1]} : vector<16x22xf32> to vector<16x16xf32>
      %323 = vector.broadcast %317 : f32 to vector<16x16xf32>
      %324 = arith.mulf %323, %322 : vector<16x16xf32>
      %325 = arith.addf %321, %324 : vector<16x16xf32>
      %c23 = arith.constant 23 : index
      %326 = memref.load %arg2[%c23] : memref<98xf32, #tpu.memory_space<smem>>
      %c72 = arith.constant 72 : index
      %327 = memref.load %arg2[%c72] : memref<98xf32, #tpu.memory_space<smem>>
      %328 = vector.extract_strided_slice %304 {offsets = [0, 2], sizes = [16, 16], strides = [1, 1]} : vector<16x22xf32> to vector<16x16xf32>
      %329 = vector.broadcast %326 : f32 to vector<16x16xf32>
      %330 = arith.mulf %329, %328 : vector<16x16xf32>
      %331 = arith.addf %325, %330 : vector<16x16xf32>
      %332 = vector.extract_strided_slice %305 {offsets = [0, 2], sizes = [16, 16], strides = [1, 1]} : vector<16x22xf32> to vector<16x16xf32>
      %333 = vector.broadcast %327 : f32 to vector<16x16xf32>
      %334 = arith.mulf %333, %332 : vector<16x16xf32>
      %335 = arith.addf %331, %334 : vector<16x16xf32>
      %c24 = arith.constant 24 : index
      %336 = memref.load %arg2[%c24] : memref<98xf32, #tpu.memory_space<smem>>
      %c73 = arith.constant 73 : index
      %337 = memref.load %arg2[%c73] : memref<98xf32, #tpu.memory_space<smem>>
      %338 = vector.extract_strided_slice %304 {offsets = [0, 3], sizes = [16, 16], strides = [1, 1]} : vector<16x22xf32> to vector<16x16xf32>
      %339 = vector.broadcast %336 : f32 to vector<16x16xf32>
      %340 = arith.mulf %339, %338 : vector<16x16xf32>
      %341 = arith.addf %335, %340 : vector<16x16xf32>
      %342 = vector.extract_strided_slice %305 {offsets = [0, 3], sizes = [16, 16], strides = [1, 1]} : vector<16x22xf32> to vector<16x16xf32>
      %343 = vector.broadcast %337 : f32 to vector<16x16xf32>
      %344 = arith.mulf %343, %342 : vector<16x16xf32>
      %345 = arith.addf %341, %344 : vector<16x16xf32>
      %c25 = arith.constant 25 : index
      %346 = memref.load %arg2[%c25] : memref<98xf32, #tpu.memory_space<smem>>
      %c74 = arith.constant 74 : index
      %347 = memref.load %arg2[%c74] : memref<98xf32, #tpu.memory_space<smem>>
      %348 = vector.extract_strided_slice %304 {offsets = [0, 4], sizes = [16, 16], strides = [1, 1]} : vector<16x22xf32> to vector<16x16xf32>
      %349 = vector.broadcast %346 : f32 to vector<16x16xf32>
      %350 = arith.mulf %349, %348 : vector<16x16xf32>
      %351 = arith.addf %345, %350 : vector<16x16xf32>
      %352 = vector.extract_strided_slice %305 {offsets = [0, 4], sizes = [16, 16], strides = [1, 1]} : vector<16x22xf32> to vector<16x16xf32>
      %353 = vector.broadcast %347 : f32 to vector<16x16xf32>
      %354 = arith.mulf %353, %352 : vector<16x16xf32>
      %355 = arith.addf %351, %354 : vector<16x16xf32>
      %c26 = arith.constant 26 : index
      %356 = memref.load %arg2[%c26] : memref<98xf32, #tpu.memory_space<smem>>
      %c75 = arith.constant 75 : index
      %357 = memref.load %arg2[%c75] : memref<98xf32, #tpu.memory_space<smem>>
      %358 = vector.extract_strided_slice %304 {offsets = [0, 5], sizes = [16, 16], strides = [1, 1]} : vector<16x22xf32> to vector<16x16xf32>
      %359 = vector.broadcast %356 : f32 to vector<16x16xf32>
      %360 = arith.mulf %359, %358 : vector<16x16xf32>
      %361 = arith.addf %355, %360 : vector<16x16xf32>
      %362 = vector.extract_strided_slice %305 {offsets = [0, 5], sizes = [16, 16], strides = [1, 1]} : vector<16x22xf32> to vector<16x16xf32>
      %363 = vector.broadcast %357 : f32 to vector<16x16xf32>
      %364 = arith.mulf %363, %362 : vector<16x16xf32>
      %365 = arith.addf %361, %364 : vector<16x16xf32>
      %c27 = arith.constant 27 : index
      %366 = memref.load %arg2[%c27] : memref<98xf32, #tpu.memory_space<smem>>
      %c76 = arith.constant 76 : index
      %367 = memref.load %arg2[%c76] : memref<98xf32, #tpu.memory_space<smem>>
      %368 = vector.extract_strided_slice %304 {offsets = [0, 6], sizes = [16, 16], strides = [1, 1]} : vector<16x22xf32> to vector<16x16xf32>
      %369 = vector.broadcast %366 : f32 to vector<16x16xf32>
      %370 = arith.mulf %369, %368 : vector<16x16xf32>
      %371 = arith.addf %365, %370 : vector<16x16xf32>
      %372 = vector.extract_strided_slice %305 {offsets = [0, 6], sizes = [16, 16], strides = [1, 1]} : vector<16x22xf32> to vector<16x16xf32>
      %373 = vector.broadcast %367 : f32 to vector<16x16xf32>
      %374 = arith.mulf %373, %372 : vector<16x16xf32>
      %375 = arith.addf %371, %374 : vector<16x16xf32>
      %376 = vector.extract_strided_slice %85 {offsets = [4, 0], sizes = [16, 22], strides = [1, 1]} : vector<22x22xf32> to vector<16x22xf32>
      %377 = vector.extract_strided_slice %86 {offsets = [4, 0], sizes = [16, 22], strides = [1, 1]} : vector<22x22xf32> to vector<16x22xf32>
      %c28 = arith.constant 28 : index
      %378 = memref.load %arg2[%c28] : memref<98xf32, #tpu.memory_space<smem>>
      %c77 = arith.constant 77 : index
      %379 = memref.load %arg2[%c77] : memref<98xf32, #tpu.memory_space<smem>>
      %380 = vector.extract_strided_slice %376 {offsets = [0, 0], sizes = [16, 16], strides = [1, 1]} : vector<16x22xf32> to vector<16x16xf32>
      %381 = vector.broadcast %378 : f32 to vector<16x16xf32>
      %382 = arith.mulf %381, %380 : vector<16x16xf32>
      %383 = arith.addf %375, %382 : vector<16x16xf32>
      %384 = vector.extract_strided_slice %377 {offsets = [0, 0], sizes = [16, 16], strides = [1, 1]} : vector<16x22xf32> to vector<16x16xf32>
      %385 = vector.broadcast %379 : f32 to vector<16x16xf32>
      %386 = arith.mulf %385, %384 : vector<16x16xf32>
      %387 = arith.addf %383, %386 : vector<16x16xf32>
      %c29 = arith.constant 29 : index
      %388 = memref.load %arg2[%c29] : memref<98xf32, #tpu.memory_space<smem>>
      %c78 = arith.constant 78 : index
      %389 = memref.load %arg2[%c78] : memref<98xf32, #tpu.memory_space<smem>>
      %390 = vector.extract_strided_slice %376 {offsets = [0, 1], sizes = [16, 16], strides = [1, 1]} : vector<16x22xf32> to vector<16x16xf32>
      %391 = vector.broadcast %388 : f32 to vector<16x16xf32>
      %392 = arith.mulf %391, %390 : vector<16x16xf32>
      %393 = arith.addf %387, %392 : vector<16x16xf32>
      %394 = vector.extract_strided_slice %377 {offsets = [0, 1], sizes = [16, 16], strides = [1, 1]} : vector<16x22xf32> to vector<16x16xf32>
      %395 = vector.broadcast %389 : f32 to vector<16x16xf32>
      %396 = arith.mulf %395, %394 : vector<16x16xf32>
      %397 = arith.addf %393, %396 : vector<16x16xf32>
      %c30 = arith.constant 30 : index
      %398 = memref.load %arg2[%c30] : memref<98xf32, #tpu.memory_space<smem>>
      %c79 = arith.constant 79 : index
      %399 = memref.load %arg2[%c79] : memref<98xf32, #tpu.memory_space<smem>>
      %400 = vector.extract_strided_slice %376 {offsets = [0, 2], sizes = [16, 16], strides = [1, 1]} : vector<16x22xf32> to vector<16x16xf32>
      %401 = vector.broadcast %398 : f32 to vector<16x16xf32>
      %402 = arith.mulf %401, %400 : vector<16x16xf32>
      %403 = arith.addf %397, %402 : vector<16x16xf32>
      %404 = vector.extract_strided_slice %377 {offsets = [0, 2], sizes = [16, 16], strides = [1, 1]} : vector<16x22xf32> to vector<16x16xf32>
      %405 = vector.broadcast %399 : f32 to vector<16x16xf32>
      %406 = arith.mulf %405, %404 : vector<16x16xf32>
      %407 = arith.addf %403, %406 : vector<16x16xf32>
      %c31 = arith.constant 31 : index
      %408 = memref.load %arg2[%c31] : memref<98xf32, #tpu.memory_space<smem>>
      %c80 = arith.constant 80 : index
      %409 = memref.load %arg2[%c80] : memref<98xf32, #tpu.memory_space<smem>>
      %410 = vector.extract_strided_slice %376 {offsets = [0, 3], sizes = [16, 16], strides = [1, 1]} : vector<16x22xf32> to vector<16x16xf32>
      %411 = vector.broadcast %408 : f32 to vector<16x16xf32>
      %412 = arith.mulf %411, %410 : vector<16x16xf32>
      %413 = arith.addf %407, %412 : vector<16x16xf32>
      %414 = vector.extract_strided_slice %377 {offsets = [0, 3], sizes = [16, 16], strides = [1, 1]} : vector<16x22xf32> to vector<16x16xf32>
      %415 = vector.broadcast %409 : f32 to vector<16x16xf32>
      %416 = arith.mulf %415, %414 : vector<16x16xf32>
      %417 = arith.addf %413, %416 : vector<16x16xf32>
      %c32 = arith.constant 32 : index
      %418 = memref.load %arg2[%c32] : memref<98xf32, #tpu.memory_space<smem>>
      %c81 = arith.constant 81 : index
      %419 = memref.load %arg2[%c81] : memref<98xf32, #tpu.memory_space<smem>>
      %420 = vector.extract_strided_slice %376 {offsets = [0, 4], sizes = [16, 16], strides = [1, 1]} : vector<16x22xf32> to vector<16x16xf32>
      %421 = vector.broadcast %418 : f32 to vector<16x16xf32>
      %422 = arith.mulf %421, %420 : vector<16x16xf32>
      %423 = arith.addf %417, %422 : vector<16x16xf32>
      %424 = vector.extract_strided_slice %377 {offsets = [0, 4], sizes = [16, 16], strides = [1, 1]} : vector<16x22xf32> to vector<16x16xf32>
      %425 = vector.broadcast %419 : f32 to vector<16x16xf32>
      %426 = arith.mulf %425, %424 : vector<16x16xf32>
      %427 = arith.addf %423, %426 : vector<16x16xf32>
      %c33 = arith.constant 33 : index
      %428 = memref.load %arg2[%c33] : memref<98xf32, #tpu.memory_space<smem>>
      %c82 = arith.constant 82 : index
      %429 = memref.load %arg2[%c82] : memref<98xf32, #tpu.memory_space<smem>>
      %430 = vector.extract_strided_slice %376 {offsets = [0, 5], sizes = [16, 16], strides = [1, 1]} : vector<16x22xf32> to vector<16x16xf32>
      %431 = vector.broadcast %428 : f32 to vector<16x16xf32>
      %432 = arith.mulf %431, %430 : vector<16x16xf32>
      %433 = arith.addf %427, %432 : vector<16x16xf32>
      %434 = vector.extract_strided_slice %377 {offsets = [0, 5], sizes = [16, 16], strides = [1, 1]} : vector<16x22xf32> to vector<16x16xf32>
      %435 = vector.broadcast %429 : f32 to vector<16x16xf32>
      %436 = arith.mulf %435, %434 : vector<16x16xf32>
      %437 = arith.addf %433, %436 : vector<16x16xf32>
      %c34 = arith.constant 34 : index
      %438 = memref.load %arg2[%c34] : memref<98xf32, #tpu.memory_space<smem>>
      %c83 = arith.constant 83 : index
      %439 = memref.load %arg2[%c83] : memref<98xf32, #tpu.memory_space<smem>>
      %440 = vector.extract_strided_slice %376 {offsets = [0, 6], sizes = [16, 16], strides = [1, 1]} : vector<16x22xf32> to vector<16x16xf32>
      %441 = vector.broadcast %438 : f32 to vector<16x16xf32>
      %442 = arith.mulf %441, %440 : vector<16x16xf32>
      %443 = arith.addf %437, %442 : vector<16x16xf32>
      %444 = vector.extract_strided_slice %377 {offsets = [0, 6], sizes = [16, 16], strides = [1, 1]} : vector<16x22xf32> to vector<16x16xf32>
      %445 = vector.broadcast %439 : f32 to vector<16x16xf32>
      %446 = arith.mulf %445, %444 : vector<16x16xf32>
      %447 = arith.addf %443, %446 : vector<16x16xf32>
      %448 = vector.extract_strided_slice %85 {offsets = [5, 0], sizes = [16, 22], strides = [1, 1]} : vector<22x22xf32> to vector<16x22xf32>
      %449 = vector.extract_strided_slice %86 {offsets = [5, 0], sizes = [16, 22], strides = [1, 1]} : vector<22x22xf32> to vector<16x22xf32>
      %c35 = arith.constant 35 : index
      %450 = memref.load %arg2[%c35] : memref<98xf32, #tpu.memory_space<smem>>
      %c84 = arith.constant 84 : index
      %451 = memref.load %arg2[%c84] : memref<98xf32, #tpu.memory_space<smem>>
      %452 = vector.extract_strided_slice %448 {offsets = [0, 0], sizes = [16, 16], strides = [1, 1]} : vector<16x22xf32> to vector<16x16xf32>
      %453 = vector.broadcast %450 : f32 to vector<16x16xf32>
      %454 = arith.mulf %453, %452 : vector<16x16xf32>
      %455 = arith.addf %447, %454 : vector<16x16xf32>
      %456 = vector.extract_strided_slice %449 {offsets = [0, 0], sizes = [16, 16], strides = [1, 1]} : vector<16x22xf32> to vector<16x16xf32>
      %457 = vector.broadcast %451 : f32 to vector<16x16xf32>
      %458 = arith.mulf %457, %456 : vector<16x16xf32>
      %459 = arith.addf %455, %458 : vector<16x16xf32>
      %c36 = arith.constant 36 : index
      %460 = memref.load %arg2[%c36] : memref<98xf32, #tpu.memory_space<smem>>
      %c85 = arith.constant 85 : index
      %461 = memref.load %arg2[%c85] : memref<98xf32, #tpu.memory_space<smem>>
      %462 = vector.extract_strided_slice %448 {offsets = [0, 1], sizes = [16, 16], strides = [1, 1]} : vector<16x22xf32> to vector<16x16xf32>
      %463 = vector.broadcast %460 : f32 to vector<16x16xf32>
      %464 = arith.mulf %463, %462 : vector<16x16xf32>
      %465 = arith.addf %459, %464 : vector<16x16xf32>
      %466 = vector.extract_strided_slice %449 {offsets = [0, 1], sizes = [16, 16], strides = [1, 1]} : vector<16x22xf32> to vector<16x16xf32>
      %467 = vector.broadcast %461 : f32 to vector<16x16xf32>
      %468 = arith.mulf %467, %466 : vector<16x16xf32>
      %469 = arith.addf %465, %468 : vector<16x16xf32>
      %c37 = arith.constant 37 : index
      %470 = memref.load %arg2[%c37] : memref<98xf32, #tpu.memory_space<smem>>
      %c86 = arith.constant 86 : index
      %471 = memref.load %arg2[%c86] : memref<98xf32, #tpu.memory_space<smem>>
      %472 = vector.extract_strided_slice %448 {offsets = [0, 2], sizes = [16, 16], strides = [1, 1]} : vector<16x22xf32> to vector<16x16xf32>
      %473 = vector.broadcast %470 : f32 to vector<16x16xf32>
      %474 = arith.mulf %473, %472 : vector<16x16xf32>
      %475 = arith.addf %469, %474 : vector<16x16xf32>
      %476 = vector.extract_strided_slice %449 {offsets = [0, 2], sizes = [16, 16], strides = [1, 1]} : vector<16x22xf32> to vector<16x16xf32>
      %477 = vector.broadcast %471 : f32 to vector<16x16xf32>
      %478 = arith.mulf %477, %476 : vector<16x16xf32>
      %479 = arith.addf %475, %478 : vector<16x16xf32>
      %c38 = arith.constant 38 : index
      %480 = memref.load %arg2[%c38] : memref<98xf32, #tpu.memory_space<smem>>
      %c87 = arith.constant 87 : index
      %481 = memref.load %arg2[%c87] : memref<98xf32, #tpu.memory_space<smem>>
      %482 = vector.extract_strided_slice %448 {offsets = [0, 3], sizes = [16, 16], strides = [1, 1]} : vector<16x22xf32> to vector<16x16xf32>
      %483 = vector.broadcast %480 : f32 to vector<16x16xf32>
      %484 = arith.mulf %483, %482 : vector<16x16xf32>
      %485 = arith.addf %479, %484 : vector<16x16xf32>
      %486 = vector.extract_strided_slice %449 {offsets = [0, 3], sizes = [16, 16], strides = [1, 1]} : vector<16x22xf32> to vector<16x16xf32>
      %487 = vector.broadcast %481 : f32 to vector<16x16xf32>
      %488 = arith.mulf %487, %486 : vector<16x16xf32>
      %489 = arith.addf %485, %488 : vector<16x16xf32>
      %c39 = arith.constant 39 : index
      %490 = memref.load %arg2[%c39] : memref<98xf32, #tpu.memory_space<smem>>
      %c88 = arith.constant 88 : index
      %491 = memref.load %arg2[%c88] : memref<98xf32, #tpu.memory_space<smem>>
      %492 = vector.extract_strided_slice %448 {offsets = [0, 4], sizes = [16, 16], strides = [1, 1]} : vector<16x22xf32> to vector<16x16xf32>
      %493 = vector.broadcast %490 : f32 to vector<16x16xf32>
      %494 = arith.mulf %493, %492 : vector<16x16xf32>
      %495 = arith.addf %489, %494 : vector<16x16xf32>
      %496 = vector.extract_strided_slice %449 {offsets = [0, 4], sizes = [16, 16], strides = [1, 1]} : vector<16x22xf32> to vector<16x16xf32>
      %497 = vector.broadcast %491 : f32 to vector<16x16xf32>
      %498 = arith.mulf %497, %496 : vector<16x16xf32>
      %499 = arith.addf %495, %498 : vector<16x16xf32>
      %c40 = arith.constant 40 : index
      %500 = memref.load %arg2[%c40] : memref<98xf32, #tpu.memory_space<smem>>
      %c89 = arith.constant 89 : index
      %501 = memref.load %arg2[%c89] : memref<98xf32, #tpu.memory_space<smem>>
      %502 = vector.extract_strided_slice %448 {offsets = [0, 5], sizes = [16, 16], strides = [1, 1]} : vector<16x22xf32> to vector<16x16xf32>
      %503 = vector.broadcast %500 : f32 to vector<16x16xf32>
      %504 = arith.mulf %503, %502 : vector<16x16xf32>
      %505 = arith.addf %499, %504 : vector<16x16xf32>
      %506 = vector.extract_strided_slice %449 {offsets = [0, 5], sizes = [16, 16], strides = [1, 1]} : vector<16x22xf32> to vector<16x16xf32>
      %507 = vector.broadcast %501 : f32 to vector<16x16xf32>
      %508 = arith.mulf %507, %506 : vector<16x16xf32>
      %509 = arith.addf %505, %508 : vector<16x16xf32>
      %c41 = arith.constant 41 : index
      %510 = memref.load %arg2[%c41] : memref<98xf32, #tpu.memory_space<smem>>
      %c90 = arith.constant 90 : index
      %511 = memref.load %arg2[%c90] : memref<98xf32, #tpu.memory_space<smem>>
      %512 = vector.extract_strided_slice %448 {offsets = [0, 6], sizes = [16, 16], strides = [1, 1]} : vector<16x22xf32> to vector<16x16xf32>
      %513 = vector.broadcast %510 : f32 to vector<16x16xf32>
      %514 = arith.mulf %513, %512 : vector<16x16xf32>
      %515 = arith.addf %509, %514 : vector<16x16xf32>
      %516 = vector.extract_strided_slice %449 {offsets = [0, 6], sizes = [16, 16], strides = [1, 1]} : vector<16x22xf32> to vector<16x16xf32>
      %517 = vector.broadcast %511 : f32 to vector<16x16xf32>
      %518 = arith.mulf %517, %516 : vector<16x16xf32>
      %519 = arith.addf %515, %518 : vector<16x16xf32>
      %520 = vector.extract_strided_slice %85 {offsets = [6, 0], sizes = [16, 22], strides = [1, 1]} : vector<22x22xf32> to vector<16x22xf32>
      %521 = vector.extract_strided_slice %86 {offsets = [6, 0], sizes = [16, 22], strides = [1, 1]} : vector<22x22xf32> to vector<16x22xf32>
      %c42 = arith.constant 42 : index
      %522 = memref.load %arg2[%c42] : memref<98xf32, #tpu.memory_space<smem>>
      %c91 = arith.constant 91 : index
      %523 = memref.load %arg2[%c91] : memref<98xf32, #tpu.memory_space<smem>>
      %524 = vector.extract_strided_slice %520 {offsets = [0, 0], sizes = [16, 16], strides = [1, 1]} : vector<16x22xf32> to vector<16x16xf32>
      %525 = vector.broadcast %522 : f32 to vector<16x16xf32>
      %526 = arith.mulf %525, %524 : vector<16x16xf32>
      %527 = arith.addf %519, %526 : vector<16x16xf32>
      %528 = vector.extract_strided_slice %521 {offsets = [0, 0], sizes = [16, 16], strides = [1, 1]} : vector<16x22xf32> to vector<16x16xf32>
      %529 = vector.broadcast %523 : f32 to vector<16x16xf32>
      %530 = arith.mulf %529, %528 : vector<16x16xf32>
      %531 = arith.addf %527, %530 : vector<16x16xf32>
      %c43 = arith.constant 43 : index
      %532 = memref.load %arg2[%c43] : memref<98xf32, #tpu.memory_space<smem>>
      %c92 = arith.constant 92 : index
      %533 = memref.load %arg2[%c92] : memref<98xf32, #tpu.memory_space<smem>>
      %534 = vector.extract_strided_slice %520 {offsets = [0, 1], sizes = [16, 16], strides = [1, 1]} : vector<16x22xf32> to vector<16x16xf32>
      %535 = vector.broadcast %532 : f32 to vector<16x16xf32>
      %536 = arith.mulf %535, %534 : vector<16x16xf32>
      %537 = arith.addf %531, %536 : vector<16x16xf32>
      %538 = vector.extract_strided_slice %521 {offsets = [0, 1], sizes = [16, 16], strides = [1, 1]} : vector<16x22xf32> to vector<16x16xf32>
      %539 = vector.broadcast %533 : f32 to vector<16x16xf32>
      %540 = arith.mulf %539, %538 : vector<16x16xf32>
      %541 = arith.addf %537, %540 : vector<16x16xf32>
      %c44 = arith.constant 44 : index
      %542 = memref.load %arg2[%c44] : memref<98xf32, #tpu.memory_space<smem>>
      %c93 = arith.constant 93 : index
      %543 = memref.load %arg2[%c93] : memref<98xf32, #tpu.memory_space<smem>>
      %544 = vector.extract_strided_slice %520 {offsets = [0, 2], sizes = [16, 16], strides = [1, 1]} : vector<16x22xf32> to vector<16x16xf32>
      %545 = vector.broadcast %542 : f32 to vector<16x16xf32>
      %546 = arith.mulf %545, %544 : vector<16x16xf32>
      %547 = arith.addf %541, %546 : vector<16x16xf32>
      %548 = vector.extract_strided_slice %521 {offsets = [0, 2], sizes = [16, 16], strides = [1, 1]} : vector<16x22xf32> to vector<16x16xf32>
      %549 = vector.broadcast %543 : f32 to vector<16x16xf32>
      %550 = arith.mulf %549, %548 : vector<16x16xf32>
      %551 = arith.addf %547, %550 : vector<16x16xf32>
      %c45 = arith.constant 45 : index
      %552 = memref.load %arg2[%c45] : memref<98xf32, #tpu.memory_space<smem>>
      %c94 = arith.constant 94 : index
      %553 = memref.load %arg2[%c94] : memref<98xf32, #tpu.memory_space<smem>>
      %554 = vector.extract_strided_slice %520 {offsets = [0, 3], sizes = [16, 16], strides = [1, 1]} : vector<16x22xf32> to vector<16x16xf32>
      %555 = vector.broadcast %552 : f32 to vector<16x16xf32>
      %556 = arith.mulf %555, %554 : vector<16x16xf32>
      %557 = arith.addf %551, %556 : vector<16x16xf32>
      %558 = vector.extract_strided_slice %521 {offsets = [0, 3], sizes = [16, 16], strides = [1, 1]} : vector<16x22xf32> to vector<16x16xf32>
      %559 = vector.broadcast %553 : f32 to vector<16x16xf32>
      %560 = arith.mulf %559, %558 : vector<16x16xf32>
      %561 = arith.addf %557, %560 : vector<16x16xf32>
      %c46 = arith.constant 46 : index
      %562 = memref.load %arg2[%c46] : memref<98xf32, #tpu.memory_space<smem>>
      %c95 = arith.constant 95 : index
      %563 = memref.load %arg2[%c95] : memref<98xf32, #tpu.memory_space<smem>>
      %564 = vector.extract_strided_slice %520 {offsets = [0, 4], sizes = [16, 16], strides = [1, 1]} : vector<16x22xf32> to vector<16x16xf32>
      %565 = vector.broadcast %562 : f32 to vector<16x16xf32>
      %566 = arith.mulf %565, %564 : vector<16x16xf32>
      %567 = arith.addf %561, %566 : vector<16x16xf32>
      %568 = vector.extract_strided_slice %521 {offsets = [0, 4], sizes = [16, 16], strides = [1, 1]} : vector<16x22xf32> to vector<16x16xf32>
      %569 = vector.broadcast %563 : f32 to vector<16x16xf32>
      %570 = arith.mulf %569, %568 : vector<16x16xf32>
      %571 = arith.addf %567, %570 : vector<16x16xf32>
      %c47 = arith.constant 47 : index
      %572 = memref.load %arg2[%c47] : memref<98xf32, #tpu.memory_space<smem>>
      %c96 = arith.constant 96 : index
      %573 = memref.load %arg2[%c96] : memref<98xf32, #tpu.memory_space<smem>>
      %574 = vector.extract_strided_slice %520 {offsets = [0, 5], sizes = [16, 16], strides = [1, 1]} : vector<16x22xf32> to vector<16x16xf32>
      %575 = vector.broadcast %572 : f32 to vector<16x16xf32>
      %576 = arith.mulf %575, %574 : vector<16x16xf32>
      %577 = arith.addf %571, %576 : vector<16x16xf32>
      %578 = vector.extract_strided_slice %521 {offsets = [0, 5], sizes = [16, 16], strides = [1, 1]} : vector<16x22xf32> to vector<16x16xf32>
      %579 = vector.broadcast %573 : f32 to vector<16x16xf32>
      %580 = arith.mulf %579, %578 : vector<16x16xf32>
      %581 = arith.addf %577, %580 : vector<16x16xf32>
      %c48 = arith.constant 48 : index
      %582 = memref.load %arg2[%c48] : memref<98xf32, #tpu.memory_space<smem>>
      %c97 = arith.constant 97 : index
      %583 = memref.load %arg2[%c97] : memref<98xf32, #tpu.memory_space<smem>>
      %584 = vector.extract_strided_slice %520 {offsets = [0, 6], sizes = [16, 16], strides = [1, 1]} : vector<16x22xf32> to vector<16x16xf32>
      %585 = vector.broadcast %582 : f32 to vector<16x16xf32>
      %586 = arith.mulf %585, %584 : vector<16x16xf32>
      %587 = arith.addf %581, %586 : vector<16x16xf32>
      %588 = vector.extract_strided_slice %521 {offsets = [0, 6], sizes = [16, 16], strides = [1, 1]} : vector<16x22xf32> to vector<16x16xf32>
      %589 = vector.broadcast %583 : f32 to vector<16x16xf32>
      %590 = arith.mulf %589, %588 : vector<16x16xf32>
      %591 = arith.addf %587, %590 : vector<16x16xf32>
      %592 = arith.negf %591 : vector<16x16xf32>
      %593 = math.exp %592 : vector<16x16xf32>
      %cst_88 = arith.constant 1.000000e+00 : f32
      %594 = vector.broadcast %cst_88 : f32 to vector<16x16xf32>
      %595 = arith.addf %594, %593 : vector<16x16xf32>
      %596 = arith.divf %594, %595 : vector<16x16xf32>
      %c0_89 = arith.constant 0 : index
      %c0_90 = arith.constant 0 : index
      %c0_91 = arith.constant 0 : index
      %c0_92 = arith.constant 0 : index
      %597 = vector.load %arg4[%c0_89, %c0_90, %c0_91, %c0_92] : memref<1x1x16x16xf32, #tpu.memory_space<vmem>>, vector<1x1x16x16xf32>
      %598 = vector.shape_cast %597 : vector<1x1x16x16xf32> to vector<16x16xf32>
      %599 = vector.shape_cast %596 : vector<16x16xf32> to vector<1x1x16x16xf32>
      tpu.vector_store %arg4[%c0_89, %c0_90, %c0_91, %c0_92], %599 {strides = array<i32>} : memref<1x1x16x16xf32, #tpu.memory_space<vmem>>, vector<1x1x16x16xf32>,
    } else {
    }
    return
  }
  func.func @transform_0(%arg0: i32, %arg1: i32) -> i32 {
    %c0_i32 = arith.constant 0 : i32
    %c0_i32_0 = arith.constant 0 : i32
    return %c0_i32 : i32
  }
  func.func @transform_1(%arg0: i32, %arg1: i32) -> (i32, i32, i32) {
    %c0_i32 = arith.constant 0 : i32
    %c0_i32_0 = arith.constant 0 : i32
    return %arg0, %arg1, %c0_i32 : i32, i32, i32
  }
  func.func @transform_2(%arg0: i32, %arg1: i32) -> (i32, i32, i32, i32) {
    %c0_i32 = arith.constant 0 : i32
    %c0_i32_0 = arith.constant 0 : i32
    %c0_i32_1 = arith.constant 0 : i32
    %c0_i32_2 = arith.constant 0 : i32
    return %arg0, %c0_i32, %c0_i32_0, %c0_i32_1 : i32, i32, i32, i32
  }
}

</mosaic_0001>

<llo_original>
// kernel: tpu_custom_call.1
$region0: #{tpu_custom_call.1}
  #allocation0 [shape = 'u32[]', space=smem, size = 0x4, offset = 0x4, fixed_abs, tag = 'smem constant byte address 0x4 - core index']
  #allocation1 [shape = 'u32[72,128]{1,0:T(1,128)}', space=vmem, size = 0x9000, scoped, tag = 'internal scratch']
  #allocation2 [shape = 'f32[1,256]{1,0:T(1,128)}', space=vmem, size = 0x400, scoped, tag = 'scratch operand']
  #allocation3 [shape = 'f32[1,256]{1,0:T(1,128)}', space=vmem, size = 0x400, scoped, tag = 'scratch operand']
  #allocation4 [shape = 'f32[22,22]{1,0:T(8,128)}', space=vmem, size = 0x3000, scoped, tag = 'scratch operand']
  #allocation5 [shape = 'f32[22,22]{1,0:T(8,128)}', space=vmem, size = 0x3000, scoped, tag = 'scratch operand']
  %s0 = inlined_call_operand.hbm [shape: f32[98], index: 0, kind: input, shape index: {}]
  %s1 = inlined_call_operand.hbm [shape: f32[2,4,256], index: 1, kind: input, shape index: {}]
  %s2 = inlined_call_operand.hbm [shape: f32[2,1,16,16], index: 2, kind: output, shape index: {}]
  %s3 = sld [smem:[#allocation0]]
  $region61: #{tpu_custom_call.1} parent=0
    _
  %s5 = ssub.s32 1, %s3
  %s6 = scalar_select 0, %s5, %s3
  $region1: #{tpu_custom_call.1} parent=0
    #allocation6 [shape = 'u8[512]{0}', space=smem, size = 0x200, scoped, tag = 'input window, operand 0, single buffered']
    #allocation7 [shape = 's32[2]{0}', space=sflag, size = 0x8, scoped, tag = 'scoped memory for tpu_custom_call.1']
    #allocation8 [shape = 's32[2]{0}', space=sflag, size = 0x8, scoped, tag = 'scoped memory for tpu_custom_call.1']
    #allocation9 [shape = 's32[2]{0}', space=sflag, size = 0x8, scoped, tag = 'scoped memory for tpu_custom_call.1']
    #allocation10 [shape = 'u8[8192]{0}', space=vmem, size = 0x2000, scoped, tag = 'input window, operand 1']
    #allocation11 [shape = 'u8[16384]{0}', space=vmem, size = 0x4000, scoped, tag = 'output window, operand 0']
    %7 = vsyncpa [#allocation9], 0
    %8 = vsyncpa [#allocation7], 0
    %s9 = scalar_lea.sflag [#allocation7], 1
    %10 = vsyncpa %s9, 0
    %11 = vsyncpa [#allocation8], 0
    %s12 = scalar_lea.sflag [#allocation8], 1
    %13 = vsyncpa %s12, 0
    loop: start=0, step=1, limit=4
    $region2: #{tpu_custom_call.1} parent=1 // loop_pre_header
      _
    $region3: #{tpu_custom_call.1} parent=1 // loop_header
      %s15 = sphi 0, %s19
      %p16 = scmp.ge.s32.totalorder %s15, 4
      %s22 = sphi 0, %s34
      %s23 = sphi 0, %s30
      %s24 = sphi 0, %s22
      %s25 = sphi 0, %s23
      %s26 = sphi 0, %s24
      %s27 = sphi 0, %s25
      %s35 = sphi 0, %s35
      %s37 = sphi 0, %s35
      %s38 = sphi 0, %s37
      %s52 = sphi 0, %s38
      %s60 = sphi 0, %s62
      %s63 = sphi 0, %s60
      %s64 = sphi 0, %s63
      %s80 = sphi 0, %s64
      %s86 = sphi 0, %s88
      %s89 = sphi 0, %s86
      %s90 = sphi 0, %s89
      %s106 = sphi 0, %s90
    $region4: #{tpu_custom_call.1} parent=1 // loop_header_branch
      %18 = sbr.rel (%p16) target = $region8
    $region5: #{tpu_custom_call.1} parent=1 // loop_body
      %s20 = ssub.s32 %s15, 1
      %s21 = ssub.s32 %s15, 2
      %s28 = sadd.s32 1, %s23
      %p29 = scmp.ge.s32.totalorder %s28, 1
      %s30 = scalar_select %p29, 0, %s28
      %s31 = sadd.s32 1, %s22
      %s32 = scalar_select %p29, %s31, %s22
      %p33 = scmp.ge.s32.totalorder %s32, 2
      %s34 = scalar_select %p33, 0, %s32
      %s36 = sadd.s32 %s35, 1
      %p39 = scmp.eq.s32.totalorder %s15, 1
      %p40 = scmp.ne.s32.totalorder %s35, %s37
      %p41 = scmp.eq.s32.totalorder %s15, 0
      %p42 = por %p40, %p41
      %p43 = scmp.ne.s32.totalorder %s35, %s37
      %p44 = scmp.eq.s32.totalorder %s20, 1
      %p45 = por %p43, %p44
      %p46 = scmp.ne.s32.totalorder %s37, %s38
      %p47 = scmp.eq.s32.totalorder %s20, 0
      %p48 = por %p46, %p47
      %p49 = scmp.ne.s32.totalorder %s37, %s38
      %p50 = scmp.eq.s32.totalorder %s21, 1
      %p51 = por %p49, %p50
      %p53 = scmp.ne.s32.totalorder %s38, %s52
      %p54 = scmp.eq.s32.totalorder %s21, 0
      %p55 = por %p53, %p54
      %s56 = ssub.s32 %s22, %s34
      %s57 = ssub.s32 %s23, %s30
      %s58 = sor.u32 %s56, %s57
      %p59 = scmp.eq.s32.totalorder %s58, 0
      %s61 = sadd.s32 %s60, 1
      %s62 = scalar_select %p59, %s60, %s61
      %p65 = pneg %p59
      %p66 = scmp.eq.s32.totalorder %s15, 1
      %p67 = por %p65, %p66
      %p68 = scmp.ne.s32.totalorder %s60, %s63
      %p69 = scmp.eq.s32.totalorder %s15, 0
      %p70 = por %p68, %p69
      %p71 = scmp.ne.s32.totalorder %s60, %s63
      %p72 = scmp.eq.s32.totalorder %s20, 1
      %p73 = por %p71, %p72
      %p74 = scmp.ne.s32.totalorder %s63, %s64
      %p75 = scmp.eq.s32.totalorder %s20, 0
      %p76 = por %p74, %p75
      %p77 = scmp.ne.s32.totalorder %s63, %s64
      %p78 = scmp.eq.s32.totalorder %s21, 1
      %p79 = por %p77, %p78
      %p81 = scmp.ne.s32.totalorder %s64, %s80
      %p82 = scmp.eq.s32.totalorder %s21, 0
      %p83 = por %p81, %p82
      %s84 = ssub.s32 %s22, %s34
      %p85 = scmp.eq.s32.totalorder %s84, 0
      %s87 = sadd.s32 %s86, 1
      %s88 = scalar_select %p85, %s86, %s87
      %p91 = pneg %p85
      %p92 = scmp.eq.s32.totalorder %s15, 1
      %p93 = por %p91, %p92
      %p94 = scmp.ne.s32.totalorder %s86, %s89
      %p95 = scmp.eq.s32.totalorder %s15, 0
      %p96 = por %p94, %p95
      %p97 = scmp.ne.s32.totalorder %s86, %s89
      %p98 = scmp.eq.s32.totalorder %s20, 1
      %p99 = por %p97, %p98
      %p100 = scmp.ne.s32.totalorder %s89, %s90
      %p101 = scmp.eq.s32.totalorder %s20, 0
      %p102 = por %p100, %p101
      %p103 = scmp.ne.s32.totalorder %s89, %s90
      %p104 = scmp.eq.s32.totalorder %s21, 1
      %p105 = por %p103, %p104
      %p107 = scmp.ne.s32.totalorder %s90, %s106
      %p108 = scmp.eq.s32.totalorder %s21, 0
      %p109 = por %p107, %p108
      %p110 = scmp.le.s32.totalorder 1, %s15
      %p111 = scmp.lt.s32.totalorder %s15, 3
      %p112 = pnand %p110, %p111
      %p113 = pneg %p112
      // Predicated region
      $region9: #{tpu_custom_call.1} parent=5 // pred_check
        _
      $region10: #{tpu_custom_call.1} parent=5 // pred_check_branch
        %115 = sbr.rel (%p112) target = $region12
      $region11: #{tpu_custom_call.1} parent=5 // pred_region
        %s116 = ssub.s32 %s15, 1
        // Predicated region
        $region13: #{tpu_custom_call.1} parent=11 // pred_check
          %p117 = pneg %p48
        $region14: #{tpu_custom_call.1} parent=11 // pred_check_branch
          %119 = sbr.rel (%p117) target = $region16
        $region15: #{tpu_custom_call.1} parent=11 // pred_region
          %121 = vsyncadd [#allocation9], 0
          %s123 = sshll.u32 %s0, 4
          %s124 = int_to_ptr.hbm [resolvable:$true] %s123
          %126 = dma.hbm_to_smem %s124, 16, [#allocation6], [#allocation9]
        $region16: #{tpu_custom_call.1} parent=11 // pred_fallthru
          _
      $region12: #{tpu_custom_call.1} parent=5 // pred_fallthru
        _
      %p127 = scmp.lt.s32.totalorder %s15, 2
      // Predicated region
      $region17: #{tpu_custom_call.1} parent=5 // pred_check
        %p128 = pneg %p127
      $region18: #{tpu_custom_call.1} parent=5 // pred_check_branch
        %130 = sbr.rel (%p128) target = $region20
      $region19: #{tpu_custom_call.1} parent=5 // pred_region
        // Predicated region
        $region21: #{tpu_custom_call.1} parent=19 // pred_check
          %p131 = pneg %p70
        $region22: #{tpu_custom_call.1} parent=19 // pred_check_branch
          %133 = sbr.rel (%p131) target = $region24
        $region23: #{tpu_custom_call.1} parent=19 // pred_region
          %s134 = sand.u32 %s60, 1
          %s135 = scalar_lea.sflag [#allocation7], %s134
          %s136 = sand.u32 %s60, 1
          %s137 = smul.addr %s136, 8
          %s138 = scalar_lea.vmem [#allocation10], %s137
          %140 = vsyncadd %s135, 0
          %s141 = smul.addr %s23, 2
          %s142 = smul.addr %s22, 2
          %s143 = sadd.s32 %s141, %s142
          %s144 = smul.addr %s143, 4
          %s145 = scalar_lea.hbm %s1, %s144
          %s147 = sshll.u32 %s145, 4
          %s148 = int_to_ptr.hbm [resolvable:$true] %s147
          %s149 = sshll.u32 %s138, 4
          %s150 = int_to_ptr.vmem [resolvable:$true] %s149
          %152 = dma.hbm_to_vmem [thread:$0]  %s148, 128, %s150, %s135
        $region24: #{tpu_custom_call.1} parent=19 // pred_fallthru
          _
      $region20: #{tpu_custom_call.1} parent=5 // pred_fallthru
        _
      %p153 = scmp.le.s32.totalorder 1, %s15
      %p154 = scmp.lt.s32.totalorder %s15, 3
      %p155 = pnand %p153, %p154
      %p156 = pneg %p155
      // Predicated region
      $region25: #{tpu_custom_call.1} parent=5 // pred_check
        _
      $region26: #{tpu_custom_call.1} parent=5 // pred_check_branch
        %158 = sbr.rel (%p155) target = $region28
      $region27: #{tpu_custom_call.1} parent=5 // pred_region
        %s159 = ssub.s32 %s15, 1
        // Predicated region
        $region29: #{tpu_custom_call.1} parent=27 // pred_check
          %p160 = pneg %p48
        $region30: #{tpu_custom_call.1} parent=27 // pred_check_branch
          %162 = sbr.rel (%p160) target = $region32
        $region31: #{tpu_custom_call.1} parent=27 // pred_region
          %164 = dma.done [#allocation9], 16
        $region32: #{tpu_custom_call.1} parent=27 // pred_fallthru
          _
        %s165 = sand.u32 %s63, 1
        %s166 = scalar_lea.sflag [#allocation7], %s165
        %s167 = sand.u32 %s63, 1
        %s168 = smul.addr %s167, 8
        %s169 = scalar_lea.vmem [#allocation10], %s168
        // Predicated region
        $region33: #{tpu_custom_call.1} parent=27 // pred_check
          %p170 = pneg %p76
        $region34: #{tpu_custom_call.1} parent=27 // pred_check_branch
          %172 = sbr.rel (%p170) target = $region36
        $region35: #{tpu_custom_call.1} parent=27 // pred_region
          %174 = dma.done %s166, 128
        $region36: #{tpu_custom_call.1} parent=27 // pred_fallthru
          _
        %175 = sfence
        %p176 = pneg %p48
        %p177 = pneg %p45
        %s178 = sand.u32 %s63, 1
        %s179 = scalar_lea.sflag [#allocation7], %s178
        %s180 = sand.u32 %s63, 1
        %s181 = smul.addr %s180, 8
        %s182 = scalar_lea.vmem [#allocation10], %s181
        %p183 = pneg %p76
        %p184 = pneg %p73
        %p185 = pneg %p102
        %p186 = pneg %p99
        %s187 = sand.u32 %s89, 1
        %s188 = scalar_lea.sflag [#allocation8], %s187
        %s189 = sand.u32 %s89, 1
        %s190 = smul.addr %s189, 16
        %s191 = scalar_lea.vmem [#allocation11], %s190
        %v192 = vld [vmem:[%s169] sm:$0xff]
        %194 = vst [vmem:[#allocation1] ss:$2 sm:$0xff] %v192
        %v195 = vld.sshfl [vmem:[#allocation1] sm:$0xff pattern:$0x75316420]
        %v196 = vld.sshfl [vmem:[#allocation1 + $0x8] sm:$0xff pattern:$0x75316420]
        %vm199 = vcmask 1043456
        %v200 = vsel %vm199, %v195, 0.0
        %v201 = vrot.slane %v200, 4
        %v202 = vadd.f32 %v200, %v201
        %v203 = vrot.slane %v202, 2
        %v204 = vadd.f32 %v202, %v203
        %v205 = vrot.slane %v204, 1
        %v206 = vadd.f32 %v204, %v205
        %v207 = vsel %vm199, %v196, 0.0
        %v208 = vrot.slane %v207, 4
        %v209 = vadd.f32 %v207, %v208
        %v210 = vrot.slane %v209, 2
        %v211 = vadd.f32 %v209, %v210
        %v212 = vrot.slane %v211, 1
        %v213 = vadd.f32 %v211, %v212
        %214 = vst [vmem:[#allocation1] ss:$2 sm:$0xff] %v192
        %v215 = vld.sshfl [vmem:[#allocation1] sm:$0xff pattern:$0x75316420]
        %v216 = vld.sshfl [vmem:[#allocation1 + $0x8] sm:$0xff pattern:$0x75316420]
        %v219 = vsel %vm199, %v215, -inf
        %v220 = vrot.slane %v219, 4
        %v221 = vmax.f32 %v219, %v220
        %v222 = vrot.slane %v221, 2
        %v223 = vmax.f32 %v221, %v222
        %v224 = vrot.slane %v223, 1
        %v225 = vmax.f32 %v223, %v224
        %v226 = vsel %vm199, %v216, -inf
        %v227 = vrot.slane %v226, 4
        %v228 = vmax.f32 %v226, %v227
        %v229 = vrot.slane %v228, 2
        %v230 = vmax.f32 %v228, %v229
        %v231 = vrot.slane %v230, 1
        %v232 = vmax.f32 %v230, %v231
        %p233 = scmp.eq.s32.totalorder %s25, 0
        // Predicated region
        $region37: #{tpu_custom_call.1} parent=27 // pred_check
          %p234 = pneg %p233
        $region38: #{tpu_custom_call.1} parent=27 // pred_check_branch
          %236 = sbr.rel (%p234) target = $region40
        $region39: #{tpu_custom_call.1} parent=27 // pred_region
          %v239 = vrot.slane %v213, 7
          %vm240 = vcmask 1040384
          %v241 = vsel %vm240, %v206, %v239
          %v243 = vlaneseq
          %vm244 = vcmp.ge.s32.totalorder %v243, 0
          %vm245 = vcmp.lt.s32.totalorder %v243, 256
          %vm246 = vmand %vm244, %vm245
          %247 = vst.msk [vmem:[#allocation2] sm:$0x3] %vm246, %v241
          %v250 = vrot.slane %v232, 7
          %v251 = vsel %vm240, %v225, %v250
          %253 = vst.msk [vmem:[#allocation3] sm:$0x3] %vm246, %v251
        $region40: #{tpu_custom_call.1} parent=27 // pred_fallthru
          _
        %p254 = scmp.gt.s32.totalorder %s25, 0
        // Predicated region
        $region41: #{tpu_custom_call.1} parent=27 // pred_check
          %p255 = pneg %p254
        $region42: #{tpu_custom_call.1} parent=27 // pred_check_branch
          %257 = sbr.rel (%p255) target = $region44
        $region43: #{tpu_custom_call.1} parent=27 // pred_region
          %v258 = vld [vmem:[#allocation2] sm:$0x3]
          %v261 = vrot.slane %v213, 7
          %vm262 = vcmask 1040384
          %v263 = vsel %vm262, %v206, %v261
          %v265 = vadd.f32 %v258, %v263
          %v266 = vlaneseq
          %vm267 = vcmp.ge.s32.totalorder %v266, 0
          %vm268 = vcmp.lt.s32.totalorder %v266, 256
          %vm269 = vmand %vm267, %vm268
          %270 = vst.msk [vmem:[#allocation2] sm:$0x3] %vm269, %v265
          %v271 = vld [vmem:[#allocation3] sm:$0x3]
          %v274 = vrot.slane %v232, 7
          %v275 = vsel %vm262, %v225, %v274
          %v277 = vmax.f32 %v271, %v275
          %278 = vst.msk [vmem:[#allocation3] sm:$0x3] %vm269, %v277
        $region44: #{tpu_custom_call.1} parent=27 // pred_fallthru
          _
        // Predicated region
        $region45: #{tpu_custom_call.1} parent=27 // pred_check
          %p279 = pneg %p233
        $region46: #{tpu_custom_call.1} parent=27 // pred_check_branch
          %281 = sbr.rel (%p279) target = $region48
        $region47: #{tpu_custom_call.1} parent=27 // pred_region
          %vm282 = vcmask 179200
          %283 = vst.msk [vmem:[#allocation4] sm:$0xff] %vm282, 0.0
          %284 = vst.msk [vmem:[#allocation4 + $0x8] sm:$0xff] %vm282, 0.0
          %vm285 = vcmask 177152
          %286 = vst.msk [vmem:[#allocation4 + $0x10] sm:$0x3f] %vm285, 0.0
          %287 = vst.msk [vmem:[#allocation5] sm:$0xff] %vm282, 0.0
          %288 = vst.msk [vmem:[#allocation5 + $0x8] sm:$0xff] %vm282, 0.0
          %289 = vst.msk [vmem:[#allocation5 + $0x10] sm:$0x3f] %vm285, 0.0
          %v290 = vld [vmem:[#allocation2] sm:$0x3]
          %v291 = vld [vmem:[#allocation3] sm:$0x3]
          %v293 = vperm.slane %v290, 0
          %294 = vrot.lane.b32.xlu0 %v293, 3
          %v295 = vpop.permute.xlu0 %294
          %vm297 = vcmask 147480
          %298 = vst.msk [vmem:[#allocation4 + $0x3] sm:$0x1] %vm297, %v295
          %v300 = vperm.slane %v291, 0
          %301 = vrot.lane.b32.xlu0 %v300, 3
          %v302 = vpop.permute.xlu0 %301
          %304 = vst.msk [vmem:[#allocation5 + $0x3] sm:$0x1] %vm297, %v302
          %305 = vrot.lane.b32.xlu0 %v293, 115
          %v306 = vpop.permute.xlu0 %305
          %308 = vst.msk [vmem:[#allocation4 + $0x4] sm:$0x1] %vm297, %v306
          %309 = vrot.lane.b32.xlu0 %v300, 115
          %v310 = vpop.permute.xlu0 %309
          %312 = vst.msk [vmem:[#allocation5 + $0x4] sm:$0x1] %vm297, %v310
          %313 = vrot.lane.b32.xlu0 %v293, 99
          %v314 = vpop.permute.xlu0 %313
          %316 = vst.msk [vmem:[#allocation4 + $0x5] sm:$0x1] %vm297, %v314
          %317 = vrot.lane.b32.xlu0 %v300, 99
          %v318 = vpop.permute.xlu0 %317
          %320 = vst.msk [vmem:[#allocation5 + $0x5] sm:$0x1] %vm297, %v318
          %321 = vrot.lane.b32.xlu0 %v293, 83
          %v322 = vpop.permute.xlu0 %321
          %324 = vst.msk [vmem:[#allocation4 + $0x6] sm:$0x1] %vm297, %v322
          %325 = vrot.lane.b32.xlu0 %v300, 83
          %v326 = vpop.permute.xlu0 %325
          %328 = vst.msk [vmem:[#allocation5 + $0x6] sm:$0x1] %vm297, %v326
          %329 = vrot.lane.b32.xlu0 %v293, 67
          %v330 = vpop.permute.xlu0 %329
          %332 = vst.msk [vmem:[#allocation4 + $0x7] sm:$0x1] %vm297, %v330
          %333 = vrot.lane.b32.xlu0 %v300, 67
          %v334 = vpop.permute.xlu0 %333
          %336 = vst.msk [vmem:[#allocation5 + $0x7] sm:$0x1] %vm297, %v334
          %337 = vrot.lane.b32.xlu0 %v293, 51
          %v338 = vpop.permute.xlu0 %337
          %340 = vst.msk [vmem:[#allocation4 + $0x8] sm:$0x1] %vm297, %v338
          %341 = vrot.lane.b32.xlu0 %v300, 51
          %v342 = vpop.permute.xlu0 %341
          %344 = vst.msk [vmem:[#allocation5 + $0x8] sm:$0x1] %vm297, %v342
          %345 = vrot.lane.b32.xlu0 %v293, 35
          %v346 = vpop.permute.xlu0 %345
          %348 = vst.msk [vmem:[#allocation4 + $0x9] sm:$0x1] %vm297, %v346
          %349 = vrot.lane.b32.xlu0 %v300, 35
          %v350 = vpop.permute.xlu0 %349
          %352 = vst.msk [vmem:[#allocation5 + $0x9] sm:$0x1] %vm297, %v350
          %353 = vrot.lane.b32.xlu0 %v293, 19
          %v354 = vpop.permute.xlu0 %353
          %356 = vst.msk [vmem:[#allocation4 + $0xa] sm:$0x1] %vm297, %v354
          %357 = vrot.lane.b32.xlu0 %v300, 19
          %v358 = vpop.permute.xlu0 %357
          %360 = vst.msk [vmem:[#allocation5 + $0xa] sm:$0x1] %vm297, %v358
          %v361 = vperm.slane %v290, 1
          %362 = vrot.lane.b32.xlu0 %v361, 3
          %v363 = vpop.permute.xlu0 %362
          %365 = vst.msk [vmem:[#allocation4 + $0xb] sm:$0x1] %vm297, %v363
          %v366 = vperm.slane %v291, 1
          %367 = vrot.lane.b32.xlu0 %v366, 3
          %v368 = vpop.permute.xlu0 %367
          %370 = vst.msk [vmem:[#allocation5 + $0xb] sm:$0x1] %vm297, %v368
          %371 = vrot.lane.b32.xlu0 %v361, 115
          %v372 = vpop.permute.xlu0 %371
          %374 = vst.msk [vmem:[#allocation4 + $0xc] sm:$0x1] %vm297, %v372
          %375 = vrot.lane.b32.xlu0 %v366, 115
          %v376 = vpop.permute.xlu0 %375
          %378 = vst.msk [vmem:[#allocation5 + $0xc] sm:$0x1] %vm297, %v376
          %379 = vrot.lane.b32.xlu0 %v361, 99
          %v380 = vpop.permute.xlu0 %379
          %382 = vst.msk [vmem:[#allocation4 + $0xd] sm:$0x1] %vm297, %v380
          %383 = vrot.lane.b32.xlu0 %v366, 99
          %v384 = vpop.permute.xlu0 %383
          %386 = vst.msk [vmem:[#allocation5 + $0xd] sm:$0x1] %vm297, %v384
          %387 = vrot.lane.b32.xlu0 %v361, 83
          %v388 = vpop.permute.xlu0 %387
          %390 = vst.msk [vmem:[#allocation4 + $0xe] sm:$0x1] %vm297, %v388
          %391 = vrot.lane.b32.xlu0 %v366, 83
          %v392 = vpop.permute.xlu0 %391
          %394 = vst.msk [vmem:[#allocation5 + $0xe] sm:$0x1] %vm297, %v392
          %395 = vrot.lane.b32.xlu0 %v361, 67
          %v396 = vpop.permute.xlu0 %395
          %398 = vst.msk [vmem:[#allocation4 + $0xf] sm:$0x1] %vm297, %v396
          %399 = vrot.lane.b32.xlu0 %v366, 67
          %v400 = vpop.permute.xlu0 %399
          %402 = vst.msk [vmem:[#allocation5 + $0xf] sm:$0x1] %vm297, %v400
          %403 = vrot.lane.b32.xlu0 %v361, 51
          %v404 = vpop.permute.xlu0 %403
          %406 = vst.msk [vmem:[#allocation4 + $0x10] sm:$0x1] %vm297, %v404
          %407 = vrot.lane.b32.xlu0 %v366, 51
          %v408 = vpop.permute.xlu0 %407
          %410 = vst.msk [vmem:[#allocation5 + $0x10] sm:$0x1] %vm297, %v408
          %411 = vrot.lane.b32.xlu0 %v361, 35
          %v412 = vpop.permute.xlu0 %411
          %414 = vst.msk [vmem:[#allocation4 + $0x11] sm:$0x1] %vm297, %v412
          %415 = vrot.lane.b32.xlu0 %v366, 35
          %v416 = vpop.permute.xlu0 %415
          %418 = vst.msk [vmem:[#allocation5 + $0x11] sm:$0x1] %vm297, %v416
          %419 = vrot.lane.b32.xlu0 %v361, 19
          %v420 = vpop.permute.xlu0 %419
          %422 = vst.msk [vmem:[#allocation4 + $0x12] sm:$0x1] %vm297, %v420
          %423 = vrot.lane.b32.xlu0 %v366, 19
          %v424 = vpop.permute.xlu0 %423
          %426 = vst.msk [vmem:[#allocation5 + $0x12] sm:$0x1] %vm297, %v424
          %v427 = vld [vmem:[#allocation4] sm:$0xff]
          %v428 = vld [vmem:[#allocation4 + $0x8] sm:$0xff]
          %v429 = vld [vmem:[#allocation4 + $0x10] sm:$0x3f]
          %v430 = vld [vmem:[#allocation5] sm:$0xff]
          %v431 = vld [vmem:[#allocation5 + $0x8] sm:$0xff]
          %v432 = vld [vmem:[#allocation5 + $0x10] sm:$0x3f]
          %s433 = sld [smem:[#allocation6]]
          %s434 = sld [smem:[#allocation6 + $0x31]]
          %v435 = vstv %s433
          %v436 = vmul.f32 %v435, %v427
          %v437 = vmul.f32 %v435, %v428
          %v438 = vadd.f32 %v436, 0.0
          %v439 = vadd.f32 %v437, 0.0
          %v440 = vstv %s434
          %v441 = vmul.f32 %v440, %v430
          %v442 = vmul.f32 %v440, %v431
          %v443 = vadd.f32 %v438, %v441
          %v444 = vadd.f32 %v439, %v442
          %s445 = sld [smem:[#allocation6 + $0x1]]
          %s446 = sld [smem:[#allocation6 + $0x32]]
          %v447 = vstv %s445
          %v448 = vmul.f32 %v447, %v427
          %v449 = vmul.f32 %v447, %v428
          %452 = vrot.lane.b32.xlu0 %v448, 127
          %v453 = vpop.permute.xlu0 %452
          %454 = vrot.lane.b32.xlu0 %v449, 127
          %v455 = vpop.permute.xlu0 %454
          %v458 = vadd.f32 %v443, %v453
          %v459 = vadd.f32 %v444, %v455
          %v460 = vstv %s446
          %v461 = vmul.f32 %v460, %v430
          %v462 = vmul.f32 %v460, %v431
          %465 = vrot.lane.b32.xlu0 %v461, 127
          %v466 = vpop.permute.xlu0 %465
          %467 = vrot.lane.b32.xlu0 %v462, 127
          %v468 = vpop.permute.xlu0 %467
          %v471 = vadd.f32 %v458, %v466
          %v472 = vadd.f32 %v459, %v468
          %s473 = sld [smem:[#allocation6 + $0x2]]
          %s474 = sld [smem:[#allocation6 + $0x33]]
          %v475 = vstv %s473
          %v476 = vmul.f32 %v475, %v427
          %v477 = vmul.f32 %v475, %v428
          %480 = vrot.lane.b32.xlu0 %v476, 126
          %v481 = vpop.permute.xlu0 %480
          %482 = vrot.lane.b32.xlu0 %v477, 126
          %v483 = vpop.permute.xlu0 %482
          %v486 = vadd.f32 %v471, %v481
          %v487 = vadd.f32 %v472, %v483
          %v488 = vstv %s474
          %v489 = vmul.f32 %v488, %v430
          %v490 = vmul.f32 %v488, %v431
          %493 = vrot.lane.b32.xlu0 %v489, 126
          %v494 = vpop.permute.xlu0 %493
          %495 = vrot.lane.b32.xlu0 %v490, 126
          %v496 = vpop.permute.xlu0 %495
          %v499 = vadd.f32 %v486, %v494
          %v500 = vadd.f32 %v487, %v496
          %s501 = sld [smem:[#allocation6 + $0x3]]
          %s502 = sld [smem:[#allocation6 + $0x34]]
          %v503 = vstv %s501
          %v504 = vmul.f32 %v503, %v427
          %v505 = vmul.f32 %v503, %v428
          %508 = vrot.lane.b32.xlu0 %v504, 125
          %v509 = vpop.permute.xlu0 %508
          %510 = vrot.lane.b32.xlu0 %v505, 125
          %v511 = vpop.permute.xlu0 %510
          %v514 = vadd.f32 %v499, %v509
          %v515 = vadd.f32 %v500, %v511
          %v516 = vstv %s502
          %v517 = vmul.f32 %v516, %v430
          %v518 = vmul.f32 %v516, %v431
          %521 = vrot.lane.b32.xlu0 %v517, 125
          %v522 = vpop.permute.xlu0 %521
          %523 = vrot.lane.b32.xlu0 %v518, 125
          %v524 = vpop.permute.xlu0 %523
          %v527 = vadd.f32 %v514, %v522
          %v528 = vadd.f32 %v515, %v524
          %s529 = sld [smem:[#allocation6 + $0x4]]
          %s530 = sld [smem:[#allocation6 + $0x35]]
          %v531 = vstv %s529
          %v532 = vmul.f32 %v531, %v427
          %v533 = vmul.f32 %v531, %v428
          %536 = vrot.lane.b32.xlu0 %v532, 124
          %v537 = vpop.permute.xlu0 %536
          %538 = vrot.lane.b32.xlu0 %v533, 124
          %v539 = vpop.permute.xlu0 %538
          %v542 = vadd.f32 %v527, %v537
          %v543 = vadd.f32 %v528, %v539
          %v544 = vstv %s530
          %v545 = vmul.f32 %v544, %v430
          %v546 = vmul.f32 %v544, %v431
          %549 = vrot.lane.b32.xlu0 %v545, 124
          %v550 = vpop.permute.xlu0 %549
          %551 = vrot.lane.b32.xlu0 %v546, 124
          %v552 = vpop.permute.xlu0 %551
          %v555 = vadd.f32 %v542, %v550
          %v556 = vadd.f32 %v543, %v552
          %s557 = sld [smem:[#allocation6 + $0x5]]
          %s558 = sld [smem:[#allocation6 + $0x36]]
          %v559 = vstv %s557
          %v560 = vmul.f32 %v559, %v427
          %v561 = vmul.f32 %v559, %v428
          %564 = vrot.lane.b32.xlu0 %v560, 123
          %v565 = vpop.permute.xlu0 %564
          %566 = vrot.lane.b32.xlu0 %v561, 123
          %v567 = vpop.permute.xlu0 %566
          %v570 = vadd.f32 %v555, %v565
          %v571 = vadd.f32 %v556, %v567
          %v572 = vstv %s558
          %v573 = vmul.f32 %v572, %v430
          %v574 = vmul.f32 %v572, %v431
          %577 = vrot.lane.b32.xlu0 %v573, 123
          %v578 = vpop.permute.xlu0 %577
          %579 = vrot.lane.b32.xlu0 %v574, 123
          %v580 = vpop.permute.xlu0 %579
          %v583 = vadd.f32 %v570, %v578
          %v584 = vadd.f32 %v571, %v580
          %s585 = sld [smem:[#allocation6 + $0x6]]
          %s586 = sld [smem:[#allocation6 + $0x37]]
          %v587 = vstv %s585
          %v588 = vmul.f32 %v587, %v427
          %v589 = vmul.f32 %v587, %v428
          %592 = vrot.lane.b32.xlu0 %v588, 122
          %v593 = vpop.permute.xlu0 %592
          %594 = vrot.lane.b32.xlu0 %v589, 122
          %v595 = vpop.permute.xlu0 %594
          %v598 = vadd.f32 %v583, %v593
          %v599 = vadd.f32 %v584, %v595
          %v600 = vstv %s586
          %v601 = vmul.f32 %v600, %v430
          %v602 = vmul.f32 %v600, %v431
          %605 = vrot.lane.b32.xlu0 %v601, 122
          %v606 = vpop.permute.xlu0 %605
          %607 = vrot.lane.b32.xlu0 %v602, 122
          %v608 = vpop.permute.xlu0 %607
          %v611 = vadd.f32 %v598, %v606
          %v612 = vadd.f32 %v599, %v608
          %s613 = sld [smem:[#allocation6 + $0x7]]
          %s614 = sld [smem:[#allocation6 + $0x38]]
          %v615 = vstv %s613
          %v616 = vmul.f32 %v615, %v427
          %v617 = vmul.f32 %v615, %v428
          %v618 = vmul.f32 %v615, %v429
          %vm622 = vcmask 1046528
          %v623 = vrot.slane %v616, 1
          %v624 = vrot.slane %v617, 1
          %v625 = vsel %vm622, %v623, %v624
          %v626 = vrot.slane %v618, 1
          %v627 = vsel %vm622, %v624, %v626
          %v630 = vadd.f32 %v611, %v625
          %v631 = vadd.f32 %v612, %v627
          %v632 = vstv %s614
          %v633 = vmul.f32 %v632, %v430
          %v634 = vmul.f32 %v632, %v431
          %v635 = vmul.f32 %v632, %v432
          %v639 = vrot.slane %v633, 1
          %v640 = vrot.slane %v634, 1
          %v641 = vsel %vm622, %v639, %v640
          %v642 = vrot.slane %v635, 1
          %v643 = vsel %vm622, %v640, %v642
          %v646 = vadd.f32 %v630, %v641
          %v647 = vadd.f32 %v631, %v643
          %s648 = sld [smem:[#allocation6 + $0x8]]
          %s649 = sld [smem:[#allocation6 + $0x39]]
          %v650 = vstv %s648
          %v651 = vmul.f32 %v650, %v427
          %v652 = vmul.f32 %v650, %v428
          %v653 = vmul.f32 %v650, %v429
          %v657 = vrot.slane %v651, 1
          %v658 = vrot.slane %v652, 1
          %v659 = vsel %vm622, %v657, %v658
          %v660 = vrot.slane %v653, 1
          %v661 = vsel %vm622, %v658, %v660
          %662 = vrot.lane.b32.xlu0 %v659, 127
          %v663 = vpop.permute.xlu0 %662
          %664 = vrot.lane.b32.xlu0 %v661, 127
          %v665 = vpop.permute.xlu0 %664
          %v668 = vadd.f32 %v646, %v663
          %v669 = vadd.f32 %v647, %v665
          %v670 = vstv %s649
          %v671 = vmul.f32 %v670, %v430
          %v672 = vmul.f32 %v670, %v431
          %v673 = vmul.f32 %v670, %v432
          %v677 = vrot.slane %v671, 1
          %v678 = vrot.slane %v672, 1
          %v679 = vsel %vm622, %v677, %v678
          %v680 = vrot.slane %v673, 1
          %v681 = vsel %vm622, %v678, %v680
          %682 = vrot.lane.b32.xlu0 %v679, 127
          %v683 = vpop.permute.xlu0 %682
          %684 = vrot.lane.b32.xlu0 %v681, 127
          %v685 = vpop.permute.xlu0 %684
          %v688 = vadd.f32 %v668, %v683
          %v689 = vadd.f32 %v669, %v685
          %s690 = sld [smem:[#allocation6 + $0x9]]
          %s691 = sld [smem:[#allocation6 + $0x3a]]
          %v692 = vstv %s690
          %v693 = vmul.f32 %v692, %v427
          %v694 = vmul.f32 %v692, %v428
          %v695 = vmul.f32 %v692, %v429
          %v699 = vrot.slane %v693, 1
          %v700 = vrot.slane %v694, 1
          %v701 = vsel %vm622, %v699, %v700
          %v702 = vrot.slane %v695, 1
          %v703 = vsel %vm622, %v700, %v702
          %704 = vrot.lane.b32.xlu0 %v701, 126
          %v705 = vpop.permute.xlu0 %704
          %706 = vrot.lane.b32.xlu0 %v703, 126
          %v707 = vpop.permute.xlu0 %706
          %v710 = vadd.f32 %v688, %v705
          %v711 = vadd.f32 %v689, %v707
          %v712 = vstv %s691
          %v713 = vmul.f32 %v712, %v430
          %v714 = vmul.f32 %v712, %v431
          %v715 = vmul.f32 %v712, %v432
          %v719 = vrot.slane %v713, 1
          %v720 = vrot.slane %v714, 1
          %v721 = vsel %vm622, %v719, %v720
          %v722 = vrot.slane %v715, 1
          %v723 = vsel %vm622, %v720, %v722
          %724 = vrot.lane.b32.xlu0 %v721, 126
          %v725 = vpop.permute.xlu0 %724
          %726 = vrot.lane.b32.xlu0 %v723, 126
          %v727 = vpop.permute.xlu0 %726
          %v730 = vadd.f32 %v710, %v725
          %v731 = vadd.f32 %v711, %v727
          %s732 = sld [smem:[#allocation6 + $0xa]]
          %s733 = sld [smem:[#allocation6 + $0x3b]]
          %v734 = vstv %s732
          %v735 = vmul.f32 %v734, %v427
          %v736 = vmul.f32 %v734, %v428
          %v737 = vmul.f32 %v734, %v429
          %v741 = vrot.slane %v735, 1
          %v742 = vrot.slane %v736, 1
          %v743 = vsel %vm622, %v741, %v742
          %v744 = vrot.slane %v737, 1
          %v745 = vsel %vm622, %v742, %v744
          %746 = vrot.lane.b32.xlu0 %v743, 125
          %v747 = vpop.permute.xlu0 %746
          %748 = vrot.lane.b32.xlu0 %v745, 125
          %v749 = vpop.permute.xlu0 %748
          %v752 = vadd.f32 %v730, %v747
          %v753 = vadd.f32 %v731, %v749
          %v754 = vstv %s733
          %v755 = vmul.f32 %v754, %v430
          %v756 = vmul.f32 %v754, %v431
          %v757 = vmul.f32 %v754, %v432
          %v761 = vrot.slane %v755, 1
          %v762 = vrot.slane %v756, 1
          %v763 = vsel %vm622, %v761, %v762
          %v764 = vrot.slane %v757, 1
          %v765 = vsel %vm622, %v762, %v764
          %766 = vrot.lane.b32.xlu0 %v763, 125
          %v767 = vpop.permute.xlu0 %766
          %768 = vrot.lane.b32.xlu0 %v765, 125
          %v769 = vpop.permute.xlu0 %768
          %v772 = vadd.f32 %v752, %v767
          %v773 = vadd.f32 %v753, %v769
          %s774 = sld [smem:[#allocation6 + $0xb]]
          %s775 = sld [smem:[#allocation6 + $0x3c]]
          %v776 = vstv %s774
          %v777 = vmul.f32 %v776, %v427
          %v778 = vmul.f32 %v776, %v428
          %v779 = vmul.f32 %v776, %v429
          %v783 = vrot.slane %v777, 1
          %v784 = vrot.slane %v778, 1
          %v785 = vsel %vm622, %v783, %v784
          %v786 = vrot.slane %v779, 1
          %v787 = vsel %vm622, %v784, %v786
          %788 = vrot.lane.b32.xlu0 %v785, 124
          %v789 = vpop.permute.xlu0 %788
          %790 = vrot.lane.b32.xlu0 %v787, 124
          %v791 = vpop.permute.xlu0 %790
          %v794 = vadd.f32 %v772, %v789
          %v795 = vadd.f32 %v773, %v791
          %v796 = vstv %s775
          %v797 = vmul.f32 %v796, %v430
          %v798 = vmul.f32 %v796, %v431
          %v799 = vmul.f32 %v796, %v432
          %v803 = vrot.slane %v797, 1
          %v804 = vrot.slane %v798, 1
          %v805 = vsel %vm622, %v803, %v804
          %v806 = vrot.slane %v799, 1
          %v807 = vsel %vm622, %v804, %v806
          %808 = vrot.lane.b32.xlu0 %v805, 124
          %v809 = vpop.permute.xlu0 %808
          %810 = vrot.lane.b32.xlu0 %v807, 124
          %v811 = vpop.permute.xlu0 %810
          %v814 = vadd.f32 %v794, %v809
          %v815 = vadd.f32 %v795, %v811
          %s816 = sld [smem:[#allocation6 + $0xc]]
          %s817 = sld [smem:[#allocation6 + $0x3d]]
          %v818 = vstv %s816
          %v819 = vmul.f32 %v818, %v427
          %v820 = vmul.f32 %v818, %v428
          %v821 = vmul.f32 %v818, %v429
          %v825 = vrot.slane %v819, 1
          %v826 = vrot.slane %v820, 1
          %v827 = vsel %vm622, %v825, %v826
          %v828 = vrot.slane %v821, 1
          %v829 = vsel %vm622, %v826, %v828
          %830 = vrot.lane.b32.xlu0 %v827, 123
          %v831 = vpop.permute.xlu0 %830
          %832 = vrot.lane.b32.xlu0 %v829, 123
          %v833 = vpop.permute.xlu0 %832
          %v836 = vadd.f32 %v814, %v831
          %v837 = vadd.f32 %v815, %v833
          %v838 = vstv %s817
          %v839 = vmul.f32 %v838, %v430
          %v840 = vmul.f32 %v838, %v431
          %v841 = vmul.f32 %v838, %v432
          %v845 = vrot.slane %v839, 1
          %v846 = vrot.slane %v840, 1
          %v847 = vsel %vm622, %v845, %v846
          %v848 = vrot.slane %v841, 1
          %v849 = vsel %vm622, %v846, %v848
          %850 = vrot.lane.b32.xlu0 %v847, 123
          %v851 = vpop.permute.xlu0 %850
          %852 = vrot.lane.b32.xlu0 %v849, 123
          %v853 = vpop.permute.xlu0 %852
          %v856 = vadd.f32 %v836, %v851
          %v857 = vadd.f32 %v837, %v853
          %s858 = sld [smem:[#allocation6 + $0xd]]
          %s859 = sld [smem:[#allocation6 + $0x3e]]
          %v860 = vstv %s858
          %v861 = vmul.f32 %v860, %v427
          %v862 = vmul.f32 %v860, %v428
          %v863 = vmul.f32 %v860, %v429
          %v867 = vrot.slane %v861, 1
          %v868 = vrot.slane %v862, 1
          %v869 = vsel %vm622, %v867, %v868
          %v870 = vrot.slane %v863, 1
          %v871 = vsel %vm622, %v868, %v870
          %872 = vrot.lane.b32.xlu0 %v869, 122
          %v873 = vpop.permute.xlu0 %872
          %874 = vrot.lane.b32.xlu0 %v871, 122
          %v875 = vpop.permute.xlu0 %874
          %v878 = vadd.f32 %v856, %v873
          %v879 = vadd.f32 %v857, %v875
          %v880 = vstv %s859
          %v881 = vmul.f32 %v880, %v430
          %v882 = vmul.f32 %v880, %v431
          %v883 = vmul.f32 %v880, %v432
          %v887 = vrot.slane %v881, 1
          %v888 = vrot.slane %v882, 1
          %v889 = vsel %vm622, %v887, %v888
          %v890 = vrot.slane %v883, 1
          %v891 = vsel %vm622, %v888, %v890
          %892 = vrot.lane.b32.xlu0 %v889, 122
          %v893 = vpop.permute.xlu0 %892
          %894 = vrot.lane.b32.xlu0 %v891, 122
          %v895 = vpop.permute.xlu0 %894
          %v898 = vadd.f32 %v878, %v893
          %v899 = vadd.f32 %v879, %v895
          %s900 = sld [smem:[#allocation6 + $0xe]]
          %s901 = sld [smem:[#allocation6 + $0x3f]]
          %v902 = vstv %s900
          %v903 = vmul.f32 %v902, %v427
          %v904 = vmul.f32 %v902, %v428
          %v905 = vmul.f32 %v902, %v429
          %vm909 = vcmask 1045504
          %v910 = vrot.slane %v903, 2
          %v911 = vrot.slane %v904, 2
          %v912 = vsel %vm909, %v910, %v911
          %v913 = vrot.slane %v905, 2
          %v914 = vsel %vm909, %v911, %v913
          %v917 = vadd.f32 %v898, %v912
          %v918 = vadd.f32 %v899, %v914
          %v919 = vstv %s901
          %v920 = vmul.f32 %v919, %v430
          %v921 = vmul.f32 %v919, %v431
          %v922 = vmul.f32 %v919, %v432
          %v926 = vrot.slane %v920, 2
          %v927 = vrot.slane %v921, 2
          %v928 = vsel %vm909, %v926, %v927
          %v929 = vrot.slane %v922, 2
          %v930 = vsel %vm909, %v927, %v929
          %v933 = vadd.f32 %v917, %v928
          %v934 = vadd.f32 %v918, %v930
          %s935 = sld [smem:[#allocation6 + $0xf]]
          %s936 = sld [smem:[#allocation6 + $0x40]]
          %v937 = vstv %s935
          %v938 = vmul.f32 %v937, %v427
          %v939 = vmul.f32 %v937, %v428
          %v940 = vmul.f32 %v937, %v429
          %v944 = vrot.slane %v938, 2
          %v945 = vrot.slane %v939, 2
          %v946 = vsel %vm909, %v944, %v945
          %v947 = vrot.slane %v940, 2
          %v948 = vsel %vm909, %v945, %v947
          %949 = vrot.lane.b32.xlu0 %v946, 127
          %v950 = vpop.permute.xlu0 %949
          %951 = vrot.lane.b32.xlu0 %v948, 127
          %v952 = vpop.permute.xlu0 %951
          %v955 = vadd.f32 %v933, %v950
          %v956 = vadd.f32 %v934, %v952
          %v957 = vstv %s936
          %v958 = vmul.f32 %v957, %v430
          %v959 = vmul.f32 %v957, %v431
          %v960 = vmul.f32 %v957, %v432
          %v964 = vrot.slane %v958, 2
          %v965 = vrot.slane %v959, 2
          %v966 = vsel %vm909, %v964, %v965
          %v967 = vrot.slane %v960, 2
          %v968 = vsel %vm909, %v965, %v967
          %969 = vrot.lane.b32.xlu0 %v966, 127
          %v970 = vpop.permute.xlu0 %969
          %971 = vrot.lane.b32.xlu0 %v968, 127
          %v972 = vpop.permute.xlu0 %971
          %v975 = vadd.f32 %v955, %v970
          %v976 = vadd.f32 %v956, %v972
          %s977 = sld [smem:[#allocation6 + $0x10]]
          %s978 = sld [smem:[#allocation6 + $0x41]]
          %v979 = vstv %s977
          %v980 = vmul.f32 %v979, %v427
          %v981 = vmul.f32 %v979, %v428
          %v982 = vmul.f32 %v979, %v429
          %v986 = vrot.slane %v980, 2
          %v987 = vrot.slane %v981, 2
          %v988 = vsel %vm909, %v986, %v987
          %v989 = vrot.slane %v982, 2
          %v990 = vsel %vm909, %v987, %v989
          %991 = vrot.lane.b32.xlu0 %v988, 126
          %v992 = vpop.permute.xlu0 %991
          %993 = vrot.lane.b32.xlu0 %v990, 126
          %v994 = vpop.permute.xlu0 %993
          %v997 = vadd.f32 %v975, %v992
          %v998 = vadd.f32 %v976, %v994
          %v999 = vstv %s978
          %v1000 = vmul.f32 %v999, %v430
          %v1001 = vmul.f32 %v999, %v431
          %v1002 = vmul.f32 %v999, %v432
          %v1006 = vrot.slane %v1000, 2
          %v1007 = vrot.slane %v1001, 2
          %v1008 = vsel %vm909, %v1006, %v1007
          %v1009 = vrot.slane %v1002, 2
          %v1010 = vsel %vm909, %v1007, %v1009
          %1011 = vrot.lane.b32.xlu0 %v1008, 126
          %v1012 = vpop.permute.xlu0 %1011
          %1013 = vrot.lane.b32.xlu0 %v1010, 126
          %v1014 = vpop.permute.xlu0 %1013
          %v1017 = vadd.f32 %v997, %v1012
          %v1018 = vadd.f32 %v998, %v1014
          %s1019 = sld [smem:[#allocation6 + $0x11]]
          %s1020 = sld [smem:[#allocation6 + $0x42]]
          %v1021 = vstv %s1019
          %v1022 = vmul.f32 %v1021, %v427
          %v1023 = vmul.f32 %v1021, %v428
          %v1024 = vmul.f32 %v1021, %v429
          %v1028 = vrot.slane %v1022, 2
          %v1029 = vrot.slane %v1023, 2
          %v1030 = vsel %vm909, %v1028, %v1029
          %v1031 = vrot.slane %v1024, 2
          %v1032 = vsel %vm909, %v1029, %v1031
          %1033 = vrot.lane.b32.xlu0 %v1030, 125
          %v1034 = vpop.permute.xlu0 %1033
          %1035 = vrot.lane.b32.xlu0 %v1032, 125
          %v1036 = vpop.permute.xlu0 %1035
          %v1039 = vadd.f32 %v1017, %v1034
          %v1040 = vadd.f32 %v1018, %v1036
          %v1041 = vstv %s1020
          %v1042 = vmul.f32 %v1041, %v430
          %v1043 = vmul.f32 %v1041, %v431
          %v1044 = vmul.f32 %v1041, %v432
          %v1048 = vrot.slane %v1042, 2
          %v1049 = vrot.slane %v1043, 2
          %v1050 = vsel %vm909, %v1048, %v1049
          %v1051 = vrot.slane %v1044, 2
          %v1052 = vsel %vm909, %v1049, %v1051
          %1053 = vrot.lane.b32.xlu0 %v1050, 125
          %v1054 = vpop.permute.xlu0 %1053
          %1055 = vrot.lane.b32.xlu0 %v1052, 125
          %v1056 = vpop.permute.xlu0 %1055
          %v1059 = vadd.f32 %v1039, %v1054
          %v1060 = vadd.f32 %v1040, %v1056
          %s1061 = sld [smem:[#allocation6 + $0x12]]
          %s1062 = sld [smem:[#allocation6 + $0x43]]
          %v1063 = vstv %s1061
          %v1064 = vmul.f32 %v1063, %v427
          %v1065 = vmul.f32 %v1063, %v428
          %v1066 = vmul.f32 %v1063, %v429
          %v1070 = vrot.slane %v1064, 2
          %v1071 = vrot.slane %v1065, 2
          %v1072 = vsel %vm909, %v1070, %v1071
          %v1073 = vrot.slane %v1066, 2
          %v1074 = vsel %vm909, %v1071, %v1073
          %1075 = vrot.lane.b32.xlu0 %v1072, 124
          %v1076 = vpop.permute.xlu0 %1075
          %1077 = vrot.lane.b32.xlu0 %v1074, 124
          %v1078 = vpop.permute.xlu0 %1077
          %v1081 = vadd.f32 %v1059, %v1076
          %v1082 = vadd.f32 %v1060, %v1078
          %v1083 = vstv %s1062
          %v1084 = vmul.f32 %v1083, %v430
          %v1085 = vmul.f32 %v1083, %v431
          %v1086 = vmul.f32 %v1083, %v432
          %v1090 = vrot.slane %v1084, 2
          %v1091 = vrot.slane %v1085, 2
          %v1092 = vsel %vm909, %v1090, %v1091
          %v1093 = vrot.slane %v1086, 2
          %v1094 = vsel %vm909, %v1091, %v1093
          %1095 = vrot.lane.b32.xlu0 %v1092, 124
          %v1096 = vpop.permute.xlu0 %1095
          %1097 = vrot.lane.b32.xlu0 %v1094, 124
          %v1098 = vpop.permute.xlu0 %1097
          %v1101 = vadd.f32 %v1081, %v1096
          %v1102 = vadd.f32 %v1082, %v1098
          %s1103 = sld [smem:[#allocation6 + $0x13]]
          %s1104 = sld [smem:[#allocation6 + $0x44]]
          %v1105 = vstv %s1103
          %v1106 = vmul.f32 %v1105, %v427
          %v1107 = vmul.f32 %v1105, %v428
          %v1108 = vmul.f32 %v1105, %v429
          %v1112 = vrot.slane %v1106, 2
          %v1113 = vrot.slane %v1107, 2
          %v1114 = vsel %vm909, %v1112, %v1113
          %v1115 = vrot.slane %v1108, 2
          %v1116 = vsel %vm909, %v1113, %v1115
          %1117 = vrot.lane.b32.xlu0 %v1114, 123
          %v1118 = vpop.permute.xlu0 %1117
          %1119 = vrot.lane.b32.xlu0 %v1116, 123
          %v1120 = vpop.permute.xlu0 %1119
          %v1123 = vadd.f32 %v1101, %v1118
          %v1124 = vadd.f32 %v1102, %v1120
          %v1125 = vstv %s1104
          %v1126 = vmul.f32 %v1125, %v430
          %v1127 = vmul.f32 %v1125, %v431
          %v1128 = vmul.f32 %v1125, %v432
          %v1132 = vrot.slane %v1126, 2
          %v1133 = vrot.slane %v1127, 2
          %v1134 = vsel %vm909, %v1132, %v1133
          %v1135 = vrot.slane %v1128, 2
          %v1136 = vsel %vm909, %v1133, %v1135
          %1137 = vrot.lane.b32.xlu0 %v1134, 123
          %v1138 = vpop.permute.xlu0 %1137
          %1139 = vrot.lane.b32.xlu0 %v1136, 123
          %v1140 = vpop.permute.xlu0 %1139
          %v1143 = vadd.f32 %v1123, %v1138
          %v1144 = vadd.f32 %v1124, %v1140
          %s1145 = sld [smem:[#allocation6 + $0x14]]
          %s1146 = sld [smem:[#allocation6 + $0x45]]
          %v1147 = vstv %s1145
          %v1148 = vmul.f32 %v1147, %v427
          %v1149 = vmul.f32 %v1147, %v428
          %v1150 = vmul.f32 %v1147, %v429
          %v1154 = vrot.slane %v1148, 2
          %v1155 = vrot.slane %v1149, 2
          %v1156 = vsel %vm909, %v1154, %v1155
          %v1157 = vrot.slane %v1150, 2
          %v1158 = vsel %vm909, %v1155, %v1157
          %1159 = vrot.lane.b32.xlu0 %v1156, 122
          %v1160 = vpop.permute.xlu0 %1159
          %1161 = vrot.lane.b32.xlu0 %v1158, 122
          %v1162 = vpop.permute.xlu0 %1161
          %v1165 = vadd.f32 %v1143, %v1160
          %v1166 = vadd.f32 %v1144, %v1162
          %v1167 = vstv %s1146
          %v1168 = vmul.f32 %v1167, %v430
          %v1169 = vmul.f32 %v1167, %v431
          %v1170 = vmul.f32 %v1167, %v432
          %v1174 = vrot.slane %v1168, 2
          %v1175 = vrot.slane %v1169, 2
          %v1176 = vsel %vm909, %v1174, %v1175
          %v1177 = vrot.slane %v1170, 2
          %v1178 = vsel %vm909, %v1175, %v1177
          %1179 = vrot.lane.b32.xlu0 %v1176, 122
          %v1180 = vpop.permute.xlu0 %1179
          %1181 = vrot.lane.b32.xlu0 %v1178, 122
          %v1182 = vpop.permute.xlu0 %1181
          %v1185 = vadd.f32 %v1165, %v1180
          %v1186 = vadd.f32 %v1166, %v1182
          %s1187 = sld [smem:[#allocation6 + $0x15]]
          %s1188 = sld [smem:[#allocation6 + $0x46]]
          %v1189 = vstv %s1187
          %v1190 = vmul.f32 %v1189, %v427
          %v1191 = vmul.f32 %v1189, %v428
          %v1192 = vmul.f32 %v1189, %v429
          %vm1196 = vcmask 1044480
          %v1197 = vrot.slane %v1190, 3
          %v1198 = vrot.slane %v1191, 3
          %v1199 = vsel %vm1196, %v1197, %v1198
          %v1200 = vrot.slane %v1192, 3
          %v1201 = vsel %vm1196, %v1198, %v1200
          %v1204 = vadd.f32 %v1185, %v1199
          %v1205 = vadd.f32 %v1186, %v1201
          %v1206 = vstv %s1188
          %v1207 = vmul.f32 %v1206, %v430
          %v1208 = vmul.f32 %v1206, %v431
          %v1209 = vmul.f32 %v1206, %v432
          %v1213 = vrot.slane %v1207, 3
          %v1214 = vrot.slane %v1208, 3
          %v1215 = vsel %vm1196, %v1213, %v1214
          %v1216 = vrot.slane %v1209, 3
          %v1217 = vsel %vm1196, %v1214, %v1216
          %v1220 = vadd.f32 %v1204, %v1215
          %v1221 = vadd.f32 %v1205, %v1217
          %s1222 = sld [smem:[#allocation6 + $0x16]]
          %s1223 = sld [smem:[#allocation6 + $0x47]]
          %v1224 = vstv %s1222
          %v1225 = vmul.f32 %v1224, %v427
          %v1226 = vmul.f32 %v1224, %v428
          %v1227 = vmul.f32 %v1224, %v429
          %v1231 = vrot.slane %v1225, 3
          %v1232 = vrot.slane %v1226, 3
          %v1233 = vsel %vm1196, %v1231, %v1232
          %v1234 = vrot.slane %v1227, 3
          %v1235 = vsel %vm1196, %v1232, %v1234
          %1236 = vrot.lane.b32.xlu0 %v1233, 127
          %v1237 = vpop.permute.xlu0 %1236
          %1238 = vrot.lane.b32.xlu0 %v1235, 127
          %v1239 = vpop.permute.xlu0 %1238
          %v1242 = vadd.f32 %v1220, %v1237
          %v1243 = vadd.f32 %v1221, %v1239
          %v1244 = vstv %s1223
          %v1245 = vmul.f32 %v1244, %v430
          %v1246 = vmul.f32 %v1244, %v431
          %v1247 = vmul.f32 %v1244, %v432
          %v1251 = vrot.slane %v1245, 3
          %v1252 = vrot.slane %v1246, 3
          %v1253 = vsel %vm1196, %v1251, %v1252
          %v1254 = vrot.slane %v1247, 3
          %v1255 = vsel %vm1196, %v1252, %v1254
          %1256 = vrot.lane.b32.xlu0 %v1253, 127
          %v1257 = vpop.permute.xlu0 %1256
          %1258 = vrot.lane.b32.xlu0 %v1255, 127
          %v1259 = vpop.permute.xlu0 %1258
          %v1262 = vadd.f32 %v1242, %v1257
          %v1263 = vadd.f32 %v1243, %v1259
          %s1264 = sld [smem:[#allocation6 + $0x17]]
          %s1265 = sld [smem:[#allocation6 + $0x48]]
          %v1266 = vstv %s1264
          %v1267 = vmul.f32 %v1266, %v427
          %v1268 = vmul.f32 %v1266, %v428
          %v1269 = vmul.f32 %v1266, %v429
          %v1273 = vrot.slane %v1267, 3
          %v1274 = vrot.slane %v1268, 3
          %v1275 = vsel %vm1196, %v1273, %v1274
          %v1276 = vrot.slane %v1269, 3
          %v1277 = vsel %vm1196, %v1274, %v1276
          %1278 = vrot.lane.b32.xlu0 %v1275, 126
          %v1279 = vpop.permute.xlu0 %1278
          %1280 = vrot.lane.b32.xlu0 %v1277, 126
          %v1281 = vpop.permute.xlu0 %1280
          %v1284 = vadd.f32 %v1262, %v1279
          %v1285 = vadd.f32 %v1263, %v1281
          %v1286 = vstv %s1265
          %v1287 = vmul.f32 %v1286, %v430
          %v1288 = vmul.f32 %v1286, %v431
          %v1289 = vmul.f32 %v1286, %v432
          %v1293 = vrot.slane %v1287, 3
          %v1294 = vrot.slane %v1288, 3
          %v1295 = vsel %vm1196, %v1293, %v1294
          %v1296 = vrot.slane %v1289, 3
          %v1297 = vsel %vm1196, %v1294, %v1296
          %1298 = vrot.lane.b32.xlu0 %v1295, 126
          %v1299 = vpop.permute.xlu0 %1298
          %1300 = vrot.lane.b32.xlu0 %v1297, 126
          %v1301 = vpop.permute.xlu0 %1300
          %v1304 = vadd.f32 %v1284, %v1299
          %v1305 = vadd.f32 %v1285, %v1301
          %s1306 = sld [smem:[#allocation6 + $0x18]]
          %s1307 = sld [smem:[#allocation6 + $0x49]]
          %v1308 = vstv %s1306
          %v1309 = vmul.f32 %v1308, %v427
          %v1310 = vmul.f32 %v1308, %v428
          %v1311 = vmul.f32 %v1308, %v429
          %v1315 = vrot.slane %v1309, 3
          %v1316 = vrot.slane %v1310, 3
          %v1317 = vsel %vm1196, %v1315, %v1316
          %v1318 = vrot.slane %v1311, 3
          %v1319 = vsel %vm1196, %v1316, %v1318
          %1320 = vrot.lane.b32.xlu0 %v1317, 125
          %v1321 = vpop.permute.xlu0 %1320
          %1322 = vrot.lane.b32.xlu0 %v1319, 125
          %v1323 = vpop.permute.xlu0 %1322
          %v1326 = vadd.f32 %v1304, %v1321
          %v1327 = vadd.f32 %v1305, %v1323
          %v1328 = vstv %s1307
          %v1329 = vmul.f32 %v1328, %v430
          %v1330 = vmul.f32 %v1328, %v431
          %v1331 = vmul.f32 %v1328, %v432
          %v1335 = vrot.slane %v1329, 3
          %v1336 = vrot.slane %v1330, 3
          %v1337 = vsel %vm1196, %v1335, %v1336
          %v1338 = vrot.slane %v1331, 3
          %v1339 = vsel %vm1196, %v1336, %v1338
          %1340 = vrot.lane.b32.xlu0 %v1337, 125
          %v1341 = vpop.permute.xlu0 %1340
          %1342 = vrot.lane.b32.xlu0 %v1339, 125
          %v1343 = vpop.permute.xlu0 %1342
          %v1346 = vadd.f32 %v1326, %v1341
          %v1347 = vadd.f32 %v1327, %v1343
          %s1348 = sld [smem:[#allocation6 + $0x19]]
          %s1349 = sld [smem:[#allocation6 + $0x4a]]
          %v1350 = vstv %s1348
          %v1351 = vmul.f32 %v1350, %v427
          %v1352 = vmul.f32 %v1350, %v428
          %v1353 = vmul.f32 %v1350, %v429
          %v1357 = vrot.slane %v1351, 3
          %v1358 = vrot.slane %v1352, 3
          %v1359 = vsel %vm1196, %v1357, %v1358
          %v1360 = vrot.slane %v1353, 3
          %v1361 = vsel %vm1196, %v1358, %v1360
          %1362 = vrot.lane.b32.xlu0 %v1359, 124
          %v1363 = vpop.permute.xlu0 %1362
          %1364 = vrot.lane.b32.xlu0 %v1361, 124
          %v1365 = vpop.permute.xlu0 %1364
          %v1368 = vadd.f32 %v1346, %v1363
          %v1369 = vadd.f32 %v1347, %v1365
          %v1370 = vstv %s1349
          %v1371 = vmul.f32 %v1370, %v430
          %v1372 = vmul.f32 %v1370, %v431
          %v1373 = vmul.f32 %v1370, %v432
          %v1377 = vrot.slane %v1371, 3
          %v1378 = vrot.slane %v1372, 3
          %v1379 = vsel %vm1196, %v1377, %v1378
          %v1380 = vrot.slane %v1373, 3
          %v1381 = vsel %vm1196, %v1378, %v1380
          %1382 = vrot.lane.b32.xlu0 %v1379, 124
          %v1383 = vpop.permute.xlu0 %1382
          %1384 = vrot.lane.b32.xlu0 %v1381, 124
          %v1385 = vpop.permute.xlu0 %1384
          %v1388 = vadd.f32 %v1368, %v1383
          %v1389 = vadd.f32 %v1369, %v1385
          %s1390 = sld [smem:[#allocation6 + $0x1a]]
          %s1391 = sld [smem:[#allocation6 + $0x4b]]
          %v1392 = vstv %s1390
          %v1393 = vmul.f32 %v1392, %v427
          %v1394 = vmul.f32 %v1392, %v428
          %v1395 = vmul.f32 %v1392, %v429
          %v1399 = vrot.slane %v1393, 3
          %v1400 = vrot.slane %v1394, 3
          %v1401 = vsel %vm1196, %v1399, %v1400
          %v1402 = vrot.slane %v1395, 3
          %v1403 = vsel %vm1196, %v1400, %v1402
          %1404 = vrot.lane.b32.xlu0 %v1401, 123
          %v1405 = vpop.permute.xlu0 %1404
          %1406 = vrot.lane.b32.xlu0 %v1403, 123
          %v1407 = vpop.permute.xlu0 %1406
          %v1410 = vadd.f32 %v1388, %v1405
          %v1411 = vadd.f32 %v1389, %v1407
          %v1412 = vstv %s1391
          %v1413 = vmul.f32 %v1412, %v430
          %v1414 = vmul.f32 %v1412, %v431
          %v1415 = vmul.f32 %v1412, %v432
          %v1419 = vrot.slane %v1413, 3
          %v1420 = vrot.slane %v1414, 3
          %v1421 = vsel %vm1196, %v1419, %v1420
          %v1422 = vrot.slane %v1415, 3
          %v1423 = vsel %vm1196, %v1420, %v1422
          %1424 = vrot.lane.b32.xlu0 %v1421, 123
          %v1425 = vpop.permute.xlu0 %1424
          %1426 = vrot.lane.b32.xlu0 %v1423, 123
          %v1427 = vpop.permute.xlu0 %1426
          %v1430 = vadd.f32 %v1410, %v1425
          %v1431 = vadd.f32 %v1411, %v1427
          %s1432 = sld [smem:[#allocation6 + $0x1b]]
          %s1433 = sld [smem:[#allocation6 + $0x4c]]
          %v1434 = vstv %s1432
          %v1435 = vmul.f32 %v1434, %v427
          %v1436 = vmul.f32 %v1434, %v428
          %v1437 = vmul.f32 %v1434, %v429
          %v1441 = vrot.slane %v1435, 3
          %v1442 = vrot.slane %v1436, 3
          %v1443 = vsel %vm1196, %v1441, %v1442
          %v1444 = vrot.slane %v1437, 3
          %v1445 = vsel %vm1196, %v1442, %v1444
          %1446 = vrot.lane.b32.xlu0 %v1443, 122
          %v1447 = vpop.permute.xlu0 %1446
          %1448 = vrot.lane.b32.xlu0 %v1445, 122
          %v1449 = vpop.permute.xlu0 %1448
          %v1452 = vadd.f32 %v1430, %v1447
          %v1453 = vadd.f32 %v1431, %v1449
          %v1454 = vstv %s1433
          %v1455 = vmul.f32 %v1454, %v430
          %v1456 = vmul.f32 %v1454, %v431
          %v1457 = vmul.f32 %v1454, %v432
          %v1461 = vrot.slane %v1455, 3
          %v1462 = vrot.slane %v1456, 3
          %v1463 = vsel %vm1196, %v1461, %v1462
          %v1464 = vrot.slane %v1457, 3
          %v1465 = vsel %vm1196, %v1462, %v1464
          %1466 = vrot.lane.b32.xlu0 %v1463, 122
          %v1467 = vpop.permute.xlu0 %1466
          %1468 = vrot.lane.b32.xlu0 %v1465, 122
          %v1469 = vpop.permute.xlu0 %1468
          %v1472 = vadd.f32 %v1452, %v1467
          %v1473 = vadd.f32 %v1453, %v1469
          %s1474 = sld [smem:[#allocation6 + $0x1c]]
          %s1475 = sld [smem:[#allocation6 + $0x4d]]
          %v1476 = vstv %s1474
          %v1477 = vmul.f32 %v1476, %v427
          %v1478 = vmul.f32 %v1476, %v428
          %v1479 = vmul.f32 %v1476, %v429
          %v1483 = vrot.slane %v1477, 4
          %v1484 = vrot.slane %v1478, 4
          %v1485 = vsel %vm199, %v1483, %v1484
          %v1486 = vrot.slane %v1479, 4
          %v1487 = vsel %vm199, %v1484, %v1486
          %v1490 = vadd.f32 %v1472, %v1485
          %v1491 = vadd.f32 %v1473, %v1487
          %v1492 = vstv %s1475
          %v1493 = vmul.f32 %v1492, %v430
          %v1494 = vmul.f32 %v1492, %v431
          %v1495 = vmul.f32 %v1492, %v432
          %v1499 = vrot.slane %v1493, 4
          %v1500 = vrot.slane %v1494, 4
          %v1501 = vsel %vm199, %v1499, %v1500
          %v1502 = vrot.slane %v1495, 4
          %v1503 = vsel %vm199, %v1500, %v1502
          %v1506 = vadd.f32 %v1490, %v1501
          %v1507 = vadd.f32 %v1491, %v1503
          %s1508 = sld [smem:[#allocation6 + $0x1d]]
          %s1509 = sld [smem:[#allocation6 + $0x4e]]
          %v1510 = vstv %s1508
          %v1511 = vmul.f32 %v1510, %v427
          %v1512 = vmul.f32 %v1510, %v428
          %v1513 = vmul.f32 %v1510, %v429
          %v1517 = vrot.slane %v1511, 4
          %v1518 = vrot.slane %v1512, 4
          %v1519 = vsel %vm199, %v1517, %v1518
          %v1520 = vrot.slane %v1513, 4
          %v1521 = vsel %vm199, %v1518, %v1520
          %1522 = vrot.lane.b32.xlu0 %v1519, 127
          %v1523 = vpop.permute.xlu0 %1522
          %1524 = vrot.lane.b32.xlu0 %v1521, 127
          %v1525 = vpop.permute.xlu0 %1524
          %v1528 = vadd.f32 %v1506, %v1523
          %v1529 = vadd.f32 %v1507, %v1525
          %v1530 = vstv %s1509
          %v1531 = vmul.f32 %v1530, %v430
          %v1532 = vmul.f32 %v1530, %v431
          %v1533 = vmul.f32 %v1530, %v432
          %v1537 = vrot.slane %v1531, 4
          %v1538 = vrot.slane %v1532, 4
          %v1539 = vsel %vm199, %v1537, %v1538
          %v1540 = vrot.slane %v1533, 4
          %v1541 = vsel %vm199, %v1538, %v1540
          %1542 = vrot.lane.b32.xlu0 %v1539, 127
          %v1543 = vpop.permute.xlu0 %1542
          %1544 = vrot.lane.b32.xlu0 %v1541, 127
          %v1545 = vpop.permute.xlu0 %1544
          %v1548 = vadd.f32 %v1528, %v1543
          %v1549 = vadd.f32 %v1529, %v1545
          %s1550 = sld [smem:[#allocation6 + $0x1e]]
          %s1551 = sld [smem:[#allocation6 + $0x4f]]
          %v1552 = vstv %s1550
          %v1553 = vmul.f32 %v1552, %v427
          %v1554 = vmul.f32 %v1552, %v428
          %v1555 = vmul.f32 %v1552, %v429
          %v1559 = vrot.slane %v1553, 4
          %v1560 = vrot.slane %v1554, 4
          %v1561 = vsel %vm199, %v1559, %v1560
          %v1562 = vrot.slane %v1555, 4
          %v1563 = vsel %vm199, %v1560, %v1562
          %1564 = vrot.lane.b32.xlu0 %v1561, 126
          %v1565 = vpop.permute.xlu0 %1564
          %1566 = vrot.lane.b32.xlu0 %v1563, 126
          %v1567 = vpop.permute.xlu0 %1566
          %v1570 = vadd.f32 %v1548, %v1565
          %v1571 = vadd.f32 %v1549, %v1567
          %v1572 = vstv %s1551
          %v1573 = vmul.f32 %v1572, %v430
          %v1574 = vmul.f32 %v1572, %v431
          %v1575 = vmul.f32 %v1572, %v432
          %v1579 = vrot.slane %v1573, 4
          %v1580 = vrot.slane %v1574, 4
          %v1581 = vsel %vm199, %v1579, %v1580
          %v1582 = vrot.slane %v1575, 4
          %v1583 = vsel %vm199, %v1580, %v1582
          %1584 = vrot.lane.b32.xlu0 %v1581, 126
          %v1585 = vpop.permute.xlu0 %1584
          %1586 = vrot.lane.b32.xlu0 %v1583, 126
          %v1587 = vpop.permute.xlu0 %1586
          %v1590 = vadd.f32 %v1570, %v1585
          %v1591 = vadd.f32 %v1571, %v1587
          %s1592 = sld [smem:[#allocation6 + $0x1f]]
          %s1593 = sld [smem:[#allocation6 + $0x50]]
          %v1594 = vstv %s1592
          %v1595 = vmul.f32 %v1594, %v427
          %v1596 = vmul.f32 %v1594, %v428
          %v1597 = vmul.f32 %v1594, %v429
          %v1601 = vrot.slane %v1595, 4
          %v1602 = vrot.slane %v1596, 4
          %v1603 = vsel %vm199, %v1601, %v1602
          %v1604 = vrot.slane %v1597, 4
          %v1605 = vsel %vm199, %v1602, %v1604
          %1606 = vrot.lane.b32.xlu0 %v1603, 125
          %v1607 = vpop.permute.xlu0 %1606
          %1608 = vrot.lane.b32.xlu0 %v1605, 125
          %v1609 = vpop.permute.xlu0 %1608
          %v1612 = vadd.f32 %v1590, %v1607
          %v1613 = vadd.f32 %v1591, %v1609
          %v1614 = vstv %s1593
          %v1615 = vmul.f32 %v1614, %v430
          %v1616 = vmul.f32 %v1614, %v431
          %v1617 = vmul.f32 %v1614, %v432
          %v1621 = vrot.slane %v1615, 4
          %v1622 = vrot.slane %v1616, 4
          %v1623 = vsel %vm199, %v1621, %v1622
          %v1624 = vrot.slane %v1617, 4
          %v1625 = vsel %vm199, %v1622, %v1624
          %1626 = vrot.lane.b32.xlu0 %v1623, 125
          %v1627 = vpop.permute.xlu0 %1626
          %1628 = vrot.lane.b32.xlu0 %v1625, 125
          %v1629 = vpop.permute.xlu0 %1628
          %v1632 = vadd.f32 %v1612, %v1627
          %v1633 = vadd.f32 %v1613, %v1629
          %s1634 = sld [smem:[#allocation6 + $0x20]]
          %s1635 = sld [smem:[#allocation6 + $0x51]]
          %v1636 = vstv %s1634
          %v1637 = vmul.f32 %v1636, %v427
          %v1638 = vmul.f32 %v1636, %v428
          %v1639 = vmul.f32 %v1636, %v429
          %v1643 = vrot.slane %v1637, 4
          %v1644 = vrot.slane %v1638, 4
          %v1645 = vsel %vm199, %v1643, %v1644
          %v1646 = vrot.slane %v1639, 4
          %v1647 = vsel %vm199, %v1644, %v1646
          %1648 = vrot.lane.b32.xlu0 %v1645, 124
          %v1649 = vpop.permute.xlu0 %1648
          %1650 = vrot.lane.b32.xlu0 %v1647, 124
          %v1651 = vpop.permute.xlu0 %1650
          %v1654 = vadd.f32 %v1632, %v1649
          %v1655 = vadd.f32 %v1633, %v1651
          %v1656 = vstv %s1635
          %v1657 = vmul.f32 %v1656, %v430
          %v1658 = vmul.f32 %v1656, %v431
          %v1659 = vmul.f32 %v1656, %v432
          %v1663 = vrot.slane %v1657, 4
          %v1664 = vrot.slane %v1658, 4
          %v1665 = vsel %vm199, %v1663, %v1664
          %v1666 = vrot.slane %v1659, 4
          %v1667 = vsel %vm199, %v1664, %v1666
          %1668 = vrot.lane.b32.xlu0 %v1665, 124
          %v1669 = vpop.permute.xlu0 %1668
          %1670 = vrot.lane.b32.xlu0 %v1667, 124
          %v1671 = vpop.permute.xlu0 %1670
          %v1674 = vadd.f32 %v1654, %v1669
          %v1675 = vadd.f32 %v1655, %v1671
          %s1676 = sld [smem:[#allocation6 + $0x21]]
          %s1677 = sld [smem:[#allocation6 + $0x52]]
          %v1678 = vstv %s1676
          %v1679 = vmul.f32 %v1678, %v427
          %v1680 = vmul.f32 %v1678, %v428
          %v1681 = vmul.f32 %v1678, %v429
          %v1685 = vrot.slane %v1679, 4
          %v1686 = vrot.slane %v1680, 4
          %v1687 = vsel %vm199, %v1685, %v1686
          %v1688 = vrot.slane %v1681, 4
          %v1689 = vsel %vm199, %v1686, %v1688
          %1690 = vrot.lane.b32.xlu0 %v1687, 123
          %v1691 = vpop.permute.xlu0 %1690
          %1692 = vrot.lane.b32.xlu0 %v1689, 123
          %v1693 = vpop.permute.xlu0 %1692
          %v1696 = vadd.f32 %v1674, %v1691
          %v1697 = vadd.f32 %v1675, %v1693
          %v1698 = vstv %s1677
          %v1699 = vmul.f32 %v1698, %v430
          %v1700 = vmul.f32 %v1698, %v431
          %v1701 = vmul.f32 %v1698, %v432
          %v1705 = vrot.slane %v1699, 4
          %v1706 = vrot.slane %v1700, 4
          %v1707 = vsel %vm199, %v1705, %v1706
          %v1708 = vrot.slane %v1701, 4
          %v1709 = vsel %vm199, %v1706, %v1708
          %1710 = vrot.lane.b32.xlu0 %v1707, 123
          %v1711 = vpop.permute.xlu0 %1710
          %1712 = vrot.lane.b32.xlu0 %v1709, 123
          %v1713 = vpop.permute.xlu0 %1712
          %v1716 = vadd.f32 %v1696, %v1711
          %v1717 = vadd.f32 %v1697, %v1713
          %s1718 = sld [smem:[#allocation6 + $0x22]]
          %s1719 = sld [smem:[#allocation6 + $0x53]]
          %v1720 = vstv %s1718
          %v1721 = vmul.f32 %v1720, %v427
          %v1722 = vmul.f32 %v1720, %v428
          %v1723 = vmul.f32 %v1720, %v429
          %v1727 = vrot.slane %v1721, 4
          %v1728 = vrot.slane %v1722, 4
          %v1729 = vsel %vm199, %v1727, %v1728
          %v1730 = vrot.slane %v1723, 4
          %v1731 = vsel %vm199, %v1728, %v1730
          %1732 = vrot.lane.b32.xlu0 %v1729, 122
          %v1733 = vpop.permute.xlu0 %1732
          %1734 = vrot.lane.b32.xlu0 %v1731, 122
          %v1735 = vpop.permute.xlu0 %1734
          %v1738 = vadd.f32 %v1716, %v1733
          %v1739 = vadd.f32 %v1717, %v1735
          %v1740 = vstv %s1719
          %v1741 = vmul.f32 %v1740, %v430
          %v1742 = vmul.f32 %v1740, %v431
          %v1743 = vmul.f32 %v1740, %v432
          %v1747 = vrot.slane %v1741, 4
          %v1748 = vrot.slane %v1742, 4
          %v1749 = vsel %vm199, %v1747, %v1748
          %v1750 = vrot.slane %v1743, 4
          %v1751 = vsel %vm199, %v1748, %v1750
          %1752 = vrot.lane.b32.xlu0 %v1749, 122
          %v1753 = vpop.permute.xlu0 %1752
          %1754 = vrot.lane.b32.xlu0 %v1751, 122
          %v1755 = vpop.permute.xlu0 %1754
          %v1758 = vadd.f32 %v1738, %v1753
          %v1759 = vadd.f32 %v1739, %v1755
          %s1760 = sld [smem:[#allocation6 + $0x23]]
          %s1761 = sld [smem:[#allocation6 + $0x54]]
          %v1762 = vstv %s1760
          %v1763 = vmul.f32 %v1762, %v427
          %v1764 = vmul.f32 %v1762, %v428
          %v1765 = vmul.f32 %v1762, %v429
          %vm1769 = vcmask 1042432
          %v1770 = vrot.slane %v1763, 5
          %v1771 = vrot.slane %v1764, 5
          %v1772 = vsel %vm1769, %v1770, %v1771
          %v1773 = vrot.slane %v1765, 5
          %v1774 = vsel %vm1769, %v1771, %v1773
          %v1777 = vadd.f32 %v1758, %v1772
          %v1778 = vadd.f32 %v1759, %v1774
          %v1779 = vstv %s1761
          %v1780 = vmul.f32 %v1779, %v430
          %v1781 = vmul.f32 %v1779, %v431
          %v1782 = vmul.f32 %v1779, %v432
          %v1786 = vrot.slane %v1780, 5
          %v1787 = vrot.slane %v1781, 5
          %v1788 = vsel %vm1769, %v1786, %v1787
          %v1789 = vrot.slane %v1782, 5
          %v1790 = vsel %vm1769, %v1787, %v1789
          %v1793 = vadd.f32 %v1777, %v1788
          %v1794 = vadd.f32 %v1778, %v1790
          %s1795 = sld [smem:[#allocation6 + $0x24]]
          %s1796 = sld [smem:[#allocation6 + $0x55]]
          %v1797 = vstv %s1795
          %v1798 = vmul.f32 %v1797, %v427
          %v1799 = vmul.f32 %v1797, %v428
          %v1800 = vmul.f32 %v1797, %v429
          %v1804 = vrot.slane %v1798, 5
          %v1805 = vrot.slane %v1799, 5
          %v1806 = vsel %vm1769, %v1804, %v1805
          %v1807 = vrot.slane %v1800, 5
          %v1808 = vsel %vm1769, %v1805, %v1807
          %1809 = vrot.lane.b32.xlu0 %v1806, 127
          %v1810 = vpop.permute.xlu0 %1809
          %1811 = vrot.lane.b32.xlu0 %v1808, 127
          %v1812 = vpop.permute.xlu0 %1811
          %v1815 = vadd.f32 %v1793, %v1810
          %v1816 = vadd.f32 %v1794, %v1812
          %v1817 = vstv %s1796
          %v1818 = vmul.f32 %v1817, %v430
          %v1819 = vmul.f32 %v1817, %v431
          %v1820 = vmul.f32 %v1817, %v432
          %v1824 = vrot.slane %v1818, 5
          %v1825 = vrot.slane %v1819, 5
          %v1826 = vsel %vm1769, %v1824, %v1825
          %v1827 = vrot.slane %v1820, 5
          %v1828 = vsel %vm1769, %v1825, %v1827
          %1829 = vrot.lane.b32.xlu0 %v1826, 127
          %v1830 = vpop.permute.xlu0 %1829
          %1831 = vrot.lane.b32.xlu0 %v1828, 127
          %v1832 = vpop.permute.xlu0 %1831
          %v1835 = vadd.f32 %v1815, %v1830
          %v1836 = vadd.f32 %v1816, %v1832
          %s1837 = sld [smem:[#allocation6 + $0x25]]
          %s1838 = sld [smem:[#allocation6 + $0x56]]
          %v1839 = vstv %s1837
          %v1840 = vmul.f32 %v1839, %v427
          %v1841 = vmul.f32 %v1839, %v428
          %v1842 = vmul.f32 %v1839, %v429
          %v1846 = vrot.slane %v1840, 5
          %v1847 = vrot.slane %v1841, 5
          %v1848 = vsel %vm1769, %v1846, %v1847
          %v1849 = vrot.slane %v1842, 5
          %v1850 = vsel %vm1769, %v1847, %v1849
          %1851 = vrot.lane.b32.xlu0 %v1848, 126
          %v1852 = vpop.permute.xlu0 %1851
          %1853 = vrot.lane.b32.xlu0 %v1850, 126
          %v1854 = vpop.permute.xlu0 %1853
          %v1857 = vadd.f32 %v1835, %v1852
          %v1858 = vadd.f32 %v1836, %v1854
          %v1859 = vstv %s1838
          %v1860 = vmul.f32 %v1859, %v430
          %v1861 = vmul.f32 %v1859, %v431
          %v1862 = vmul.f32 %v1859, %v432
          %v1866 = vrot.slane %v1860, 5
          %v1867 = vrot.slane %v1861, 5
          %v1868 = vsel %vm1769, %v1866, %v1867
          %v1869 = vrot.slane %v1862, 5
          %v1870 = vsel %vm1769, %v1867, %v1869
          %1871 = vrot.lane.b32.xlu0 %v1868, 126
          %v1872 = vpop.permute.xlu0 %1871
          %1873 = vrot.lane.b32.xlu0 %v1870, 126
          %v1874 = vpop.permute.xlu0 %1873
          %v1877 = vadd.f32 %v1857, %v1872
          %v1878 = vadd.f32 %v1858, %v1874
          %s1879 = sld [smem:[#allocation6 + $0x26]]
          %s1880 = sld [smem:[#allocation6 + $0x57]]
          %v1881 = vstv %s1879
          %v1882 = vmul.f32 %v1881, %v427
          %v1883 = vmul.f32 %v1881, %v428
          %v1884 = vmul.f32 %v1881, %v429
          %v1888 = vrot.slane %v1882, 5
          %v1889 = vrot.slane %v1883, 5
          %v1890 = vsel %vm1769, %v1888, %v1889
          %v1891 = vrot.slane %v1884, 5
          %v1892 = vsel %vm1769, %v1889, %v1891
          %1893 = vrot.lane.b32.xlu0 %v1890, 125
          %v1894 = vpop.permute.xlu0 %1893
          %1895 = vrot.lane.b32.xlu0 %v1892, 125
          %v1896 = vpop.permute.xlu0 %1895
          %v1899 = vadd.f32 %v1877, %v1894
          %v1900 = vadd.f32 %v1878, %v1896
          %v1901 = vstv %s1880
          %v1902 = vmul.f32 %v1901, %v430
          %v1903 = vmul.f32 %v1901, %v431
          %v1904 = vmul.f32 %v1901, %v432
          %v1908 = vrot.slane %v1902, 5
          %v1909 = vrot.slane %v1903, 5
          %v1910 = vsel %vm1769, %v1908, %v1909
          %v1911 = vrot.slane %v1904, 5
          %v1912 = vsel %vm1769, %v1909, %v1911
          %1913 = vrot.lane.b32.xlu0 %v1910, 125
          %v1914 = vpop.permute.xlu0 %1913
          %1915 = vrot.lane.b32.xlu0 %v1912, 125
          %v1916 = vpop.permute.xlu0 %1915
          %v1919 = vadd.f32 %v1899, %v1914
          %v1920 = vadd.f32 %v1900, %v1916
          %s1921 = sld [smem:[#allocation6 + $0x27]]
          %s1922 = sld [smem:[#allocation6 + $0x58]]
          %v1923 = vstv %s1921
          %v1924 = vmul.f32 %v1923, %v427
          %v1925 = vmul.f32 %v1923, %v428
          %v1926 = vmul.f32 %v1923, %v429
          %v1930 = vrot.slane %v1924, 5
          %v1931 = vrot.slane %v1925, 5
          %v1932 = vsel %vm1769, %v1930, %v1931
          %v1933 = vrot.slane %v1926, 5
          %v1934 = vsel %vm1769, %v1931, %v1933
          %1935 = vrot.lane.b32.xlu0 %v1932, 124
          %v1936 = vpop.permute.xlu0 %1935
          %1937 = vrot.lane.b32.xlu0 %v1934, 124
          %v1938 = vpop.permute.xlu0 %1937
          %v1941 = vadd.f32 %v1919, %v1936
          %v1942 = vadd.f32 %v1920, %v1938
          %v1943 = vstv %s1922
          %v1944 = vmul.f32 %v1943, %v430
          %v1945 = vmul.f32 %v1943, %v431
          %v1946 = vmul.f32 %v1943, %v432
          %v1950 = vrot.slane %v1944, 5
          %v1951 = vrot.slane %v1945, 5
          %v1952 = vsel %vm1769, %v1950, %v1951
          %v1953 = vrot.slane %v1946, 5
          %v1954 = vsel %vm1769, %v1951, %v1953
          %1955 = vrot.lane.b32.xlu0 %v1952, 124
          %v1956 = vpop.permute.xlu0 %1955
          %1957 = vrot.lane.b32.xlu0 %v1954, 124
          %v1958 = vpop.permute.xlu0 %1957
          %v1961 = vadd.f32 %v1941, %v1956
          %v1962 = vadd.f32 %v1942, %v1958
          %s1963 = sld [smem:[#allocation6 + $0x28]]
          %s1964 = sld [smem:[#allocation6 + $0x59]]
          %v1965 = vstv %s1963
          %v1966 = vmul.f32 %v1965, %v427
          %v1967 = vmul.f32 %v1965, %v428
          %v1968 = vmul.f32 %v1965, %v429
          %v1972 = vrot.slane %v1966, 5
          %v1973 = vrot.slane %v1967, 5
          %v1974 = vsel %vm1769, %v1972, %v1973
          %v1975 = vrot.slane %v1968, 5
          %v1976 = vsel %vm1769, %v1973, %v1975
          %1977 = vrot.lane.b32.xlu0 %v1974, 123
          %v1978 = vpop.permute.xlu0 %1977
          %1979 = vrot.lane.b32.xlu0 %v1976, 123
          %v1980 = vpop.permute.xlu0 %1979
          %v1983 = vadd.f32 %v1961, %v1978
          %v1984 = vadd.f32 %v1962, %v1980
          %v1985 = vstv %s1964
          %v1986 = vmul.f32 %v1985, %v430
          %v1987 = vmul.f32 %v1985, %v431
          %v1988 = vmul.f32 %v1985, %v432
          %v1992 = vrot.slane %v1986, 5
          %v1993 = vrot.slane %v1987, 5
          %v1994 = vsel %vm1769, %v1992, %v1993
          %v1995 = vrot.slane %v1988, 5
          %v1996 = vsel %vm1769, %v1993, %v1995
          %1997 = vrot.lane.b32.xlu0 %v1994, 123
          %v1998 = vpop.permute.xlu0 %1997
          %1999 = vrot.lane.b32.xlu0 %v1996, 123
          %v2000 = vpop.permute.xlu0 %1999
          %v2003 = vadd.f32 %v1983, %v1998
          %v2004 = vadd.f32 %v1984, %v2000
          %s2005 = sld [smem:[#allocation6 + $0x29]]
          %s2006 = sld [smem:[#allocation6 + $0x5a]]
          %v2007 = vstv %s2005
          %v2008 = vmul.f32 %v2007, %v427
          %v2009 = vmul.f32 %v2007, %v428
          %v2010 = vmul.f32 %v2007, %v429
          %v2014 = vrot.slane %v2008, 5
          %v2015 = vrot.slane %v2009, 5
          %v2016 = vsel %vm1769, %v2014, %v2015
          %v2017 = vrot.slane %v2010, 5
          %v2018 = vsel %vm1769, %v2015, %v2017
          %2019 = vrot.lane.b32.xlu0 %v2016, 122
          %v2020 = vpop.permute.xlu0 %2019
          %2021 = vrot.lane.b32.xlu0 %v2018, 122
          %v2022 = vpop.permute.xlu0 %2021
          %v2025 = vadd.f32 %v2003, %v2020
          %v2026 = vadd.f32 %v2004, %v2022
          %v2027 = vstv %s2006
          %v2028 = vmul.f32 %v2027, %v430
          %v2029 = vmul.f32 %v2027, %v431
          %v2030 = vmul.f32 %v2027, %v432
          %v2034 = vrot.slane %v2028, 5
          %v2035 = vrot.slane %v2029, 5
          %v2036 = vsel %vm1769, %v2034, %v2035
          %v2037 = vrot.slane %v2030, 5
          %v2038 = vsel %vm1769, %v2035, %v2037
          %2039 = vrot.lane.b32.xlu0 %v2036, 122
          %v2040 = vpop.permute.xlu0 %2039
          %2041 = vrot.lane.b32.xlu0 %v2038, 122
          %v2042 = vpop.permute.xlu0 %2041
          %v2045 = vadd.f32 %v2025, %v2040
          %v2046 = vadd.f32 %v2026, %v2042
          %s2047 = sld [smem:[#allocation6 + $0x2a]]
          %s2048 = sld [smem:[#allocation6 + $0x5b]]
          %v2049 = vstv %s2047
          %v2050 = vmul.f32 %v2049, %v427
          %v2051 = vmul.f32 %v2049, %v428
          %v2052 = vmul.f32 %v2049, %v429
          %vm2056 = vcmask 1041408
          %v2057 = vrot.slane %v2050, 6
          %v2058 = vrot.slane %v2051, 6
          %v2059 = vsel %vm2056, %v2057, %v2058
          %v2060 = vrot.slane %v2052, 6
          %v2061 = vsel %vm2056, %v2058, %v2060
          %v2064 = vadd.f32 %v2045, %v2059
          %v2065 = vadd.f32 %v2046, %v2061
          %v2066 = vstv %s2048
          %v2067 = vmul.f32 %v2066, %v430
          %v2068 = vmul.f32 %v2066, %v431
          %v2069 = vmul.f32 %v2066, %v432
          %v2073 = vrot.slane %v2067, 6
          %v2074 = vrot.slane %v2068, 6
          %v2075 = vsel %vm2056, %v2073, %v2074
          %v2076 = vrot.slane %v2069, 6
          %v2077 = vsel %vm2056, %v2074, %v2076
          %v2080 = vadd.f32 %v2064, %v2075
          %v2081 = vadd.f32 %v2065, %v2077
          %s2082 = sld [smem:[#allocation6 + $0x2b]]
          %s2083 = sld [smem:[#allocation6 + $0x5c]]
          %v2084 = vstv %s2082
          %v2085 = vmul.f32 %v2084, %v427
          %v2086 = vmul.f32 %v2084, %v428
          %v2087 = vmul.f32 %v2084, %v429
          %v2091 = vrot.slane %v2085, 6
          %v2092 = vrot.slane %v2086, 6
          %v2093 = vsel %vm2056, %v2091, %v2092
          %v2094 = vrot.slane %v2087, 6
          %v2095 = vsel %vm2056, %v2092, %v2094
          %2096 = vrot.lane.b32.xlu0 %v2093, 127
          %v2097 = vpop.permute.xlu0 %2096
          %2098 = vrot.lane.b32.xlu0 %v2095, 127
          %v2099 = vpop.permute.xlu0 %2098
          %v2102 = vadd.f32 %v2080, %v2097
          %v2103 = vadd.f32 %v2081, %v2099
          %v2104 = vstv %s2083
          %v2105 = vmul.f32 %v2104, %v430
          %v2106 = vmul.f32 %v2104, %v431
          %v2107 = vmul.f32 %v2104, %v432
          %v2111 = vrot.slane %v2105, 6
          %v2112 = vrot.slane %v2106, 6
          %v2113 = vsel %vm2056, %v2111, %v2112
          %v2114 = vrot.slane %v2107, 6
          %v2115 = vsel %vm2056, %v2112, %v2114
          %2116 = vrot.lane.b32.xlu0 %v2113, 127
          %v2117 = vpop.permute.xlu0 %2116
          %2118 = vrot.lane.b32.xlu0 %v2115, 127
          %v2119 = vpop.permute.xlu0 %2118
          %v2122 = vadd.f32 %v2102, %v2117
          %v2123 = vadd.f32 %v2103, %v2119
          %s2124 = sld [smem:[#allocation6 + $0x2c]]
          %s2125 = sld [smem:[#allocation6 + $0x5d]]
          %v2126 = vstv %s2124
          %v2127 = vmul.f32 %v2126, %v427
          %v2128 = vmul.f32 %v2126, %v428
          %v2129 = vmul.f32 %v2126, %v429
          %v2133 = vrot.slane %v2127, 6
          %v2134 = vrot.slane %v2128, 6
          %v2135 = vsel %vm2056, %v2133, %v2134
          %v2136 = vrot.slane %v2129, 6
          %v2137 = vsel %vm2056, %v2134, %v2136
          %2138 = vrot.lane.b32.xlu0 %v2135, 126
          %v2139 = vpop.permute.xlu0 %2138
          %2140 = vrot.lane.b32.xlu0 %v2137, 126
          %v2141 = vpop.permute.xlu0 %2140
          %v2144 = vadd.f32 %v2122, %v2139
          %v2145 = vadd.f32 %v2123, %v2141
          %v2146 = vstv %s2125
          %v2147 = vmul.f32 %v2146, %v430
          %v2148 = vmul.f32 %v2146, %v431
          %v2149 = vmul.f32 %v2146, %v432
          %v2153 = vrot.slane %v2147, 6
          %v2154 = vrot.slane %v2148, 6
          %v2155 = vsel %vm2056, %v2153, %v2154
          %v2156 = vrot.slane %v2149, 6
          %v2157 = vsel %vm2056, %v2154, %v2156
          %2158 = vrot.lane.b32.xlu0 %v2155, 126
          %v2159 = vpop.permute.xlu0 %2158
          %2160 = vrot.lane.b32.xlu0 %v2157, 126
          %v2161 = vpop.permute.xlu0 %2160
          %v2164 = vadd.f32 %v2144, %v2159
          %v2165 = vadd.f32 %v2145, %v2161
          %s2166 = sld [smem:[#allocation6 + $0x2d]]
          %s2167 = sld [smem:[#allocation6 + $0x5e]]
          %v2168 = vstv %s2166
          %v2169 = vmul.f32 %v2168, %v427
          %v2170 = vmul.f32 %v2168, %v428
          %v2171 = vmul.f32 %v2168, %v429
          %v2175 = vrot.slane %v2169, 6
          %v2176 = vrot.slane %v2170, 6
          %v2177 = vsel %vm2056, %v2175, %v2176
          %v2178 = vrot.slane %v2171, 6
          %v2179 = vsel %vm2056, %v2176, %v2178
          %2180 = vrot.lane.b32.xlu0 %v2177, 125
          %v2181 = vpop.permute.xlu0 %2180
          %2182 = vrot.lane.b32.xlu0 %v2179, 125
          %v2183 = vpop.permute.xlu0 %2182
          %v2186 = vadd.f32 %v2164, %v2181
          %v2187 = vadd.f32 %v2165, %v2183
          %v2188 = vstv %s2167
          %v2189 = vmul.f32 %v2188, %v430
          %v2190 = vmul.f32 %v2188, %v431
          %v2191 = vmul.f32 %v2188, %v432
          %v2195 = vrot.slane %v2189, 6
          %v2196 = vrot.slane %v2190, 6
          %v2197 = vsel %vm2056, %v2195, %v2196
          %v2198 = vrot.slane %v2191, 6
          %v2199 = vsel %vm2056, %v2196, %v2198
          %2200 = vrot.lane.b32.xlu0 %v2197, 125
          %v2201 = vpop.permute.xlu0 %2200
          %2202 = vrot.lane.b32.xlu0 %v2199, 125
          %v2203 = vpop.permute.xlu0 %2202
          %v2206 = vadd.f32 %v2186, %v2201
          %v2207 = vadd.f32 %v2187, %v2203
          %s2208 = sld [smem:[#allocation6 + $0x2e]]
          %s2209 = sld [smem:[#allocation6 + $0x5f]]
          %v2210 = vstv %s2208
          %v2211 = vmul.f32 %v2210, %v427
          %v2212 = vmul.f32 %v2210, %v428
          %v2213 = vmul.f32 %v2210, %v429
          %v2217 = vrot.slane %v2211, 6
          %v2218 = vrot.slane %v2212, 6
          %v2219 = vsel %vm2056, %v2217, %v2218
          %v2220 = vrot.slane %v2213, 6
          %v2221 = vsel %vm2056, %v2218, %v2220
          %2222 = vrot.lane.b32.xlu0 %v2219, 124
          %v2223 = vpop.permute.xlu0 %2222
          %2224 = vrot.lane.b32.xlu0 %v2221, 124
          %v2225 = vpop.permute.xlu0 %2224
          %v2228 = vadd.f32 %v2206, %v2223
          %v2229 = vadd.f32 %v2207, %v2225
          %v2230 = vstv %s2209
          %v2231 = vmul.f32 %v2230, %v430
          %v2232 = vmul.f32 %v2230, %v431
          %v2233 = vmul.f32 %v2230, %v432
          %v2237 = vrot.slane %v2231, 6
          %v2238 = vrot.slane %v2232, 6
          %v2239 = vsel %vm2056, %v2237, %v2238
          %v2240 = vrot.slane %v2233, 6
          %v2241 = vsel %vm2056, %v2238, %v2240
          %2242 = vrot.lane.b32.xlu0 %v2239, 124
          %v2243 = vpop.permute.xlu0 %2242
          %2244 = vrot.lane.b32.xlu0 %v2241, 124
          %v2245 = vpop.permute.xlu0 %2244
          %v2248 = vadd.f32 %v2228, %v2243
          %v2249 = vadd.f32 %v2229, %v2245
          %s2250 = sld [smem:[#allocation6 + $0x2f]]
          %s2251 = sld [smem:[#allocation6 + $0x60]]
          %v2252 = vstv %s2250
          %v2253 = vmul.f32 %v2252, %v427
          %v2254 = vmul.f32 %v2252, %v428
          %v2255 = vmul.f32 %v2252, %v429
          %v2259 = vrot.slane %v2253, 6
          %v2260 = vrot.slane %v2254, 6
          %v2261 = vsel %vm2056, %v2259, %v2260
          %v2262 = vrot.slane %v2255, 6
          %v2263 = vsel %vm2056, %v2260, %v2262
          %2264 = vrot.lane.b32.xlu0 %v2261, 123
          %v2265 = vpop.permute.xlu0 %2264
          %2266 = vrot.lane.b32.xlu0 %v2263, 123
          %v2267 = vpop.permute.xlu0 %2266
          %v2270 = vadd.f32 %v2248, %v2265
          %v2271 = vadd.f32 %v2249, %v2267
          %v2272 = vstv %s2251
          %v2273 = vmul.f32 %v2272, %v430
          %v2274 = vmul.f32 %v2272, %v431
          %v2275 = vmul.f32 %v2272, %v432
          %v2279 = vrot.slane %v2273, 6
          %v2280 = vrot.slane %v2274, 6
          %v2281 = vsel %vm2056, %v2279, %v2280
          %v2282 = vrot.slane %v2275, 6
          %v2283 = vsel %vm2056, %v2280, %v2282
          %2284 = vrot.lane.b32.xlu0 %v2281, 123
          %v2285 = vpop.permute.xlu0 %2284
          %2286 = vrot.lane.b32.xlu0 %v2283, 123
          %v2287 = vpop.permute.xlu0 %2286
          %v2290 = vadd.f32 %v2270, %v2285
          %v2291 = vadd.f32 %v2271, %v2287
          %s2292 = sld [smem:[#allocation6 + $0x30]]
          %s2293 = sld [smem:[#allocation6 + $0x61]]
          %v2294 = vstv %s2292
          %v2295 = vmul.f32 %v2294, %v427
          %v2296 = vmul.f32 %v2294, %v428
          %v2297 = vmul.f32 %v2294, %v429
          %v2301 = vrot.slane %v2295, 6
          %v2302 = vrot.slane %v2296, 6
          %v2303 = vsel %vm2056, %v2301, %v2302
          %v2304 = vrot.slane %v2297, 6
          %v2305 = vsel %vm2056, %v2302, %v2304
          %2306 = vrot.lane.b32.xlu0 %v2303, 122
          %v2307 = vpop.permute.xlu0 %2306
          %2308 = vrot.lane.b32.xlu0 %v2305, 122
          %v2309 = vpop.permute.xlu0 %2308
          %v2312 = vadd.f32 %v2290, %v2307
          %v2313 = vadd.f32 %v2291, %v2309
          %v2314 = vstv %s2293
          %v2315 = vmul.f32 %v2314, %v430
          %v2316 = vmul.f32 %v2314, %v431
          %v2317 = vmul.f32 %v2314, %v432
          %v2321 = vrot.slane %v2315, 6
          %v2322 = vrot.slane %v2316, 6
          %v2323 = vsel %vm2056, %v2321, %v2322
          %v2324 = vrot.slane %v2317, 6
          %v2325 = vsel %vm2056, %v2322, %v2324
          %2326 = vrot.lane.b32.xlu0 %v2323, 122
          %v2327 = vpop.permute.xlu0 %2326
          %2328 = vrot.lane.b32.xlu0 %v2325, 122
          %v2329 = vpop.permute.xlu0 %2328
          %v2332 = vadd.f32 %v2312, %v2327
          %v2333 = vadd.f32 %v2313, %v2329
          %v2334 = vxor.u32 %v2332, 2147483648
          %v2335 = vxor.u32 %v2333, 2147483648
          %v2336 = vmul.f32 %v2334, 1.442695
          %v2337 = vpow.pop %v2336
          %v2338 = vmul.f32 %v2335, 1.442695
          %v2339 = vpow.pop %v2338
          %v2340 = vadd.f32 %v2337, 1.0
          %v2341 = vadd.f32 %v2339, 1.0
          %v2342 = vrcp.pop %v2340
          %v2343 = vmul.f32 %v2340, %v2342
          %v2344 = vsub.f32 1.0, %v2343
          %v2345 = vmul.f32 %v2342, %v2344
          %v2346 = vadd.f32 %v2342, %v2345
          %vm2347 = vweird.f32 %v2340
          %vm2348 = vweird.f32 %v2342
          %vm2349 = vmor %vm2347, %vm2348
          %v2350 = vsel %vm2349, %v2342, %v2346
          %v2351 = vand.u32 2147483647, %v2340
          %vm2352 = vcmp.eq.f32.partialorder %v2351, 8.507059e+37
          %v2353 = vand.u32 %v2340, 2147483648
          %v2354 = vor.u32 1.1754944e-38, %v2353
          %v2355 = vsel %vm2352, %v2354, %v2350
          %v2356 = vmul.f32 1.0, %v2355
          %v2357 = vrcp.pop %v2341
          %v2358 = vmul.f32 %v2341, %v2357
          %v2359 = vsub.f32 1.0, %v2358
          %v2360 = vmul.f32 %v2357, %v2359
          %v2361 = vadd.f32 %v2357, %v2360
          %vm2362 = vweird.f32 %v2341
          %vm2363 = vweird.f32 %v2357
          %vm2364 = vmor %vm2362, %vm2363
          %v2365 = vsel %vm2364, %v2357, %v2361
          %v2366 = vand.u32 2147483647, %v2341
          %vm2367 = vcmp.eq.f32.partialorder %v2366, 8.507059e+37
          %v2368 = vand.u32 %v2341, 2147483648
          %v2369 = vor.u32 1.1754944e-38, %v2368
          %v2370 = vsel %vm2367, %v2369, %v2365
          %v2371 = vmul.f32 1.0, %v2370
          %vm2372 = vcmask 130048
          %2373 = vst.msk [vmem:[%s191] sm:$0xff] %vm2372, %v2356
          %2374 = vst.msk [vmem:[%s191 + $0x8] sm:$0xff] %vm2372, %v2371
        $region48: #{tpu_custom_call.1} parent=27 // pred_fallthru
          _
        %s2375 = sand.u32 %s89, 1
        %s2376 = scalar_lea.sflag [#allocation8], %s2375
        %s2377 = sand.u32 %s89, 1
        %s2378 = smul.addr %s2377, 16
        %s2379 = scalar_lea.vmem [#allocation11], %s2378
        // Predicated region
        $region49: #{tpu_custom_call.1} parent=27 // pred_check
          %p2380 = pneg %p99
        $region50: #{tpu_custom_call.1} parent=27 // pred_check_branch
          %2382 = sbr.rel (%p2380) target = $region52
        $region51: #{tpu_custom_call.1} parent=27 // pred_region
          %2384 = vsyncadd %s2376, 0
          %s2385 = smul.addr %s24, 2
          %s2386 = smul.addr %s2385, 8
          %s2387 = scalar_lea.hbm %s2, %s2386
          %s2388 = sshll.u32 %s2379, 4
          %s2389 = int_to_ptr.vmem [resolvable:$true] %s2388
          %s2390 = sshll.u32 %s2387, 4
          %s2391 = int_to_ptr.hbm [resolvable:$true] %s2390
          %2396 = dma.vmem_to_hbm [thread:$0]  %s2389, 256, %s2391, %s2376, 128, 128, 8
        $region52: #{tpu_custom_call.1} parent=27 // pred_fallthru
          _
      $region28: #{tpu_custom_call.1} parent=5 // pred_fallthru
        _
      %p2397 = scmp.le.s32.totalorder 2, %s15
      // Predicated region
      $region53: #{tpu_custom_call.1} parent=5 // pred_check
        %p2398 = pneg %p2397
      $region54: #{tpu_custom_call.1} parent=5 // pred_check_branch
        %2400 = sbr.rel (%p2398) target = $region56
      $region55: #{tpu_custom_call.1} parent=5 // pred_region
        %s2401 = ssub.s32 %s15, 2
        // Predicated region
        $region57: #{tpu_custom_call.1} parent=55 // pred_check
          %p2402 = pneg %p105
        $region58: #{tpu_custom_call.1} parent=55 // pred_check_branch
          %2404 = sbr.rel (%p2402) target = $region60
        $region59: #{tpu_custom_call.1} parent=55 // pred_region
          %s2405 = sand.u32 %s90, 1
          %s2406 = scalar_lea.sflag [#allocation8], %s2405
          %s2407 = sand.u32 %s90, 1
          %s2408 = smul.addr %s2407, 16
          %s2409 = scalar_lea.vmem [#allocation11], %s2408
          %2411 = dma.done %s2406, 256
        $region60: #{tpu_custom_call.1} parent=55 // pred_fallthru
          _
      $region56: #{tpu_custom_call.1} parent=5 // pred_fallthru
        _
    $region6: #{tpu_custom_call.1} parent=1 // loop_footer
      %s19 = sadd.s32 1, %s15
    $region7: #{tpu_custom_call.1} parent=1 // loop_footer_branch
      %14 = sbr.rel target = $region3
    $region8: #{tpu_custom_call.1} parent=1 // loop_exit
      _
    %2412 = vsyncpa [#allocation7], 1
    %s2413 = scalar_lea.sflag [#allocation7], 1
    %2414 = vsyncpa %s2413, 1
    %2415 = vsyncpa [#allocation8], 1
    %s2416 = scalar_lea.sflag [#allocation8], 1
    %2417 = vsyncpa %s2416, 1
    %2418 = vsyncpa [#allocation9], 1
    %s2419 = scalar_lea.sflag [#allocation9], 1
    %2420 = vsyncpa %s2419, 1

</llo_original>
